<compile_context>
chip_gen: v7x
topology: tpu7x:2x2x1
jax: 0.10.0
libtpu: 0.0.40
codegen_flags: <defaults>
</compile_context>

<pallas_src>
import functools

import jax
import jax.numpy as jnp
from jax import lax
from jax.experimental import pallas as pl
from jax.experimental.pallas import tpu as pltpu

BN_EPS = 1e-5
LANE = 128
SUB = 16          # bf16 sublane packing: keep row offsets / row tiles 16-aligned


def _round_up(x, m):
    return (x + m - 1) // m * m


def _row_tiles(M, target):
    """Static (start, rows) tiles covering [0, M); starts are 16-aligned."""
    t = max(SUB, min(_round_up(target, SUB), _round_up(M, SUB)))
    return tuple((s, min(t, M - s)) for s in range(0, M, t))


def _taps_from_window(ref, start, rows):
    """Load ONE 16-aligned window from `ref`, return the 3 kw tap slices.

    Avoids materializing the full activation and de-duplicates the three
    overlapping (unaligned) tap loads; the unaligned part is a cheap value
    slice of the already-loaded window.
    """
    s = (start // SUB) * SUB        # 16-aligned ref-read start (static)
    d = start - s                   # 0..15 residual (static)
    win = ref[s:s + d + rows + 2, :]
    return [win[d + kw:d + kw + rows, :] for kw in range(3)]


def _fused_conv_kernel(x_ref, w1_ref, s1_ref, w2_ref, s2_ref, o_ref, mid_ref,
                       *, H, W, row_tiles, im2col1):
    """One batch element: conv1+BN1+ReLU -> (bf16 VMEM) -> conv2+BN2+ReLU."""
    Wp = W + 2
    M = H * Wp                       # flat rows (incl. 2 junk cols per row)
    Cp = o_ref.shape[-1]             # lane-dense padded Cout
    base = (-(Wp + 1)) % SUB         # makes the interior store 16-row aligned
    lo = base + Wp + 1               # flat scratch row of padded pixel (1, 1)
    R_mid = mid_ref.shape[0]

    # Zero only the border bands of the persistent scratch each step; the
    # interior rows are fully rewritten below and the junk columns (j >= W)
    # are re-masked to zero in y1 every step.
    b0 = ((lo + M) // SUB) * SUB
    mid_ref[0:lo, :] = jnp.zeros((lo, Cp), mid_ref.dtype)
    mid_ref[b0:R_mid, :] = jnp.zeros((R_mid - b0, Cp), mid_ref.dtype)

    # ---------------- conv1 + BN1 + ReLU -> bf16 VMEM scratch ----------------
    # (BN1 scale pre-folded into w1; only the shift + ReLU remain here.)
    for t0, tm in row_tiles:
        if im2col1:
            # Small-Cin fast path: x rows are already im2col'ed ([.., 9*Cin]),
            # so conv1 is a single MXU matmul per row tile.
            acc = jnp.dot(x_ref[t0:t0 + tm, :], w1_ref[...],
                          preferred_element_type=jnp.float32)
        else:
            acc = jnp.zeros((tm, Cp), jnp.float32)
            for kh in range(3):
                taps = _taps_from_window(x_ref, kh * Wp + t0, tm)
                for kw in range(3):
                    acc = acc + jnp.dot(taps[kw], w1_ref[kh * 3 + kw],
                                        preferred_element_type=jnp.float32)
        # BN shift + ReLU; zero the junk columns (j >= W) so they double as
        # the zero-padding border that conv2 sees.
        row = lax.broadcasted_iota(jnp.int32, (tm, 1), 0) + t0
        in_image = (row % Wp) < W
        y1 = jnp.where(in_image, jnp.maximum(acc + s1_ref[...], 0.0), 0.0)
        mid_ref[lo + t0:lo + t0 + tm, :] = y1.astype(mid_ref.dtype)

    # ---------------- conv2 + BN2 + ReLU -> output (bf16) ----------------
    # Note (v6e/v7x follow-up): with C >= 256 the K/N panels here are already
    # MXU-native; for C == 128, pairing taps along K would raise MXU util.
    for t0, tm in row_tiles:
        acc2 = jnp.zeros((tm, Cp), jnp.float32)
        for kh in range(3):
            taps = _taps_from_window(mid_ref, base + kh * Wp + t0, tm)
            for kw in range(3):
                acc2 = acc2 + jnp.dot(taps[kw], w2_ref[kh * 3 + kw],
                                      preferred_element_type=jnp.float32)
        o_ref[t0:t0 + tm, :] = jnp.maximum(acc2 + s2_ref[...],
                                           0.0).astype(o_ref.dtype)


def _fold_bn(w_oihw, gamma, beta, mean, var, cout_p):
    """Fold eval-mode BN into the conv weight (scale) + per-channel shift."""
    cout = w_oihw.shape[0]
    scale = gamma / jnp.sqrt(var + BN_EPS)                     # [Cout]
    shift = beta - mean * scale                                # [Cout]
    w = jnp.transpose(w_oihw, (2, 3, 1, 0)) * scale            # (3,3,Cin,Cout)
    shift = jnp.pad(shift, (0, cout_p - cout)).reshape(1, cout_p)
    return w, shift.astype(jnp.float32)


def conv_module_forward(x_nchw, params, *, row_tile=512):
    """Full Conv module forward. Input/output are NCHW like PyTorch."""
    N, Cin, H, W = x_nchw.shape
    Cout = params["w1"].shape[0]
    Hp, Wp = H + 2, W + 2
    M = H * Wp
    Cout_p = _round_up(Cout, LANE)
    base = (-(Wp + 1)) % SUB
    R_mid = _round_up(base + Hp * Wp + 2, SUB)
    row_tiles = _row_tiles(M, row_tile)

    # NCHW -> NHWC, 1-px spatial zero-pad, flatten spatial (row q = i*Wp + j).
    x = jnp.transpose(x_nchw, (0, 2, 3, 1))
    x = jnp.pad(x, ((0, 0), (1, 1), (1, 1), (0, 0)))
    x = x.reshape(N, Hp * Wp, Cin).astype(jnp.bfloat16)

    w1f, s1 = _fold_bn(params["w1"], params["g1"], params["b1"],
                       params["m1"], params["v1"], Cout_p)
    w2f, s2 = _fold_bn(params["w2"], params["g2"], params["b2"],
                       params["m2"], params["v2"], Cout_p)
    w2 = jnp.pad(w2f, ((0, 0), (0, 0), (0, Cout_p - Cout), (0, Cout_p - Cout)))
    w2 = w2.reshape(9, Cout_p, Cout_p).astype(jnp.bfloat16)

    im2col1 = 9 * Cin <= LANE
    if im2col1:
        # Small-Cin fast path: pre-gather the 9 taps along channels (XLA) so
        # the kernel's conv1 is one matmul with K = 9*Cin and the HBM feed is
        # 9*Cin lanes wide instead of a 128-padded channel axis.
        K9 = 9 * Cin
        K9p = _round_up(K9, SUB)
        xf = jnp.pad(x, ((0, 0), (0, 2), (0, 0)))   # last taps run 2 rows over
        taps = [xf[:, kh * Wp + kw:kh * Wp + kw + M, :]
                for kh in range(3) for kw in range(3)]
        R_in = _round_up(M, 8)
        x_in = jnp.concatenate(taps, axis=-1)       # (N, M, 9*Cin)
        x_in = jnp.pad(x_in, ((0, 0), (0, R_in - M), (0, K9p - K9)))
        w1 = jnp.pad(w1f.reshape(9 * Cin, Cout),
                     ((0, K9p - K9), (0, Cout_p - Cout))).astype(jnp.bfloat16)
        x_spec = pl.BlockSpec((None, R_in, K9p), lambda n: (n, 0, 0))
        w1_spec = pl.BlockSpec((K9p, Cout_p), lambda n: (0, 0))
    else:
        Cin_p = _round_up(Cin, LANE)
        R_in = _round_up(Hp * Wp + 2, 8)
        x_in = jnp.pad(x, ((0, 0), (0, R_in - Hp * Wp), (0, Cin_p - Cin)))
        w1 = jnp.pad(w1f, ((0, 0), (0, 0), (0, Cin_p - Cin),
                           (0, Cout_p - Cout)))
        w1 = w1.reshape(9, Cin_p, Cout_p).astype(jnp.bfloat16)
        x_spec = pl.BlockSpec((None, R_in, Cin_p), lambda n: (n, 0, 0))
        w1_spec = pl.BlockSpec((9, Cin_p, Cout_p), lambda n: (0, 0, 0))

    # Rough per-step VMEM footprint; raise the scoped-VMEM ceiling only when
    # needed, capped below every generation's physical VMEM (64 MiB on v7x).
    tm_max = max(tm for _, tm in row_tiles)
    need = (2 * (x_in.shape[1] * x_in.shape[2] + M * Cout_p) * 2   # io blocks x2
            + 2 * (w1.size + w2.size) * 2 + (s1.size + s2.size) * 8
            + R_mid * Cout_p * 2                                   # mid scratch
            + 4 * tm_max * Cout_p * 4)                             # f32 temporaries
    compiler_kwargs = dict(dimension_semantics=("parallel",))
    if need > 12 * 1024 * 1024:
        compiler_kwargs["vmem_limit_bytes"] = min(
            _round_up(int(need * 1.25), 1 << 20), 48 * 1024 * 1024)

    kernel = functools.partial(_fused_conv_kernel, H=H, W=W,
                               row_tiles=row_tiles, im2col1=im2col1)

    # Weight/shift specs have constant index maps; single-buffering them
    # (pipeline_mode=pl.Buffered(1)) would save VMEM on v7x — left default.
    out = pl.pallas_call(
        kernel,
        out_shape=jax.ShapeDtypeStruct((N, M, Cout_p), jnp.bfloat16),
        grid=(N,),
        in_specs=[
            x_spec,
            w1_spec,
            pl.BlockSpec((1, Cout_p), lambda n: (0, 0)),
            pl.BlockSpec((9, Cout_p, Cout_p), lambda n: (0, 0, 0)),
            pl.BlockSpec((1, Cout_p), lambda n: (0, 0)),
        ],
        out_specs=pl.BlockSpec((None, M, Cout_p), lambda n: (n, 0, 0)),
        scratch_shapes=[pltpu.VMEM((R_mid, Cout_p), jnp.bfloat16)],
        compiler_params=pltpu.CompilerParams(**compiler_kwargs),
    )(x_in, w1, s1, w2, s2)

    out = out.reshape(N, H, Wp, Cout_p)[:, :, :W, :Cout]
    return jnp.transpose(out, (0, 3, 1, 2)).astype(x_nchw.dtype)


# ------------- pure-JAX f32 reference (for correctness check) -------------
def _ref_block(x_nchw, w, g, b, m, v):
    y = lax.conv_general_dilated(
        x_nchw, w, window_strides=(1, 1), padding=((1, 1), (1, 1)),
        dimension_numbers=("NCHW", "OIHW", "NCHW"))
    scale = (g / jnp.sqrt(v + BN_EPS))[None, :, None, None]
    shift = (b - m * g / jnp.sqrt(v + BN_EPS))[None, :, None, None]
    return jnp.maximum(y * scale + shift, 0.0)


def _ref_forward(x_nchw, p):
    y = _ref_block(x_nchw, p["w1"], p["g1"], p["b1"], p["m1"], p["v1"])
    return _ref_block(y, p["w2"], p["g2"], p["b2"], p["m2"], p["v2"])


if __name__ == "__main__":
    key = jax.random.PRNGKey(0)
    N, Cin, Cout, H, W = 2, 4, 8, 16, 16
    ks = jax.random.split(key, 11)

    params = {
        "w1": jax.random.normal(ks[0], (Cout, Cin, 3, 3), jnp.float32) * 0.1,
        "g1": jax.random.normal(ks[1], (Cout,), jnp.float32) * 0.1 + 1.0,
        "b1": jax.random.normal(ks[2], (Cout,), jnp.float32) * 0.1,
        "m1": jax.random.normal(ks[3], (Cout,), jnp.float32) * 0.1,
        "v1": jax.random.uniform(ks[4], (Cout,), jnp.float32, 0.5, 1.5),
        "w2": jax.random.normal(ks[5], (Cout, Cout, 3, 3), jnp.float32) * 0.1,
        "g2": jax.random.normal(ks[6], (Cout,), jnp.float32) * 0.1 + 1.0,
        "b2": jax.random.normal(ks[7], (Cout,), jnp.float32) * 0.1,
        "m2": jax.random.normal(ks[8], (Cout,), jnp.float32) * 0.1,
        "v2": jax.random.uniform(ks[9], (Cout,), jnp.float32, 0.5, 1.5),
    }
    x = jax.random.normal(ks[10], (N, Cin, H, W), jnp.float32)

    fwd = jax.jit(conv_module_forward)
    out = jax.block_until_ready(fwd(x, params))
    ref = jax.block_until_ready(_ref_forward(x, params))

    assert out.shape == (N, Cout, H, W), out.shape
    # bf16 GEMM operands / bf16 activation + output vs f32 reference.
    err = float(jnp.max(jnp.abs(out - ref)))
    assert jnp.allclose(out, ref, atol=5e-2, rtol=5e-2), err
    print("KERNEL_OK")
</pallas_src>

<mosaic_0001>
module attributes {stable_mosaic.version = 11 : i64} {
  func.func @_fused_conv_kernel(%arg0: i32, %arg1: memref<1x288x48xbf16, #tpu.memory_space<vmem>>, %arg2: memref<48x128xbf16, #tpu.memory_space<vmem>>, %arg3: memref<1x128xf32, #tpu.memory_space<vmem>>, %arg4: memref<9x128x128xbf16, #tpu.memory_space<vmem>>, %arg5: memref<1x128xf32, #tpu.memory_space<vmem>>, %arg6: memref<1x288x128xbf16, #tpu.memory_space<vmem>>, %arg7: memref<352x128xbf16, #tpu.memory_space<vmem>>) attributes {dimension_semantics = [#tpu.dimension_semantics<parallel>], iteration_bounds = array<i64: 2>, scalar_prefetch = 0 : i64, scratch_operands = 1 : i64, tpu.core_type = #tpu.core_type<tc>, window_params = [{transform_indices = @transform_0, window_bounds = array<i64: 1, 288, 48>}, {pipeline_mode = #tpu.pipeline_mode<synchronous>, transform_indices = @transform_1, window_bounds = array<i64: 48, 128>}, {pipeline_mode = #tpu.pipeline_mode<synchronous>, transform_indices = @transform_2, window_bounds = array<i64: 1, 128>}, {pipeline_mode = #tpu.pipeline_mode<synchronous>, transform_indices = @transform_3, window_bounds = array<i64: 9, 128, 128>}, {pipeline_mode = #tpu.pipeline_mode<synchronous>, transform_indices = @transform_4, window_bounds = array<i64: 1, 128>}, {transform_indices = @transform_5, window_bounds = array<i64: 1, 288, 128>}]} {
    %cst = arith.constant 0.000000e+00 : bf16
    %0 = vector.broadcast %cst : bf16 to vector<32x128xbf16>
    %c0 = arith.constant 0 : index
    %c0_0 = arith.constant 0 : index
    %1 = vector.load %arg7[%c0, %c0_0] : memref<352x128xbf16, #tpu.memory_space<vmem>>, vector<32x128xbf16>
    tpu.vector_store %arg7[%c0, %c0_0], %0 {strides = array<i32>} : memref<352x128xbf16, #tpu.memory_space<vmem>>, vector<32x128xbf16>,
    %cst_1 = arith.constant 0.000000e+00 : bf16
    %2 = vector.broadcast %cst_1 : bf16 to vector<32x128xbf16>
    %c320 = arith.constant 320 : index
    %c0_2 = arith.constant 0 : index
    %3 = vector.load %arg7[%c320, %c0_2] : memref<352x128xbf16, #tpu.memory_space<vmem>>, vector<32x128xbf16>
    tpu.vector_store %arg7[%c320, %c0_2], %2 {strides = array<i32>} : memref<352x128xbf16, #tpu.memory_space<vmem>>, vector<32x128xbf16>,
    %c0_3 = arith.constant 0 : index
    %c0_4 = arith.constant 0 : index
    %c0_5 = arith.constant 0 : index
    %4 = vector.load %arg1[%c0_3, %c0_4, %c0_5] : memref<1x288x48xbf16, #tpu.memory_space<vmem>>, vector<1x288x48xbf16>
    %5 = vector.shape_cast %4 : vector<1x288x48xbf16> to vector<288x48xbf16>
    %c0_6 = arith.constant 0 : index
    %c0_7 = arith.constant 0 : index
    %6 = vector.load %arg2[%c0_6, %c0_7] : memref<48x128xbf16, #tpu.memory_space<vmem>>, vector<48x128xbf16>
    %cst_8 = arith.constant dense<0.000000e+00> : vector<288x128xf32>
    %7 = tpu.matmul %5, %6, %cst_8 {dimension_numbers = #tpu.dot_dimension_numbers<[1], [0], [0], [1], [0, 0, 1, 1], [], []>} : vector<288x48xbf16>, vector<48x128xbf16>, vector<288x128xf32> -> vector<288x128xf32>
    %8 = tpu.iota {dimensions = array<i32: 0>} : vector<288x1xi32>
    %c0_i32 = arith.constant 0 : i32
    %9 = vector.broadcast %c0_i32 : i32 to vector<288x1xi32>
    %10 = arith.addi %8, %9 : vector<288x1xi32>
    %c18_i32 = arith.constant 18 : i32
    %c0_i32_9 = arith.constant 0 : i32
    %11 = arith.cmpi eq, %c18_i32, %c0_i32_9 : i32
    %c1_i32 = arith.constant 1 : i32
    %12 = arith.select %11, %c1_i32, %c18_i32 : i32
    %13 = vector.broadcast %12 : i32 to vector<288x1xi32>
    %14 = arith.remsi %10, %13 : vector<288x1xi32>
    %c0_i32_10 = arith.constant 0 : i32
    %15 = vector.broadcast %c0_i32_10 : i32 to vector<288x1xi32>
    %16 = arith.cmpi ne, %14, %15 : vector<288x1xi32>
    %c0_i32_11 = arith.constant 0 : i32
    %17 = vector.broadcast %c0_i32_11 : i32 to vector<288x1xi32>
    %18 = arith.cmpi slt, %14, %17 : vector<288x1xi32>
    %c0_i32_12 = arith.constant 0 : i32
    %19 = arith.cmpi slt, %12, %c0_i32_12 : i32
    %20 = vector.broadcast %19 : i1 to vector<288x1xi1>
    %21 = vector.broadcast %20 : vector<288x1xi1> to vector<288x1xi1>
    %22 = arith.xori %18, %21 : vector<288x1xi1>
    %23 = arith.andi %22, %16 : vector<288x1xi1>
    %24 = vector.broadcast %12 : i32 to vector<288x1xi32>
    %25 = arith.addi %14, %24 : vector<288x1xi32>
    %26 = arith.select %23, %25, %14 : vector<288x1xi1>, vector<288x1xi32>
    %c16_i32 = arith.constant 16 : i32
    %27 = vector.broadcast %c16_i32 : i32 to vector<288x1xi32>
    %28 = arith.cmpi slt, %26, %27 : vector<288x1xi32>
    %c0_13 = arith.constant 0 : index
    %c0_14 = arith.constant 0 : index
    %29 = vector.load %arg3[%c0_13, %c0_14] : memref<1x128xf32, #tpu.memory_space<vmem>>, vector<1x128xf32>
    %30 = vector.broadcast %29 : vector<1x128xf32> to vector<288x128xf32>
    %31 = arith.addf %7, %30 : vector<288x128xf32>
    %cst_15 = arith.constant 0.000000e+00 : f32
    %32 = vector.broadcast %cst_15 : f32 to vector<288x128xf32>
    %33 = arith.maximumf %31, %32 : vector<288x128xf32>
    %cst_16 = arith.constant 0.000000e+00 : f32
    %34 = vector.shape_cast %28 : vector<288x1xi1> to vector<288x1xi1>
    %35 = vector.broadcast %34 : vector<288x1xi1> to vector<288x128xi1>
    %36 = vector.broadcast %cst_16 : f32 to vector<288x128xf32>
    %37 = arith.select %35, %33, %36 : vector<288x128xi1>, vector<288x128xf32>
    %38 = arith.truncf %37 : vector<288x128xf32> to vector<288x128xbf16>
    %c32 = arith.constant 32 : index
    %c0_17 = arith.constant 0 : index
    %39 = vector.load %arg7[%c32, %c0_17] : memref<352x128xbf16, #tpu.memory_space<vmem>>, vector<288x128xbf16>
    tpu.vector_store %arg7[%c32, %c0_17], %38 {strides = array<i32>} : memref<352x128xbf16, #tpu.memory_space<vmem>>, vector<288x128xbf16>,
    %cst_18 = arith.constant 0.000000e+00 : f32
    %40 = vector.broadcast %cst_18 : f32 to vector<288x128xf32>
    %c0_19 = arith.constant 0 : index
    %c0_20 = arith.constant 0 : index
    %41 = vector.load %arg7[%c0_19, %c0_20] : memref<352x128xbf16, #tpu.memory_space<vmem>>, vector<303x128xbf16>
    %42 = vector.extract_strided_slice %41 {offsets = [13, 0], sizes = [288, 128], strides = [1, 1]} : vector<303x128xbf16> to vector<288x128xbf16>
    %43 = vector.extract_strided_slice %41 {offsets = [14, 0], sizes = [288, 128], strides = [1, 1]} : vector<303x128xbf16> to vector<288x128xbf16>
    %44 = vector.extract_strided_slice %41 {offsets = [15, 0], sizes = [288, 128], strides = [1, 1]} : vector<303x128xbf16> to vector<288x128xbf16>
    %c0_21 = arith.constant 0 : index
    %c0_22 = arith.constant 0 : index
    %c0_23 = arith.constant 0 : index
    %45 = vector.load %arg4[%c0_21, %c0_22, %c0_23] : memref<9x128x128xbf16, #tpu.memory_space<vmem>>, vector<1x128x128xbf16>
    %46 = vector.shape_cast %45 : vector<1x128x128xbf16> to vector<128x128xbf16>
    %cst_24 = arith.constant dense<0.000000e+00> : vector<288x128xf32>
    %47 = tpu.matmul %42, %46, %cst_24 {dimension_numbers = #tpu.dot_dimension_numbers<[1], [0], [0], [1], [0, 0, 1, 1], [], []>} : vector<288x128xbf16>, vector<128x128xbf16>, vector<288x128xf32> -> vector<288x128xf32>
    %48 = arith.addf %40, %47 : vector<288x128xf32>
    %c1 = arith.constant 1 : index
    %c0_25 = arith.constant 0 : index
    %c0_26 = arith.constant 0 : index
    %49 = vector.load %arg4[%c1, %c0_25, %c0_26] : memref<9x128x128xbf16, #tpu.memory_space<vmem>>, vector<1x128x128xbf16>
    %50 = vector.shape_cast %49 : vector<1x128x128xbf16> to vector<128x128xbf16>
    %cst_27 = arith.constant dense<0.000000e+00> : vector<288x128xf32>
    %51 = tpu.matmul %43, %50, %cst_27 {dimension_numbers = #tpu.dot_dimension_numbers<[1], [0], [0], [1], [0, 0, 1, 1], [], []>} : vector<288x128xbf16>, vector<128x128xbf16>, vector<288x128xf32> -> vector<288x128xf32>
    %52 = arith.addf %48, %51 : vector<288x128xf32>
    %c2 = arith.constant 2 : index
    %c0_28 = arith.constant 0 : index
    %c0_29 = arith.constant 0 : index
    %53 = vector.load %arg4[%c2, %c0_28, %c0_29] : memref<9x128x128xbf16, #tpu.memory_space<vmem>>, vector<1x128x128xbf16>
    %54 = vector.shape_cast %53 : vector<1x128x128xbf16> to vector<128x128xbf16>
    %cst_30 = arith.constant dense<0.000000e+00> : vector<288x128xf32>
    %55 = tpu.matmul %44, %54, %cst_30 {dimension_numbers = #tpu.dot_dimension_numbers<[1], [0], [0], [1], [0, 0, 1, 1], [], []>} : vector<288x128xbf16>, vector<128x128xbf16>, vector<288x128xf32> -> vector<288x128xf32>
    %56 = arith.addf %52, %55 : vector<288x128xf32>
    %c16 = arith.constant 16 : index
    %c0_31 = arith.constant 0 : index
    %57 = vector.load %arg7[%c16, %c0_31] : memref<352x128xbf16, #tpu.memory_space<vmem>>, vector<305x128xbf16>
    %58 = vector.extract_strided_slice %57 {offsets = [15, 0], sizes = [288, 128], strides = [1, 1]} : vector<305x128xbf16> to vector<288x128xbf16>
    %59 = vector.extract_strided_slice %57 {offsets = [16, 0], sizes = [288, 128], strides = [1, 1]} : vector<305x128xbf16> to vector<288x128xbf16>
    %60 = vector.extract_strided_slice %57 {offsets = [17, 0], sizes = [288, 128], strides = [1, 1]} : vector<305x128xbf16> to vector<288x128xbf16>
    %c3 = arith.constant 3 : index
    %c0_32 = arith.constant 0 : index
    %c0_33 = arith.constant 0 : index
    %61 = vector.load %arg4[%c3, %c0_32, %c0_33] : memref<9x128x128xbf16, #tpu.memory_space<vmem>>, vector<1x128x128xbf16>
    %62 = vector.shape_cast %61 : vector<1x128x128xbf16> to vector<128x128xbf16>
    %cst_34 = arith.constant dense<0.000000e+00> : vector<288x128xf32>
    %63 = tpu.matmul %58, %62, %cst_34 {dimension_numbers = #tpu.dot_dimension_numbers<[1], [0], [0], [1], [0, 0, 1, 1], [], []>} : vector<288x128xbf16>, vector<128x128xbf16>, vector<288x128xf32> -> vector<288x128xf32>
    %64 = arith.addf %56, %63 : vector<288x128xf32>
    %c4 = arith.constant 4 : index
    %c0_35 = arith.constant 0 : index
    %c0_36 = arith.constant 0 : index
    %65 = vector.load %arg4[%c4, %c0_35, %c0_36] : memref<9x128x128xbf16, #tpu.memory_space<vmem>>, vector<1x128x128xbf16>
    %66 = vector.shape_cast %65 : vector<1x128x128xbf16> to vector<128x128xbf16>
    %cst_37 = arith.constant dense<0.000000e+00> : vector<288x128xf32>
    %67 = tpu.matmul %59, %66, %cst_37 {dimension_numbers = #tpu.dot_dimension_numbers<[1], [0], [0], [1], [0, 0, 1, 1], [], []>} : vector<288x128xbf16>, vector<128x128xbf16>, vector<288x128xf32> -> vector<288x128xf32>
    %68 = arith.addf %64, %67 : vector<288x128xf32>
    %c5 = arith.constant 5 : index
    %c0_38 = arith.constant 0 : index
    %c0_39 = arith.constant 0 : index
    %69 = vector.load %arg4[%c5, %c0_38, %c0_39] : memref<9x128x128xbf16, #tpu.memory_space<vmem>>, vector<1x128x128xbf16>
    %70 = vector.shape_cast %69 : vector<1x128x128xbf16> to vector<128x128xbf16>
    %cst_40 = arith.constant dense<0.000000e+00> : vector<288x128xf32>
    %71 = tpu.matmul %60, %70, %cst_40 {dimension_numbers = #tpu.dot_dimension_numbers<[1], [0], [0], [1], [0, 0, 1, 1], [], []>} : vector<288x128xbf16>, vector<128x128xbf16>, vector<288x128xf32> -> vector<288x128xf32>
    %72 = arith.addf %68, %71 : vector<288x128xf32>
    %c48 = arith.constant 48 : index
    %c0_41 = arith.constant 0 : index
    %73 = vector.load %arg7[%c48, %c0_41] : memref<352x128xbf16, #tpu.memory_space<vmem>>, vector<291x128xbf16>
    %74 = vector.extract_strided_slice %73 {offsets = [1, 0], sizes = [288, 128], strides = [1, 1]} : vector<291x128xbf16> to vector<288x128xbf16>
    %75 = vector.extract_strided_slice %73 {offsets = [2, 0], sizes = [288, 128], strides = [1, 1]} : vector<291x128xbf16> to vector<288x128xbf16>
    %76 = vector.extract_strided_slice %73 {offsets = [3, 0], sizes = [288, 128], strides = [1, 1]} : vector<291x128xbf16> to vector<288x128xbf16>
    %c6 = arith.constant 6 : index
    %c0_42 = arith.constant 0 : index
    %c0_43 = arith.constant 0 : index
    %77 = vector.load %arg4[%c6, %c0_42, %c0_43] : memref<9x128x128xbf16, #tpu.memory_space<vmem>>, vector<1x128x128xbf16>
    %78 = vector.shape_cast %77 : vector<1x128x128xbf16> to vector<128x128xbf16>
    %cst_44 = arith.constant dense<0.000000e+00> : vector<288x128xf32>
    %79 = tpu.matmul %74, %78, %cst_44 {dimension_numbers = #tpu.dot_dimension_numbers<[1], [0], [0], [1], [0, 0, 1, 1], [], []>} : vector<288x128xbf16>, vector<128x128xbf16>, vector<288x128xf32> -> vector<288x128xf32>
    %80 = arith.addf %72, %79 : vector<288x128xf32>
    %c7 = arith.constant 7 : index
    %c0_45 = arith.constant 0 : index
    %c0_46 = arith.constant 0 : index
    %81 = vector.load %arg4[%c7, %c0_45, %c0_46] : memref<9x128x128xbf16, #tpu.memory_space<vmem>>, vector<1x128x128xbf16>
    %82 = vector.shape_cast %81 : vector<1x128x128xbf16> to vector<128x128xbf16>
    %cst_47 = arith.constant dense<0.000000e+00> : vector<288x128xf32>
    %83 = tpu.matmul %75, %82, %cst_47 {dimension_numbers = #tpu.dot_dimension_numbers<[1], [0], [0], [1], [0, 0, 1, 1], [], []>} : vector<288x128xbf16>, vector<128x128xbf16>, vector<288x128xf32> -> vector<288x128xf32>
    %84 = arith.addf %80, %83 : vector<288x128xf32>
    %c8 = arith.constant 8 : index
    %c0_48 = arith.constant 0 : index
    %c0_49 = arith.constant 0 : index
    %85 = vector.load %arg4[%c8, %c0_48, %c0_49] : memref<9x128x128xbf16, #tpu.memory_space<vmem>>, vector<1x128x128xbf16>
    %86 = vector.shape_cast %85 : vector<1x128x128xbf16> to vector<128x128xbf16>
    %cst_50 = arith.constant dense<0.000000e+00> : vector<288x128xf32>
    %87 = tpu.matmul %76, %86, %cst_50 {dimension_numbers = #tpu.dot_dimension_numbers<[1], [0], [0], [1], [0, 0, 1, 1], [], []>} : vector<288x128xbf16>, vector<128x128xbf16>, vector<288x128xf32> -> vector<288x128xf32>
    %88 = arith.addf %84, %87 : vector<288x128xf32>
    %c0_51 = arith.constant 0 : index
    %c0_52 = arith.constant 0 : index
    %89 = vector.load %arg5[%c0_51, %c0_52] : memref<1x128xf32, #tpu.memory_space<vmem>>, vector<1x128xf32>
    %90 = vector.broadcast %89 : vector<1x128xf32> to vector<288x128xf32>
    %91 = arith.addf %88, %90 : vector<288x128xf32>
    %cst_53 = arith.constant 0.000000e+00 : f32
    %92 = vector.broadcast %cst_53 : f32 to vector<288x128xf32>
    %93 = arith.maximumf %91, %92 : vector<288x128xf32>
    %94 = arith.truncf %93 : vector<288x128xf32> to vector<288x128xbf16>
    %c0_54 = arith.constant 0 : index
    %c0_55 = arith.constant 0 : index
    %c0_56 = arith.constant 0 : index
    %95 = vector.load %arg6[%c0_54, %c0_55, %c0_56] : memref<1x288x128xbf16, #tpu.memory_space<vmem>>, vector<1x288x128xbf16>
    %96 = vector.shape_cast %95 : vector<1x288x128xbf16> to vector<288x128xbf16>
    %97 = vector.shape_cast %94 : vector<288x128xbf16> to vector<1x288x128xbf16>
    tpu.vector_store %arg6[%c0_54, %c0_55, %c0_56], %97 {strides = array<i32>} : memref<1x288x128xbf16, #tpu.memory_space<vmem>>, vector<1x288x128xbf16>,
    return
  }
  func.func @transform_0(%arg0: i32) -> (i32, i32, i32) {
    %c0_i32 = arith.constant 0 : i32
    %c0_i32_0 = arith.constant 0 : i32
    %c0_i32_1 = arith.constant 0 : i32
    return %arg0, %c0_i32, %c0_i32_0 : i32, i32, i32
  }
  func.func @transform_1(%arg0: i32) -> (i32, i32) {
    %c0_i32 = arith.constant 0 : i32
    %c0_i32_0 = arith.constant 0 : i32
    %c0_i32_1 = arith.constant 0 : i32
    return %c0_i32, %c0_i32_0 : i32, i32
  }
  func.func @transform_2(%arg0: i32) -> (i32, i32) {
    %c0_i32 = arith.constant 0 : i32
    %c0_i32_0 = arith.constant 0 : i32
    %c0_i32_1 = arith.constant 0 : i32
    return %c0_i32, %c0_i32_0 : i32, i32
  }
  func.func @transform_3(%arg0: i32) -> (i32, i32, i32) {
    %c0_i32 = arith.constant 0 : i32
    %c0_i32_0 = arith.constant 0 : i32
    %c0_i32_1 = arith.constant 0 : i32
    %c0_i32_2 = arith.constant 0 : i32
    return %c0_i32, %c0_i32_0, %c0_i32_1 : i32, i32, i32
  }
  func.func @transform_4(%arg0: i32) -> (i32, i32) {
    %c0_i32 = arith.constant 0 : i32
    %c0_i32_0 = arith.constant 0 : i32
    %c0_i32_1 = arith.constant 0 : i32
    return %c0_i32, %c0_i32_0 : i32, i32
  }
  func.func @transform_5(%arg0: i32) -> (i32, i32, i32) {
    %c0_i32 = arith.constant 0 : i32
    %c0_i32_0 = arith.constant 0 : i32
    %c0_i32_1 = arith.constant 0 : i32
    return %arg0, %c0_i32, %c0_i32_0 : i32, i32, i32
  }
}

</mosaic_0001>

<llo_original>
// kernel: conv_module_forward.1
$region0: #{conv_module_forward.1}
  #allocation0 [shape = 'u32[]', space=smem, size = 0x4, offset = 0x4, fixed_abs, tag = 'smem constant byte address 0x4 - core index']
  #allocation1 [shape = 'u32[144,128]{1,0:T(1,128)}', space=vmem, size = 0x12000, scoped, tag = 'internal scratch']
  #allocation2 [shape = 'bf16[352,128]{1,0:T(16,128)(2,1)}', space=vmem, size = 0x16000, scoped, tag = 'scratch operand']
  %s0 = inlined_call_operand.vmem [shape: bf16[2,288,48], index: 0, kind: input, shape index: {}]
  %s1 = inlined_call_operand.vmem [shape: bf16[48,128], index: 1, kind: input, shape index: {}]
  %s2 = inlined_call_operand.vmem [shape: f32[1,128], index: 2, kind: input, shape index: {}]
  %s3 = inlined_call_operand.vmem [shape: bf16[9,128,128], index: 3, kind: input, shape index: {}]
  %s4 = inlined_call_operand.vmem [shape: f32[1,128], index: 4, kind: input, shape index: {}]
  %s5 = inlined_call_operand.vmem [shape: bf16[2,288,128], index: 5, kind: output, shape index: {}]
  %s6 = sld [smem:[#allocation0]]
  $region53: #{conv_module_forward.1} parent=0
    _
  %s8 = ssub.s32 1, %s6
  %s9 = scalar_select 0, %s8, %s6
  loop: start=0, step=1, limit=4
  $region2: #{conv_module_forward.1} parent=0 // loop_pre_header
    _
  $region3: #{conv_module_forward.1} parent=0 // loop_header
    %s11 = sphi 0, %s15
    %p12 = scmp.ge.s32.totalorder %s11, 4
    %s21 = sphi 0, %s23
    %s24 = sphi 0, %s21
    %s25 = sphi 0, %s24
    %s41 = sphi 0, %s25
    %s45 = sphi 0, %s45
    %s47 = sphi 0, %s45
    %s48 = sphi 0, %s47
    %s62 = sphi 0, %s48
    %s66 = sphi 0, %s66
    %s68 = sphi 0, %s66
    %s69 = sphi 0, %s68
    %s83 = sphi 0, %s69
    %s87 = sphi 0, %s87
    %s89 = sphi 0, %s87
    %s90 = sphi 0, %s89
    %s104 = sphi 0, %s90
    %s108 = sphi 0, %s108
    %s110 = sphi 0, %s108
    %s111 = sphi 0, %s110
    %s125 = sphi 0, %s111
    %s131 = sphi 0, %s133
    %s134 = sphi 0, %s131
    %s135 = sphi 0, %s134
    %s151 = sphi 0, %s135
  $region4: #{conv_module_forward.1} parent=0 // loop_header_branch
    %14 = sbr.rel (%p12) target = $region8
  $region5: #{conv_module_forward.1} parent=0 // loop_body
    %s16 = ssub.s32 %s11, 1
    %s17 = ssub.s32 %s11, 2
    %s18 = sadd.s32 %s11, 1
    %s19 = ssub.s32 %s11, %s18
    %p20 = scmp.eq.s32.totalorder %s19, 0
    %s22 = sadd.s32 %s21, 1
    %s23 = scalar_select %p20, %s21, %s22
    %p26 = pneg %p20
    %p27 = scmp.eq.s32.totalorder %s11, 1
    %p28 = por %p26, %p27
    %p29 = scmp.ne.s32.totalorder %s21, %s24
    %p30 = scmp.eq.s32.totalorder %s11, 0
    %p31 = por %p29, %p30
    %p32 = scmp.ne.s32.totalorder %s21, %s24
    %p33 = scmp.eq.s32.totalorder %s16, 1
    %p34 = por %p32, %p33
    %p35 = scmp.ne.s32.totalorder %s24, %s25
    %p36 = scmp.eq.s32.totalorder %s16, 0
    %p37 = por %p35, %p36
    %p38 = scmp.ne.s32.totalorder %s24, %s25
    %p39 = scmp.eq.s32.totalorder %s17, 1
    %p40 = por %p38, %p39
    %p42 = scmp.ne.s32.totalorder %s25, %s41
    %p43 = scmp.eq.s32.totalorder %s17, 0
    %p44 = por %p42, %p43
    %s46 = sadd.s32 %s45, 1
    %p49 = scmp.eq.s32.totalorder %s11, 1
    %p50 = scmp.ne.s32.totalorder %s45, %s47
    %p51 = scmp.eq.s32.totalorder %s11, 0
    %p52 = por %p50, %p51
    %p53 = scmp.ne.s32.totalorder %s45, %s47
    %p54 = scmp.eq.s32.totalorder %s16, 1
    %p55 = por %p53, %p54
    %p56 = scmp.ne.s32.totalorder %s47, %s48
    %p57 = scmp.eq.s32.totalorder %s16, 0
    %p58 = por %p56, %p57
    %p59 = scmp.ne.s32.totalorder %s47, %s48
    %p60 = scmp.eq.s32.totalorder %s17, 1
    %p61 = por %p59, %p60
    %p63 = scmp.ne.s32.totalorder %s48, %s62
    %p64 = scmp.eq.s32.totalorder %s17, 0
    %p65 = por %p63, %p64
    %s67 = sadd.s32 %s66, 1
    %p70 = scmp.eq.s32.totalorder %s11, 1
    %p71 = scmp.ne.s32.totalorder %s66, %s68
    %p72 = scmp.eq.s32.totalorder %s11, 0
    %p73 = por %p71, %p72
    %p74 = scmp.ne.s32.totalorder %s66, %s68
    %p75 = scmp.eq.s32.totalorder %s16, 1
    %p76 = por %p74, %p75
    %p77 = scmp.ne.s32.totalorder %s68, %s69
    %p78 = scmp.eq.s32.totalorder %s16, 0
    %p79 = por %p77, %p78
    %p80 = scmp.ne.s32.totalorder %s68, %s69
    %p81 = scmp.eq.s32.totalorder %s17, 1
    %p82 = por %p80, %p81
    %p84 = scmp.ne.s32.totalorder %s69, %s83
    %p85 = scmp.eq.s32.totalorder %s17, 0
    %p86 = por %p84, %p85
    %s88 = sadd.s32 %s87, 1
    %p91 = scmp.eq.s32.totalorder %s11, 1
    %p92 = scmp.ne.s32.totalorder %s87, %s89
    %p93 = scmp.eq.s32.totalorder %s11, 0
    %p94 = por %p92, %p93
    %p95 = scmp.ne.s32.totalorder %s87, %s89
    %p96 = scmp.eq.s32.totalorder %s16, 1
    %p97 = por %p95, %p96
    %p98 = scmp.ne.s32.totalorder %s89, %s90
    %p99 = scmp.eq.s32.totalorder %s16, 0
    %p100 = por %p98, %p99
    %p101 = scmp.ne.s32.totalorder %s89, %s90
    %p102 = scmp.eq.s32.totalorder %s17, 1
    %p103 = por %p101, %p102
    %p105 = scmp.ne.s32.totalorder %s90, %s104
    %p106 = scmp.eq.s32.totalorder %s17, 0
    %p107 = por %p105, %p106
    %s109 = sadd.s32 %s108, 1
    %p112 = scmp.eq.s32.totalorder %s11, 1
    %p113 = scmp.ne.s32.totalorder %s108, %s110
    %p114 = scmp.eq.s32.totalorder %s11, 0
    %p115 = por %p113, %p114
    %p116 = scmp.ne.s32.totalorder %s108, %s110
    %p117 = scmp.eq.s32.totalorder %s16, 1
    %p118 = por %p116, %p117
    %p119 = scmp.ne.s32.totalorder %s110, %s111
    %p120 = scmp.eq.s32.totalorder %s16, 0
    %p121 = por %p119, %p120
    %p122 = scmp.ne.s32.totalorder %s110, %s111
    %p123 = scmp.eq.s32.totalorder %s17, 1
    %p124 = por %p122, %p123
    %p126 = scmp.ne.s32.totalorder %s111, %s125
    %p127 = scmp.eq.s32.totalorder %s17, 0
    %p128 = por %p126, %p127
    %s129 = ssub.s32 %s11, %s18
    %p130 = scmp.eq.s32.totalorder %s129, 0
    %s132 = sadd.s32 %s131, 1
    %s133 = scalar_select %p130, %s131, %s132
    %p136 = pneg %p130
    %p137 = scmp.eq.s32.totalorder %s11, 1
    %p138 = por %p136, %p137
    %p139 = scmp.ne.s32.totalorder %s131, %s134
    %p140 = scmp.eq.s32.totalorder %s11, 0
    %p141 = por %p139, %p140
    %p142 = scmp.ne.s32.totalorder %s131, %s134
    %p143 = scmp.eq.s32.totalorder %s16, 1
    %p144 = por %p142, %p143
    %p145 = scmp.ne.s32.totalorder %s134, %s135
    %p146 = scmp.eq.s32.totalorder %s16, 0
    %p147 = por %p145, %p146
    %p148 = scmp.ne.s32.totalorder %s134, %s135
    %p149 = scmp.eq.s32.totalorder %s17, 1
    %p150 = por %p148, %p149
    %p152 = scmp.ne.s32.totalorder %s135, %s151
    %p153 = scmp.eq.s32.totalorder %s17, 0
    %p154 = por %p152, %p153
    %p155 = scmp.le.s32.totalorder 1, %s11
    %p156 = scmp.lt.s32.totalorder %s11, 3
    %p157 = pnand %p155, %p156
    %p158 = pneg %p157
    // Predicated region
    $region9: #{conv_module_forward.1} parent=5 // pred_check
      _
    $region10: #{conv_module_forward.1} parent=5 // pred_check_branch
      %160 = sbr.rel (%p157) target = $region12
    $region11: #{conv_module_forward.1} parent=5 // pred_region
      %s161 = ssub.s32 %s11, 1
      // Predicated region
      $region13: #{conv_module_forward.1} parent=11 // pred_check
        %p162 = pneg %p58
      $region14: #{conv_module_forward.1} parent=11 // pred_check_branch
        %164 = sbr.rel (%p162) target = $region16
      $region15: #{conv_module_forward.1} parent=11 // pred_region
        _
      $region16: #{conv_module_forward.1} parent=11 // pred_fallthru
        _
      // Predicated region
      $region17: #{conv_module_forward.1} parent=11 // pred_check
        %p165 = pneg %p79
      $region18: #{conv_module_forward.1} parent=11 // pred_check_branch
        %167 = sbr.rel (%p165) target = $region20
      $region19: #{conv_module_forward.1} parent=11 // pred_region
        _
      $region20: #{conv_module_forward.1} parent=11 // pred_fallthru
        _
      // Predicated region
      $region21: #{conv_module_forward.1} parent=11 // pred_check
        %p168 = pneg %p100
      $region22: #{conv_module_forward.1} parent=11 // pred_check_branch
        %170 = sbr.rel (%p168) target = $region24
      $region23: #{conv_module_forward.1} parent=11 // pred_region
        _
      $region24: #{conv_module_forward.1} parent=11 // pred_fallthru
        _
      // Predicated region
      $region25: #{conv_module_forward.1} parent=11 // pred_check
        %p171 = pneg %p121
      $region26: #{conv_module_forward.1} parent=11 // pred_check_branch
        %173 = sbr.rel (%p171) target = $region28
      $region27: #{conv_module_forward.1} parent=11 // pred_region
        _
      $region28: #{conv_module_forward.1} parent=11 // pred_fallthru
        _
    $region12: #{conv_module_forward.1} parent=5 // pred_fallthru
      _
    %p174 = scmp.lt.s32.totalorder %s11, 2
    // Predicated region
    $region29: #{conv_module_forward.1} parent=5 // pred_check
      %p175 = pneg %p174
    $region30: #{conv_module_forward.1} parent=5 // pred_check_branch
      %177 = sbr.rel (%p175) target = $region32
    $region31: #{conv_module_forward.1} parent=5 // pred_region
      // Predicated region
      $region33: #{conv_module_forward.1} parent=31 // pred_check
        %p178 = pneg %p31
      $region34: #{conv_module_forward.1} parent=31 // pred_check_branch
        %180 = sbr.rel (%p178) target = $region36
      $region35: #{conv_module_forward.1} parent=31 // pred_region
        %p181 = scmp.lt.s32.totalorder %s11, 1
        %s182 = scalar_select %p181, %s11, 1
        %s183 = smul.addr %s182, 36
        %s184 = smul.addr %s183, 4
        %s185 = scalar_lea.vmem %s0, %s184
      $region36: #{conv_module_forward.1} parent=31 // pred_fallthru
        _
    $region32: #{conv_module_forward.1} parent=5 // pred_fallthru
      _
    %p186 = scmp.le.s32.totalorder 1, %s11
    %p187 = scmp.lt.s32.totalorder %s11, 3
    %p188 = pnand %p186, %p187
    %p189 = pneg %p188
    // Predicated region
    $region37: #{conv_module_forward.1} parent=5 // pred_check
      _
    $region38: #{conv_module_forward.1} parent=5 // pred_check_branch
      %191 = sbr.rel (%p188) target = $region40
    $region39: #{conv_module_forward.1} parent=5 // pred_region
      %s192 = ssub.s32 %s11, 1
      %p193 = scmp.lt.s32.totalorder %s16, 1
      %s194 = scalar_select %p193, %s16, 1
      %s195 = smul.addr %s194, 36
      %s196 = smul.addr %s195, 4
      %s197 = scalar_lea.vmem %s0, %s196
      %p198 = pneg %p37
      %p199 = pneg %p34
      %p200 = pneg %p58
      %p201 = pneg %p55
      %p202 = pneg %p79
      %p203 = pneg %p76
      %p204 = pneg %p100
      %p205 = pneg %p97
      %p206 = pneg %p121
      %p207 = pneg %p118
      %p208 = pneg %p147
      %p209 = pneg %p144
      %p210 = scmp.lt.s32.totalorder %s16, 1
      %s211 = scalar_select %p210, %s16, 1
      %s212 = smul.addr %s211, 36
      %s213 = smul.addr %s212, 4
      %s214 = scalar_lea.vmem %s5, %s213
      %p215 = scmp.lt.s32.totalorder %s16, 1
      %s216 = scalar_select %p215, %s16, 1
      %s217 = smul.addr %s216, 36
      %s218 = smul.addr %s217, 4
      %s219 = scalar_lea.vmem %s0, %s218
      %p220 = scmp.lt.s32.totalorder %s16, 1
      %s221 = scalar_select %p220, %s16, 1
      %s222 = smul.addr %s221, 36
      %s223 = smul.addr %s222, 4
      %s224 = scalar_lea.vmem %s5, %s223
      %226 = vst [vmem:[#allocation2] sm:$0xff] 0
      %227 = vst [vmem:[#allocation2 + $0x8] sm:$0xff] 0
      %228 = vst [vmem:[#allocation2 + $0xa0] sm:$0xff] 0
      %229 = vst [vmem:[#allocation2 + $0xa8] sm:$0xff] 0
      %v230 = vld [vmem:[%s219] sm:$0xf]
      %v231 = vld [vmem:[%s219 + $0x4] sm:$0xf]
      %v232 = vld [vmem:[%s219 + $0x8] sm:$0xf]
      %v233 = vld [vmem:[%s219 + $0xc] sm:$0xf]
      %v234 = vld [vmem:[%s219 + $0x10] sm:$0xf]
      %v235 = vld [vmem:[%s219 + $0x14] sm:$0xf]
      %v236 = vld [vmem:[%s219 + $0x18] sm:$0xf]
      %v237 = vld [vmem:[%s219 + $0x1c] sm:$0xf]
      %v238 = vld [vmem:[%s219 + $0x20] sm:$0xf]
      %v239 = vld [vmem:[%s219 + $0x24] sm:$0xf]
      %v240 = vld [vmem:[%s219 + $0x28] sm:$0xf]
      %v241 = vld [vmem:[%s219 + $0x2c] sm:$0xf]
      %v242 = vld [vmem:[%s219 + $0x30] sm:$0xf]
      %v243 = vld [vmem:[%s219 + $0x34] sm:$0xf]
      %v244 = vld [vmem:[%s219 + $0x38] sm:$0xf]
      %v245 = vld [vmem:[%s219 + $0x3c] sm:$0xf]
      %v246 = vld [vmem:[%s219 + $0x40] sm:$0xf]
      %v247 = vld [vmem:[%s219 + $0x44] sm:$0xf]
      %v248 = vld [vmem:[%s219 + $0x48] sm:$0xf]
      %v249 = vld [vmem:[%s219 + $0x4c] sm:$0xf]
      %v250 = vld [vmem:[%s219 + $0x50] sm:$0xf]
      %v251 = vld [vmem:[%s219 + $0x54] sm:$0xf]
      %v252 = vld [vmem:[%s219 + $0x58] sm:$0xf]
      %v253 = vld [vmem:[%s219 + $0x5c] sm:$0xf]
      %v254 = vld [vmem:[%s219 + $0x60] sm:$0xf]
      %v255 = vld [vmem:[%s219 + $0x64] sm:$0xf]
      %v256 = vld [vmem:[%s219 + $0x68] sm:$0xf]
      %v257 = vld [vmem:[%s219 + $0x6c] sm:$0xf]
      %v258 = vld [vmem:[%s219 + $0x70] sm:$0xf]
      %v259 = vld [vmem:[%s219 + $0x74] sm:$0xf]
      %v260 = vld [vmem:[%s219 + $0x78] sm:$0xf]
      %v261 = vld [vmem:[%s219 + $0x7c] sm:$0xf]
      %v262 = vld [vmem:[%s219 + $0x80] sm:$0xf]
      %v263 = vld [vmem:[%s219 + $0x84] sm:$0xf]
      %v264 = vld [vmem:[%s219 + $0x88] sm:$0xf]
      %v265 = vld [vmem:[%s219 + $0x8c] sm:$0xf]
      %v266 = vld [vmem:[%s1] sm:$0xf]
      %v267 = vld [vmem:[%s1 + $0x4] sm:$0xf]
      %v268 = vld [vmem:[%s1 + $0x8] sm:$0xf]
      %v269 = vld [vmem:[%s1 + $0xc] sm:$0xf]
      %v270 = vld [vmem:[%s1 + $0x10] sm:$0xf]
      %v271 = vld [vmem:[%s1 + $0x14] sm:$0xf]
      %v272 = vlaneseq
      %v273 = vshrl.u32 %v272, 7
      %v274 = vadd.s32 %v273, 8
      %v275 = vadd.s32 %v273, 16
      %v276 = vadd.s32 %v273, 24
      %v277 = vadd.s32 %v273, 32
      %v278 = vadd.s32 %v273, 40
      %v279 = vadd.s32 %v273, 48
      %v280 = vadd.s32 %v273, 56
      %v281 = vadd.s32 %v273, 64
      %v282 = vadd.s32 %v273, 72
      %v283 = vadd.s32 %v273, 80
      %v284 = vadd.s32 %v273, 88
      %v285 = vadd.s32 %v273, 96
      %v286 = vadd.s32 %v273, 104
      %v287 = vadd.s32 %v273, 112
      %v288 = vadd.s32 %v273, 120
      %v289 = vadd.s32 %v273, 128
      %v290 = vadd.s32 %v273, 136
      %v291 = vadd.s32 %v273, 144
      %v292 = vadd.s32 %v273, 152
      %v293 = vadd.s32 %v273, 160
      %v294 = vadd.s32 %v273, 168
      %v295 = vadd.s32 %v273, 176
      %v296 = vadd.s32 %v273, 184
      %v297 = vadd.s32 %v273, 192
      %v298 = vadd.s32 %v273, 200
      %v299 = vadd.s32 %v273, 208
      %v300 = vadd.s32 %v273, 216
      %v301 = vadd.s32 %v273, 224
      %v302 = vadd.s32 %v273, 232
      %v303 = vadd.s32 %v273, 240
      %v304 = vadd.s32 %v273, 248
      %v305 = vadd.s32 %v273, 256
      %v306 = vadd.s32 %v273, 264
      %v307 = vadd.s32 %v273, 272
      %v308 = vadd.s32 %v273, 280
      %vm309 = vcmp.lt.s32.totalorder %v273, 0
      %v310 = vsub.s32 0, %v273
      %v311 = vsel %vm309, %v310, %v273
      %v312 = vmul.u32.u64.compose %v311, 3817748708
      %v313 = vextract.low.u32 %v312
      %v314 = vextract.high.u32 %v312
      %v315 = vshrl.u32 %v314, 4
      %v316 = vmul.u32 %v315, 18
      %v317 = vsub.s32 %v311, %v316
      %v318 = vsub.s32 0, %v317
      %v319 = vsel %vm309, %v318, %v317
      %vm320 = vcmp.lt.s32.totalorder %v274, 0
      %v321 = vsub.s32 0, %v274
      %v322 = vsel %vm320, %v321, %v274
      %v323 = vmul.u32.u64.compose %v322, 3817748708
      %v324 = vextract.low.u32 %v323
      %v325 = vextract.high.u32 %v323
      %v326 = vshrl.u32 %v325, 4
      %v327 = vmul.u32 %v326, 18
      %v328 = vsub.s32 %v322, %v327
      %v329 = vsub.s32 0, %v328
      %v330 = vsel %vm320, %v329, %v328
      %vm331 = vcmp.lt.s32.totalorder %v275, 0
      %v332 = vsub.s32 0, %v275
      %v333 = vsel %vm331, %v332, %v275
      %v334 = vmul.u32.u64.compose %v333, 3817748708
      %v335 = vextract.low.u32 %v334
      %v336 = vextract.high.u32 %v334
      %v337 = vshrl.u32 %v336, 4
      %v338 = vmul.u32 %v337, 18
      %v339 = vsub.s32 %v333, %v338
      %v340 = vsub.s32 0, %v339
      %v341 = vsel %vm331, %v340, %v339
      %vm342 = vcmp.lt.s32.totalorder %v276, 0
      %v343 = vsub.s32 0, %v276
      %v344 = vsel %vm342, %v343, %v276
      %v345 = vmul.u32.u64.compose %v344, 3817748708
      %v346 = vextract.low.u32 %v345
      %v347 = vextract.high.u32 %v345
      %v348 = vshrl.u32 %v347, 4
      %v349 = vmul.u32 %v348, 18
      %v350 = vsub.s32 %v344, %v349
      %v351 = vsub.s32 0, %v350
      %v352 = vsel %vm342, %v351, %v350
      %vm353 = vcmp.lt.s32.totalorder %v277, 0
      %v354 = vsub.s32 0, %v277
      %v355 = vsel %vm353, %v354, %v277
      %v356 = vmul.u32.u64.compose %v355, 3817748708
      %v357 = vextract.low.u32 %v356
      %v358 = vextract.high.u32 %v356
      %v359 = vshrl.u32 %v358, 4
      %v360 = vmul.u32 %v359, 18
      %v361 = vsub.s32 %v355, %v360
      %v362 = vsub.s32 0, %v361
      %v363 = vsel %vm353, %v362, %v361
      %vm364 = vcmp.lt.s32.totalorder %v278, 0
      %v365 = vsub.s32 0, %v278
      %v366 = vsel %vm364, %v365, %v278
      %v367 = vmul.u32.u64.compose %v366, 3817748708
      %v368 = vextract.low.u32 %v367
      %v369 = vextract.high.u32 %v367
      %v370 = vshrl.u32 %v369, 4
      %v371 = vmul.u32 %v370, 18
      %v372 = vsub.s32 %v366, %v371
      %v373 = vsub.s32 0, %v372
      %v374 = vsel %vm364, %v373, %v372
      %vm375 = vcmp.lt.s32.totalorder %v279, 0
      %v376 = vsub.s32 0, %v279
      %v377 = vsel %vm375, %v376, %v279
      %v378 = vmul.u32.u64.compose %v377, 3817748708
      %v379 = vextract.low.u32 %v378
      %v380 = vextract.high.u32 %v378
      %v381 = vshrl.u32 %v380, 4
      %v382 = vmul.u32 %v381, 18
      %v383 = vsub.s32 %v377, %v382
      %v384 = vsub.s32 0, %v383
      %v385 = vsel %vm375, %v384, %v383
      %vm386 = vcmp.lt.s32.totalorder %v280, 0
      %v387 = vsub.s32 0, %v280
      %v388 = vsel %vm386, %v387, %v280
      %v389 = vmul.u32.u64.compose %v388, 3817748708
      %v390 = vextract.low.u32 %v389
      %v391 = vextract.high.u32 %v389
      %v392 = vshrl.u32 %v391, 4
      %v393 = vmul.u32 %v392, 18
      %v394 = vsub.s32 %v388, %v393
      %v395 = vsub.s32 0, %v394
      %v396 = vsel %vm386, %v395, %v394
      %vm397 = vcmp.lt.s32.totalorder %v281, 0
      %v398 = vsub.s32 0, %v281
      %v399 = vsel %vm397, %v398, %v281
      %v400 = vmul.u32.u64.compose %v399, 3817748708
      %v401 = vextract.low.u32 %v400
      %v402 = vextract.high.u32 %v400
      %v403 = vshrl.u32 %v402, 4
      %v404 = vmul.u32 %v403, 18
      %v405 = vsub.s32 %v399, %v404
      %v406 = vsub.s32 0, %v405
      %v407 = vsel %vm397, %v406, %v405
      %vm408 = vcmp.lt.s32.totalorder %v282, 0
      %v409 = vsub.s32 0, %v282
      %v410 = vsel %vm408, %v409, %v282
      %v411 = vmul.u32.u64.compose %v410, 3817748708
      %v412 = vextract.low.u32 %v411
      %v413 = vextract.high.u32 %v411
      %v414 = vshrl.u32 %v413, 4
      %v415 = vmul.u32 %v414, 18
      %v416 = vsub.s32 %v410, %v415
      %v417 = vsub.s32 0, %v416
      %v418 = vsel %vm408, %v417, %v416
      %vm419 = vcmp.lt.s32.totalorder %v283, 0
      %v420 = vsub.s32 0, %v283
      %v421 = vsel %vm419, %v420, %v283
      %v422 = vmul.u32.u64.compose %v421, 3817748708
      %v423 = vextract.low.u32 %v422
      %v424 = vextract.high.u32 %v422
      %v425 = vshrl.u32 %v424, 4
      %v426 = vmul.u32 %v425, 18
      %v427 = vsub.s32 %v421, %v426
      %v428 = vsub.s32 0, %v427
      %v429 = vsel %vm419, %v428, %v427
      %vm430 = vcmp.lt.s32.totalorder %v284, 0
      %v431 = vsub.s32 0, %v284
      %v432 = vsel %vm430, %v431, %v284
      %v433 = vmul.u32.u64.compose %v432, 3817748708
      %v434 = vextract.low.u32 %v433
      %v435 = vextract.high.u32 %v433
      %v436 = vshrl.u32 %v435, 4
      %v437 = vmul.u32 %v436, 18
      %v438 = vsub.s32 %v432, %v437
      %v439 = vsub.s32 0, %v438
      %v440 = vsel %vm430, %v439, %v438
      %vm441 = vcmp.lt.s32.totalorder %v285, 0
      %v442 = vsub.s32 0, %v285
      %v443 = vsel %vm441, %v442, %v285
      %v444 = vmul.u32.u64.compose %v443, 3817748708
      %v445 = vextract.low.u32 %v444
      %v446 = vextract.high.u32 %v444
      %v447 = vshrl.u32 %v446, 4
      %v448 = vmul.u32 %v447, 18
      %v449 = vsub.s32 %v443, %v448
      %v450 = vsub.s32 0, %v449
      %v451 = vsel %vm441, %v450, %v449
      %vm452 = vcmp.lt.s32.totalorder %v286, 0
      %v453 = vsub.s32 0, %v286
      %v454 = vsel %vm452, %v453, %v286
      %v455 = vmul.u32.u64.compose %v454, 3817748708
      %v456 = vextract.low.u32 %v455
      %v457 = vextract.high.u32 %v455
      %v458 = vshrl.u32 %v457, 4
      %v459 = vmul.u32 %v458, 18
      %v460 = vsub.s32 %v454, %v459
      %v461 = vsub.s32 0, %v460
      %v462 = vsel %vm452, %v461, %v460
      %vm463 = vcmp.lt.s32.totalorder %v287, 0
      %v464 = vsub.s32 0, %v287
      %v465 = vsel %vm463, %v464, %v287
      %v466 = vmul.u32.u64.compose %v465, 3817748708
      %v467 = vextract.low.u32 %v466
      %v468 = vextract.high.u32 %v466
      %v469 = vshrl.u32 %v468, 4
      %v470 = vmul.u32 %v469, 18
      %v471 = vsub.s32 %v465, %v470
      %v472 = vsub.s32 0, %v471
      %v473 = vsel %vm463, %v472, %v471
      %vm474 = vcmp.lt.s32.totalorder %v288, 0
      %v475 = vsub.s32 0, %v288
      %v476 = vsel %vm474, %v475, %v288
      %v477 = vmul.u32.u64.compose %v476, 3817748708
      %v478 = vextract.low.u32 %v477
      %v479 = vextract.high.u32 %v477
      %v480 = vshrl.u32 %v479, 4
      %v481 = vmul.u32 %v480, 18
      %v482 = vsub.s32 %v476, %v481
      %v483 = vsub.s32 0, %v482
      %v484 = vsel %vm474, %v483, %v482
      %vm485 = vcmp.lt.s32.totalorder %v289, 0
      %v486 = vsub.s32 0, %v289
      %v487 = vsel %vm485, %v486, %v289
      %v488 = vmul.u32.u64.compose %v487, 3817748708
      %v489 = vextract.low.u32 %v488
      %v490 = vextract.high.u32 %v488
      %v491 = vshrl.u32 %v490, 4
      %v492 = vmul.u32 %v491, 18
      %v493 = vsub.s32 %v487, %v492
      %v494 = vsub.s32 0, %v493
      %v495 = vsel %vm485, %v494, %v493
      %vm496 = vcmp.lt.s32.totalorder %v290, 0
      %v497 = vsub.s32 0, %v290
      %v498 = vsel %vm496, %v497, %v290
      %v499 = vmul.u32.u64.compose %v498, 3817748708
      %v500 = vextract.low.u32 %v499
      %v501 = vextract.high.u32 %v499
      %v502 = vshrl.u32 %v501, 4
      %v503 = vmul.u32 %v502, 18
      %v504 = vsub.s32 %v498, %v503
      %v505 = vsub.s32 0, %v504
      %v506 = vsel %vm496, %v505, %v504
      %vm507 = vcmp.lt.s32.totalorder %v291, 0
      %v508 = vsub.s32 0, %v291
      %v509 = vsel %vm507, %v508, %v291
      %v510 = vmul.u32.u64.compose %v509, 3817748708
      %v511 = vextract.low.u32 %v510
      %v512 = vextract.high.u32 %v510
      %v513 = vshrl.u32 %v512, 4
      %v514 = vmul.u32 %v513, 18
      %v515 = vsub.s32 %v509, %v514
      %v516 = vsub.s32 0, %v515
      %v517 = vsel %vm507, %v516, %v515
      %vm518 = vcmp.lt.s32.totalorder %v292, 0
      %v519 = vsub.s32 0, %v292
      %v520 = vsel %vm518, %v519, %v292
      %v521 = vmul.u32.u64.compose %v520, 3817748708
      %v522 = vextract.low.u32 %v521
      %v523 = vextract.high.u32 %v521
      %v524 = vshrl.u32 %v523, 4
      %v525 = vmul.u32 %v524, 18
      %v526 = vsub.s32 %v520, %v525
      %v527 = vsub.s32 0, %v526
      %v528 = vsel %vm518, %v527, %v526
      %vm529 = vcmp.lt.s32.totalorder %v293, 0
      %v530 = vsub.s32 0, %v293
      %v531 = vsel %vm529, %v530, %v293
      %v532 = vmul.u32.u64.compose %v531, 3817748708
      %v533 = vextract.low.u32 %v532
      %v534 = vextract.high.u32 %v532
      %v535 = vshrl.u32 %v534, 4
      %v536 = vmul.u32 %v535, 18
      %v537 = vsub.s32 %v531, %v536
      %v538 = vsub.s32 0, %v537
      %v539 = vsel %vm529, %v538, %v537
      %vm540 = vcmp.lt.s32.totalorder %v294, 0
      %v541 = vsub.s32 0, %v294
      %v542 = vsel %vm540, %v541, %v294
      %v543 = vmul.u32.u64.compose %v542, 3817748708
      %v544 = vextract.low.u32 %v543
      %v545 = vextract.high.u32 %v543
      %v546 = vshrl.u32 %v545, 4
      %v547 = vmul.u32 %v546, 18
      %v548 = vsub.s32 %v542, %v547
      %v549 = vsub.s32 0, %v548
      %v550 = vsel %vm540, %v549, %v548
      %vm551 = vcmp.lt.s32.totalorder %v295, 0
      %v552 = vsub.s32 0, %v295
      %v553 = vsel %vm551, %v552, %v295
      %v554 = vmul.u32.u64.compose %v553, 3817748708
      %v555 = vextract.low.u32 %v554
      %v556 = vextract.high.u32 %v554
      %v557 = vshrl.u32 %v556, 4
      %v558 = vmul.u32 %v557, 18
      %v559 = vsub.s32 %v553, %v558
      %v560 = vsub.s32 0, %v559
      %v561 = vsel %vm551, %v560, %v559
      %vm562 = vcmp.lt.s32.totalorder %v296, 0
      %v563 = vsub.s32 0, %v296
      %v564 = vsel %vm562, %v563, %v296
      %v565 = vmul.u32.u64.compose %v564, 3817748708
      %v566 = vextract.low.u32 %v565
      %v567 = vextract.high.u32 %v565
      %v568 = vshrl.u32 %v567, 4
      %v569 = vmul.u32 %v568, 18
      %v570 = vsub.s32 %v564, %v569
      %v571 = vsub.s32 0, %v570
      %v572 = vsel %vm562, %v571, %v570
      %vm573 = vcmp.lt.s32.totalorder %v297, 0
      %v574 = vsub.s32 0, %v297
      %v575 = vsel %vm573, %v574, %v297
      %v576 = vmul.u32.u64.compose %v575, 3817748708
      %v577 = vextract.low.u32 %v576
      %v578 = vextract.high.u32 %v576
      %v579 = vshrl.u32 %v578, 4
      %v580 = vmul.u32 %v579, 18
      %v581 = vsub.s32 %v575, %v580
      %v582 = vsub.s32 0, %v581
      %v583 = vsel %vm573, %v582, %v581
      %vm584 = vcmp.lt.s32.totalorder %v298, 0
      %v585 = vsub.s32 0, %v298
      %v586 = vsel %vm584, %v585, %v298
      %v587 = vmul.u32.u64.compose %v586, 3817748708
      %v588 = vextract.low.u32 %v587
      %v589 = vextract.high.u32 %v587
      %v590 = vshrl.u32 %v589, 4
      %v591 = vmul.u32 %v590, 18
      %v592 = vsub.s32 %v586, %v591
      %v593 = vsub.s32 0, %v592
      %v594 = vsel %vm584, %v593, %v592
      %vm595 = vcmp.lt.s32.totalorder %v299, 0
      %v596 = vsub.s32 0, %v299
      %v597 = vsel %vm595, %v596, %v299
      %v598 = vmul.u32.u64.compose %v597, 3817748708
      %v599 = vextract.low.u32 %v598
      %v600 = vextract.high.u32 %v598
      %v601 = vshrl.u32 %v600, 4
      %v602 = vmul.u32 %v601, 18
      %v603 = vsub.s32 %v597, %v602
      %v604 = vsub.s32 0, %v603
      %v605 = vsel %vm595, %v604, %v603
      %vm606 = vcmp.lt.s32.totalorder %v300, 0
      %v607 = vsub.s32 0, %v300
      %v608 = vsel %vm606, %v607, %v300
      %v609 = vmul.u32.u64.compose %v608, 3817748708
      %v610 = vextract.low.u32 %v609
      %v611 = vextract.high.u32 %v609
      %v612 = vshrl.u32 %v611, 4
      %v613 = vmul.u32 %v612, 18
      %v614 = vsub.s32 %v608, %v613
      %v615 = vsub.s32 0, %v614
      %v616 = vsel %vm606, %v615, %v614
      %vm617 = vcmp.lt.s32.totalorder %v301, 0
      %v618 = vsub.s32 0, %v301
      %v619 = vsel %vm617, %v618, %v301
      %v620 = vmul.u32.u64.compose %v619, 3817748708
      %v621 = vextract.low.u32 %v620
      %v622 = vextract.high.u32 %v620
      %v623 = vshrl.u32 %v622, 4
      %v624 = vmul.u32 %v623, 18
      %v625 = vsub.s32 %v619, %v624
      %v626 = vsub.s32 0, %v625
      %v627 = vsel %vm617, %v626, %v625
      %vm628 = vcmp.lt.s32.totalorder %v302, 0
      %v629 = vsub.s32 0, %v302
      %v630 = vsel %vm628, %v629, %v302
      %v631 = vmul.u32.u64.compose %v630, 3817748708
      %v632 = vextract.low.u32 %v631
      %v633 = vextract.high.u32 %v631
      %v634 = vshrl.u32 %v633, 4
      %v635 = vmul.u32 %v634, 18
      %v636 = vsub.s32 %v630, %v635
      %v637 = vsub.s32 0, %v636
      %v638 = vsel %vm628, %v637, %v636
      %vm639 = vcmp.lt.s32.totalorder %v303, 0
      %v640 = vsub.s32 0, %v303
      %v641 = vsel %vm639, %v640, %v303
      %v642 = vmul.u32.u64.compose %v641, 3817748708
      %v643 = vextract.low.u32 %v642
      %v644 = vextract.high.u32 %v642
      %v645 = vshrl.u32 %v644, 4
      %v646 = vmul.u32 %v645, 18
      %v647 = vsub.s32 %v641, %v646
      %v648 = vsub.s32 0, %v647
      %v649 = vsel %vm639, %v648, %v647
      %vm650 = vcmp.lt.s32.totalorder %v304, 0
      %v651 = vsub.s32 0, %v304
      %v652 = vsel %vm650, %v651, %v304
      %v653 = vmul.u32.u64.compose %v652, 3817748708
      %v654 = vextract.low.u32 %v653
      %v655 = vextract.high.u32 %v653
      %v656 = vshrl.u32 %v655, 4
      %v657 = vmul.u32 %v656, 18
      %v658 = vsub.s32 %v652, %v657
      %v659 = vsub.s32 0, %v658
      %v660 = vsel %vm650, %v659, %v658
      %vm661 = vcmp.lt.s32.totalorder %v305, 0
      %v662 = vsub.s32 0, %v305
      %v663 = vsel %vm661, %v662, %v305
      %v664 = vmul.u32.u64.compose %v663, 3817748708
      %v665 = vextract.low.u32 %v664
      %v666 = vextract.high.u32 %v664
      %v667 = vshrl.u32 %v666, 4
      %v668 = vmul.u32 %v667, 18
      %v669 = vsub.s32 %v663, %v668
      %v670 = vsub.s32 0, %v669
      %v671 = vsel %vm661, %v670, %v669
      %vm672 = vcmp.lt.s32.totalorder %v306, 0
      %v673 = vsub.s32 0, %v306
      %v674 = vsel %vm672, %v673, %v306
      %v675 = vmul.u32.u64.compose %v674, 3817748708
      %v676 = vextract.low.u32 %v675
      %v677 = vextract.high.u32 %v675
      %v678 = vshrl.u32 %v677, 4
      %v679 = vmul.u32 %v678, 18
      %v680 = vsub.s32 %v674, %v679
      %v681 = vsub.s32 0, %v680
      %v682 = vsel %vm672, %v681, %v680
      %vm683 = vcmp.lt.s32.totalorder %v307, 0
      %v684 = vsub.s32 0, %v307
      %v685 = vsel %vm683, %v684, %v307
      %v686 = vmul.u32.u64.compose %v685, 3817748708
      %v687 = vextract.low.u32 %v686
      %v688 = vextract.high.u32 %v686
      %v689 = vshrl.u32 %v688, 4
      %v690 = vmul.u32 %v689, 18
      %v691 = vsub.s32 %v685, %v690
      %v692 = vsub.s32 0, %v691
      %v693 = vsel %vm683, %v692, %v691
      %vm694 = vcmp.lt.s32.totalorder %v308, 0
      %v695 = vsub.s32 0, %v308
      %v696 = vsel %vm694, %v695, %v308
      %v697 = vmul.u32.u64.compose %v696, 3817748708
      %v698 = vextract.low.u32 %v697
      %v699 = vextract.high.u32 %v697
      %v700 = vshrl.u32 %v699, 4
      %v701 = vmul.u32 %v700, 18
      %v702 = vsub.s32 %v696, %v701
      %v703 = vsub.s32 0, %v702
      %v704 = vsel %vm694, %v703, %v702
      %vm705 = vcmp.ne.s32.totalorder %v319, 0
      %vm706 = vcmp.ne.s32.totalorder %v330, 0
      %vm707 = vcmp.ne.s32.totalorder %v341, 0
      %vm708 = vcmp.ne.s32.totalorder %v352, 0
      %vm709 = vcmp.ne.s32.totalorder %v363, 0
      %vm710 = vcmp.ne.s32.totalorder %v374, 0
      %vm711 = vcmp.ne.s32.totalorder %v385, 0
      %vm712 = vcmp.ne.s32.totalorder %v396, 0
      %vm713 = vcmp.ne.s32.totalorder %v407, 0
      %vm714 = vcmp.ne.s32.totalorder %v418, 0
      %vm715 = vcmp.ne.s32.totalorder %v429, 0
      %vm716 = vcmp.ne.s32.totalorder %v440, 0
      %vm717 = vcmp.ne.s32.totalorder %v451, 0
      %vm718 = vcmp.ne.s32.totalorder %v462, 0
      %vm719 = vcmp.ne.s32.totalorder %v473, 0
      %vm720 = vcmp.ne.s32.totalorder %v484, 0
      %vm721 = vcmp.ne.s32.totalorder %v495, 0
      %vm722 = vcmp.ne.s32.totalorder %v506, 0
      %vm723 = vcmp.ne.s32.totalorder %v517, 0
      %vm724 = vcmp.ne.s32.totalorder %v528, 0
      %vm725 = vcmp.ne.s32.totalorder %v539, 0
      %vm726 = vcmp.ne.s32.totalorder %v550, 0
      %vm727 = vcmp.ne.s32.totalorder %v561, 0
      %vm728 = vcmp.ne.s32.totalorder %v572, 0
      %vm729 = vcmp.ne.s32.totalorder %v583, 0
      %vm730 = vcmp.ne.s32.totalorder %v594, 0
      %vm731 = vcmp.ne.s32.totalorder %v605, 0
      %vm732 = vcmp.ne.s32.totalorder %v616, 0
      %vm733 = vcmp.ne.s32.totalorder %v627, 0
      %vm734 = vcmp.ne.s32.totalorder %v638, 0
      %vm735 = vcmp.ne.s32.totalorder %v649, 0
      %vm736 = vcmp.ne.s32.totalorder %v660, 0
      %vm737 = vcmp.ne.s32.totalorder %v671, 0
      %vm738 = vcmp.ne.s32.totalorder %v682, 0
      %vm739 = vcmp.ne.s32.totalorder %v693, 0
      %vm740 = vcmp.ne.s32.totalorder %v704, 0
      %vm741 = vcmp.lt.s32.totalorder %v319, 0
      %vm742 = vcmp.lt.s32.totalorder %v330, 0
      %vm743 = vcmp.lt.s32.totalorder %v341, 0
      %vm744 = vcmp.lt.s32.totalorder %v352, 0
      %vm745 = vcmp.lt.s32.totalorder %v363, 0
      %vm746 = vcmp.lt.s32.totalorder %v374, 0
      %vm747 = vcmp.lt.s32.totalorder %v385, 0
      %vm748 = vcmp.lt.s32.totalorder %v396, 0
      %vm749 = vcmp.lt.s32.totalorder %v407, 0
      %vm750 = vcmp.lt.s32.totalorder %v418, 0
      %vm751 = vcmp.lt.s32.totalorder %v429, 0
      %vm752 = vcmp.lt.s32.totalorder %v440, 0
      %vm753 = vcmp.lt.s32.totalorder %v451, 0
      %vm754 = vcmp.lt.s32.totalorder %v462, 0
      %vm755 = vcmp.lt.s32.totalorder %v473, 0
      %vm756 = vcmp.lt.s32.totalorder %v484, 0
      %vm757 = vcmp.lt.s32.totalorder %v495, 0
      %vm758 = vcmp.lt.s32.totalorder %v506, 0
      %vm759 = vcmp.lt.s32.totalorder %v517, 0
      %vm760 = vcmp.lt.s32.totalorder %v528, 0
      %vm761 = vcmp.lt.s32.totalorder %v539, 0
      %vm762 = vcmp.lt.s32.totalorder %v550, 0
      %vm763 = vcmp.lt.s32.totalorder %v561, 0
      %vm764 = vcmp.lt.s32.totalorder %v572, 0
      %vm765 = vcmp.lt.s32.totalorder %v583, 0
      %vm766 = vcmp.lt.s32.totalorder %v594, 0
      %vm767 = vcmp.lt.s32.totalorder %v605, 0
      %vm768 = vcmp.lt.s32.totalorder %v616, 0
      %vm769 = vcmp.lt.s32.totalorder %v627, 0
      %vm770 = vcmp.lt.s32.totalorder %v638, 0
      %vm771 = vcmp.lt.s32.totalorder %v649, 0
      %vm772 = vcmp.lt.s32.totalorder %v660, 0
      %vm773 = vcmp.lt.s32.totalorder %v671, 0
      %vm774 = vcmp.lt.s32.totalorder %v682, 0
      %vm775 = vcmp.lt.s32.totalorder %v693, 0
      %vm776 = vcmp.lt.s32.totalorder %v704, 0
      %vm777 = vmand %vm741, %vm705
      %vm778 = vmand %vm742, %vm706
      %vm779 = vmand %vm743, %vm707
      %vm780 = vmand %vm744, %vm708
      %vm781 = vmand %vm745, %vm709
      %vm782 = vmand %vm746, %vm710
      %vm783 = vmand %vm747, %vm711
      %vm784 = vmand %vm748, %vm712
      %vm785 = vmand %vm749, %vm713
      %vm786 = vmand %vm750, %vm714
      %vm787 = vmand %vm751, %vm715
      %vm788 = vmand %vm752, %vm716
      %vm789 = vmand %vm753, %vm717
      %vm790 = vmand %vm754, %vm718
      %vm791 = vmand %vm755, %vm719
      %vm792 = vmand %vm756, %vm720
      %vm793 = vmand %vm757, %vm721
      %vm794 = vmand %vm758, %vm722
      %vm795 = vmand %vm759, %vm723
      %vm796 = vmand %vm760, %vm724
      %vm797 = vmand %vm761, %vm725
      %vm798 = vmand %vm762, %vm726
      %vm799 = vmand %vm763, %vm727
      %vm800 = vmand %vm764, %vm728
      %vm801 = vmand %vm765, %vm729
      %vm802 = vmand %vm766, %vm730
      %vm803 = vmand %vm767, %vm731
      %vm804 = vmand %vm768, %vm732
      %vm805 = vmand %vm769, %vm733
      %vm806 = vmand %vm770, %vm734
      %vm807 = vmand %vm771, %vm735
      %vm808 = vmand %vm772, %vm736
      %vm809 = vmand %vm773, %vm737
      %vm810 = vmand %vm774, %vm738
      %vm811 = vmand %vm775, %vm739
      %vm812 = vmand %vm776, %vm740
      %v813 = vadd.s32 %v319, 18
      %v814 = vadd.s32 %v330, 18
      %v815 = vadd.s32 %v341, 18
      %v816 = vadd.s32 %v352, 18
      %v817 = vadd.s32 %v363, 18
      %v818 = vadd.s32 %v374, 18
      %v819 = vadd.s32 %v385, 18
      %v820 = vadd.s32 %v396, 18
      %v821 = vadd.s32 %v407, 18
      %v822 = vadd.s32 %v418, 18
      %v823 = vadd.s32 %v429, 18
      %v824 = vadd.s32 %v440, 18
      %v825 = vadd.s32 %v451, 18
      %v826 = vadd.s32 %v462, 18
      %v827 = vadd.s32 %v473, 18
      %v828 = vadd.s32 %v484, 18
      %v829 = vadd.s32 %v495, 18
      %v830 = vadd.s32 %v506, 18
      %v831 = vadd.s32 %v517, 18
      %v832 = vadd.s32 %v528, 18
      %v833 = vadd.s32 %v539, 18
      %v834 = vadd.s32 %v550, 18
      %v835 = vadd.s32 %v561, 18
      %v836 = vadd.s32 %v572, 18
      %v837 = vadd.s32 %v583, 18
      %v838 = vadd.s32 %v594, 18
      %v839 = vadd.s32 %v605, 18
      %v840 = vadd.s32 %v616, 18
      %v841 = vadd.s32 %v627, 18
      %v842 = vadd.s32 %v638, 18
      %v843 = vadd.s32 %v649, 18
      %v844 = vadd.s32 %v660, 18
      %v845 = vadd.s32 %v671, 18
      %v846 = vadd.s32 %v682, 18
      %v847 = vadd.s32 %v693, 18
      %v848 = vadd.s32 %v704, 18
      %v849 = vsel %vm777, %v813, %v319
      %v850 = vsel %vm778, %v814, %v330
      %v851 = vsel %vm779, %v815, %v341
      %v852 = vsel %vm780, %v816, %v352
      %v853 = vsel %vm781, %v817, %v363
      %v854 = vsel %vm782, %v818, %v374
      %v855 = vsel %vm783, %v819, %v385
      %v856 = vsel %vm784, %v820, %v396
      %v857 = vsel %vm785, %v821, %v407
      %v858 = vsel %vm786, %v822, %v418
      %v859 = vsel %vm787, %v823, %v429
      %v860 = vsel %vm788, %v824, %v440
      %v861 = vsel %vm789, %v825, %v451
      %v862 = vsel %vm790, %v826, %v462
      %v863 = vsel %vm791, %v827, %v473
      %v864 = vsel %vm792, %v828, %v484
      %v865 = vsel %vm793, %v829, %v495
      %v866 = vsel %vm794, %v830, %v506
      %v867 = vsel %vm795, %v831, %v517
      %v868 = vsel %vm796, %v832, %v528
      %v869 = vsel %vm797, %v833, %v539
      %v870 = vsel %vm798, %v834, %v550
      %v871 = vsel %vm799, %v835, %v561
      %v872 = vsel %vm800, %v836, %v572
      %v873 = vsel %vm801, %v837, %v583
      %v874 = vsel %vm802, %v838, %v594
      %v875 = vsel %vm803, %v839, %v605
      %v876 = vsel %vm804, %v840, %v616
      %v877 = vsel %vm805, %v841, %v627
      %v878 = vsel %vm806, %v842, %v638
      %v879 = vsel %vm807, %v843, %v649
      %v880 = vsel %vm808, %v844, %v660
      %v881 = vsel %vm809, %v845, %v671
      %v882 = vsel %vm810, %v846, %v682
      %v883 = vsel %vm811, %v847, %v693
      %v884 = vsel %vm812, %v848, %v704
      %vm885 = vcmp.lt.s32.totalorder %v849, 16
      %vm886 = vcmp.lt.s32.totalorder %v850, 16
      %vm887 = vcmp.lt.s32.totalorder %v851, 16
      %vm888 = vcmp.lt.s32.totalorder %v852, 16
      %vm889 = vcmp.lt.s32.totalorder %v853, 16
      %vm890 = vcmp.lt.s32.totalorder %v854, 16
      %vm891 = vcmp.lt.s32.totalorder %v855, 16
      %vm892 = vcmp.lt.s32.totalorder %v856, 16
      %vm893 = vcmp.lt.s32.totalorder %v857, 16
      %vm894 = vcmp.lt.s32.totalorder %v858, 16
      %vm895 = vcmp.lt.s32.totalorder %v859, 16
      %vm896 = vcmp.lt.s32.totalorder %v860, 16
      %vm897 = vcmp.lt.s32.totalorder %v861, 16
      %vm898 = vcmp.lt.s32.totalorder %v862, 16
      %vm899 = vcmp.lt.s32.totalorder %v863, 16
      %vm900 = vcmp.lt.s32.totalorder %v864, 16
      %vm901 = vcmp.lt.s32.totalorder %v865, 16
      %vm902 = vcmp.lt.s32.totalorder %v866, 16
      %vm903 = vcmp.lt.s32.totalorder %v867, 16
      %vm904 = vcmp.lt.s32.totalorder %v868, 16
      %vm905 = vcmp.lt.s32.totalorder %v869, 16
      %vm906 = vcmp.lt.s32.totalorder %v870, 16
      %vm907 = vcmp.lt.s32.totalorder %v871, 16
      %vm908 = vcmp.lt.s32.totalorder %v872, 16
      %vm909 = vcmp.lt.s32.totalorder %v873, 16
      %vm910 = vcmp.lt.s32.totalorder %v874, 16
      %vm911 = vcmp.lt.s32.totalorder %v875, 16
      %vm912 = vcmp.lt.s32.totalorder %v876, 16
      %vm913 = vcmp.lt.s32.totalorder %v877, 16
      %vm914 = vcmp.lt.s32.totalorder %v878, 16
      %vm915 = vcmp.lt.s32.totalorder %v879, 16
      %vm916 = vcmp.lt.s32.totalorder %v880, 16
      %vm917 = vcmp.lt.s32.totalorder %v881, 16
      %vm918 = vcmp.lt.s32.totalorder %v882, 16
      %vm919 = vcmp.lt.s32.totalorder %v883, 16
      %vm920 = vcmp.lt.s32.totalorder %v884, 16
      %v921 = vld [vmem:[%s2] sm:$0x1]
      %v923 = vlaneseq
      %v924 = vshrl.u32 %v923, 7
      %v925 = vsub.s32 0, %v924
      %v926 = vrot.slane %v921, %v925
      %v964 = vunpack.c.l.b16 %v230
      %v965 = vunpack.c.l.b16 %v231
      %v966 = vunpack.c.l.b16 %v232
      %v967 = vunpack.c.l.b16 %v233
      %v968 = vunpack.c.l.b16 %v234
      %v969 = vunpack.c.l.b16 %v235
      %v970 = vunpack.c.l.b16 %v236
      %v971 = vunpack.c.l.b16 %v237
      %v972 = vunpack.c.l.b16 %v238
      %v973 = vunpack.c.l.b16 %v239
      %v974 = vunpack.c.l.b16 %v240
      %v975 = vunpack.c.l.b16 %v241
      %v976 = vunpack.c.l.b16 %v242
      %v977 = vunpack.c.l.b16 %v243
      %v978 = vunpack.c.l.b16 %v244
      %v979 = vunpack.c.l.b16 %v245
      %v980 = vunpack.c.l.b16 %v246
      %v981 = vunpack.c.l.b16 %v247
      %v982 = vunpack.c.l.b16 %v248
      %v983 = vunpack.c.l.b16 %v249
      %v984 = vunpack.c.l.b16 %v250
      %v985 = vunpack.c.l.b16 %v251
      %v986 = vunpack.c.l.b16 %v252
      %v987 = vunpack.c.l.b16 %v253
      %v988 = vunpack.c.l.b16 %v254
      %v989 = vunpack.c.l.b16 %v255
      %v990 = vunpack.c.l.b16 %v256
      %v991 = vunpack.c.l.b16 %v257
      %v992 = vunpack.c.l.b16 %v258
      %v993 = vunpack.c.l.b16 %v259
      %v994 = vunpack.c.l.b16 %v260
      %v995 = vunpack.c.l.b16 %v261
      %v996 = vunpack.c.l.b16 %v262
      %v997 = vunpack.c.l.b16 %v263
      %v998 = vunpack.c.l.b16 %v264
      %v999 = vunpack.c.l.b16 %v265
      %v1000 = vpack.c.b16 %v965, %v964
      %v1001 = vpack.c.b16 %v967, %v966
      %v1002 = vpack.c.b16 %v969, %v968
      %v1003 = vpack.c.b16 %v971, %v970
      %v1004 = vpack.c.b16 %v973, %v972
      %v1005 = vpack.c.b16 %v975, %v974
      %v1006 = vpack.c.b16 %v977, %v976
      %v1007 = vpack.c.b16 %v979, %v978
      %v1008 = vpack.c.b16 %v981, %v980
      %v1009 = vpack.c.b16 %v983, %v982
      %v1010 = vpack.c.b16 %v985, %v984
      %v1011 = vpack.c.b16 %v987, %v986
      %v1012 = vpack.c.b16 %v989, %v988
      %v1013 = vpack.c.b16 %v991, %v990
      %v1014 = vpack.c.b16 %v993, %v992
      %v1015 = vpack.c.b16 %v995, %v994
      %v1016 = vpack.c.b16 %v997, %v996
      %v1017 = vpack.c.b16 %v999, %v998
      %v1024 = vunpack.c.l.b16 %v266
      %v1025 = vunpack.c.l.b16 %v267
      %v1026 = vunpack.c.l.b16 %v268
      %v1027 = vunpack.c.l.b16 %v269
      %v1028 = vunpack.c.l.b16 %v270
      %v1029 = vunpack.c.l.b16 %v271
      %v1030 = vpack.c.b16 %v1025, %v1024
      %v1031 = vpack.c.b16 %v1027, %v1026
      %v1032 = vpack.c.b16 %v1029, %v1028
      %vm1036 = vcmask 392192
      %v1038 = vsel %vm1036, %v1000, 0
      %v1041 = vsel %vm1036, %v1001, 0
      %v1044 = vsel %vm1036, %v1002, 0
      %v1047 = vsel %vm1036, %v1003, 0
      %v1050 = vsel %vm1036, %v1004, 0
      %v1053 = vsel %vm1036, %v1005, 0
      %v1056 = vsel %vm1036, %v1006, 0
      %v1059 = vsel %vm1036, %v1007, 0
      %v1062 = vsel %vm1036, %v1008, 0
      %v1065 = vsel %vm1036, %v1009, 0
      %v1068 = vsel %vm1036, %v1010, 0
      %v1071 = vsel %vm1036, %v1011, 0
      %v1074 = vsel %vm1036, %v1012, 0
      %v1077 = vsel %vm1036, %v1013, 0
      %v1080 = vsel %vm1036, %v1014, 0
      %v1083 = vsel %vm1036, %v1015, 0
      %v1086 = vsel %vm1036, %v1016, 0
      %v1089 = vsel %vm1036, %v1017, 0
      %1091 = vmatprep.subr.bf16.mxu0 0
      %1092 = vmatpush1.bf16.msra.mxu0 %v1030
      %1093 = vmatprep.subr.bf16.mxu0 0
      %1094 = vmatpush1.bf16.msra.mxu0 %v1031
      %1095 = vmatprep.subr.bf16.mxu0 0
      %1096 = vmatpush1.bf16.msra.mxu0 %v1032
      %1097 = vmatprep.subr.bf16.mxu0 0
      %1098 = vmatpush1.bf16.msra.mxu0 0
      %1099 = vmatprep.subr.bf16.mxu0 0
      %1100 = vmatpush1.bf16.msra.mxu0 0
      %1101 = vmatprep.subr.bf16.mxu0 0
      %1102 = vmatpush1.bf16.msra.mxu0 0
      %1103 = vmatprep.subr.bf16.mxu0 0
      %1104 = vmatpush1.bf16.msra.mxu0 0
      %1105 = vmatprep.subr.bf16.mxu0 0
      %1106 = vmatpush1.bf16.msra.mxu0 0
      %1107 = vmatprep.subr.bf16.mxu0 0
      %1108 = vmatpush1.bf16.msra.mxu0 0
      %1109 = vmatprep.subr.bf16.mxu0 0
      %1110 = vmatpush1.bf16.msra.mxu0 0
      %1111 = vmatprep.subr.bf16.mxu0 0
      %1112 = vmatpush1.bf16.msra.mxu0 0
      %1113 = vmatprep.subr.bf16.mxu0 0
      %1114 = vmatpush1.bf16.msra.mxu0 0
      %1115 = vmatprep.subr.bf16.mxu0 0
      %1116 = vmatpush1.bf16.msra.mxu0 0
      %1117 = vmatprep.subr.bf16.mxu0 0
      %1118 = vmatpush1.bf16.msra.mxu0 0
      %1119 = vmatprep.subr.bf16.mxu0 0
      %1120 = vmatpush1.bf16.msra.mxu0 0
      %1121 = vmatprep.subr.bf16.mxu0 0
      %1122 = vmatpush1.bf16.msra.mxu0 0
      %1123 = vmatprep.mubr.bf16.mxu0 0
      %1124 = vmatmul.mubr.bf16.gmra.mrb[0].mxu0 %v1038
      %v1125 = vpop.f32.mrb[0].mxu0
      %v1126 = vadd.f32 %v926, %v1125
      %v1127 = vpop.f32.mrb[0].mxu0
      %v1128 = vpop.f32.mrb[0].mxu0
      %v1129 = vadd.f32 %v926, %v1128
      %v1130 = vpop.f32.mrb[0].mxu0
      %1131 = vmatprep.mubr.bf16.mxu0 0
      %1132 = vmatmul.mubr.bf16.gmra.mrb[0].mxu0 %v1041
      %v1133 = vpop.f32.mrb[0].mxu0
      %v1134 = vadd.f32 %v926, %v1133
      %v1135 = vpop.f32.mrb[0].mxu0
      %v1136 = vpop.f32.mrb[0].mxu0
      %v1137 = vadd.f32 %v926, %v1136
      %v1138 = vpop.f32.mrb[0].mxu0
      %1139 = vmatprep.mubr.bf16.mxu0 0
      %1140 = vmatmul.mubr.bf16.gmra.mrb[0].mxu0 %v1044
      %v1141 = vpop.f32.mrb[0].mxu0
      %v1142 = vadd.f32 %v926, %v1141
      %v1143 = vpop.f32.mrb[0].mxu0
      %v1144 = vpop.f32.mrb[0].mxu0
      %v1145 = vadd.f32 %v926, %v1144
      %v1146 = vpop.f32.mrb[0].mxu0
      %1147 = vmatprep.mubr.bf16.mxu0 0
      %1148 = vmatmul.mubr.bf16.gmra.mrb[0].mxu0 %v1047
      %v1149 = vpop.f32.mrb[0].mxu0
      %v1150 = vadd.f32 %v926, %v1149
      %v1151 = vpop.f32.mrb[0].mxu0
      %v1152 = vpop.f32.mrb[0].mxu0
      %v1153 = vadd.f32 %v926, %v1152
      %v1154 = vpop.f32.mrb[0].mxu0
      %1155 = vmatprep.mubr.bf16.mxu0 0
      %1156 = vmatmul.mubr.bf16.gmra.mrb[0].mxu0 %v1050
      %v1157 = vpop.f32.mrb[0].mxu0
      %v1158 = vadd.f32 %v926, %v1157
      %v1159 = vpop.f32.mrb[0].mxu0
      %v1160 = vpop.f32.mrb[0].mxu0
      %v1161 = vadd.f32 %v926, %v1160
      %v1162 = vpop.f32.mrb[0].mxu0
      %1163 = vmatprep.mubr.bf16.mxu0 0
      %1164 = vmatmul.mubr.bf16.gmra.mrb[0].mxu0 %v1053
      %v1165 = vpop.f32.mrb[0].mxu0
      %v1166 = vadd.f32 %v926, %v1165
      %v1167 = vpop.f32.mrb[0].mxu0
      %v1168 = vpop.f32.mrb[0].mxu0
      %v1169 = vadd.f32 %v926, %v1168
      %v1170 = vpop.f32.mrb[0].mxu0
      %1171 = vmatprep.mubr.bf16.mxu0 0
      %1172 = vmatmul.mubr.bf16.gmra.mrb[0].mxu0 %v1056
      %v1173 = vpop.f32.mrb[0].mxu0
      %v1174 = vadd.f32 %v926, %v1173
      %v1175 = vpop.f32.mrb[0].mxu0
      %v1176 = vpop.f32.mrb[0].mxu0
      %v1177 = vadd.f32 %v926, %v1176
      %v1178 = vpop.f32.mrb[0].mxu0
      %1179 = vmatprep.mubr.bf16.mxu0 0
      %1180 = vmatmul.mubr.bf16.gmra.mrb[0].mxu0 %v1059
      %v1181 = vpop.f32.mrb[0].mxu0
      %v1182 = vadd.f32 %v926, %v1181
      %v1183 = vpop.f32.mrb[0].mxu0
      %v1184 = vpop.f32.mrb[0].mxu0
      %v1185 = vadd.f32 %v926, %v1184
      %v1186 = vpop.f32.mrb[0].mxu0
      %1187 = vmatprep.mubr.bf16.mxu0 0
      %1188 = vmatmul.mubr.bf16.gmra.mrb[0].mxu0 %v1062
      %v1189 = vpop.f32.mrb[0].mxu0
      %v1190 = vadd.f32 %v926, %v1189
      %v1191 = vpop.f32.mrb[0].mxu0
      %v1192 = vpop.f32.mrb[0].mxu0
      %v1193 = vadd.f32 %v926, %v1192
      %v1194 = vpop.f32.mrb[0].mxu0
      %1195 = vmatprep.mubr.bf16.mxu0 0
      %1196 = vmatmul.mubr.bf16.gmra.mrb[0].mxu0 %v1065
      %v1197 = vpop.f32.mrb[0].mxu0
      %v1198 = vadd.f32 %v926, %v1197
      %v1199 = vpop.f32.mrb[0].mxu0
      %v1200 = vpop.f32.mrb[0].mxu0
      %v1201 = vadd.f32 %v926, %v1200
      %v1202 = vpop.f32.mrb[0].mxu0
      %1203 = vmatprep.mubr.bf16.mxu0 0
      %1204 = vmatmul.mubr.bf16.gmra.mrb[0].mxu0 %v1068
      %v1205 = vpop.f32.mrb[0].mxu0
      %v1206 = vadd.f32 %v926, %v1205
      %v1207 = vpop.f32.mrb[0].mxu0
      %v1208 = vpop.f32.mrb[0].mxu0
      %v1209 = vadd.f32 %v926, %v1208
      %v1210 = vpop.f32.mrb[0].mxu0
      %1211 = vmatprep.mubr.bf16.mxu0 0
      %1212 = vmatmul.mubr.bf16.gmra.mrb[0].mxu0 %v1071
      %v1213 = vpop.f32.mrb[0].mxu0
      %v1214 = vadd.f32 %v926, %v1213
      %v1215 = vpop.f32.mrb[0].mxu0
      %v1216 = vpop.f32.mrb[0].mxu0
      %v1217 = vadd.f32 %v926, %v1216
      %v1218 = vpop.f32.mrb[0].mxu0
      %1219 = vmatprep.mubr.bf16.mxu0 0
      %1220 = vmatmul.mubr.bf16.gmra.mrb[0].mxu0 %v1074
      %v1221 = vpop.f32.mrb[0].mxu0
      %v1222 = vadd.f32 %v926, %v1221
      %v1223 = vpop.f32.mrb[0].mxu0
      %v1224 = vpop.f32.mrb[0].mxu0
      %v1225 = vadd.f32 %v926, %v1224
      %v1226 = vpop.f32.mrb[0].mxu0
      %1227 = vmatprep.mubr.bf16.mxu0 0
      %1228 = vmatmul.mubr.bf16.gmra.mrb[0].mxu0 %v1077
      %v1229 = vpop.f32.mrb[0].mxu0
      %v1230 = vadd.f32 %v926, %v1229
      %v1231 = vpop.f32.mrb[0].mxu0
      %v1232 = vpop.f32.mrb[0].mxu0
      %v1233 = vadd.f32 %v926, %v1232
      %v1234 = vpop.f32.mrb[0].mxu0
      %1235 = vmatprep.mubr.bf16.mxu0 0
      %1236 = vmatmul.mubr.bf16.gmra.mrb[0].mxu0 %v1080
      %v1237 = vpop.f32.mrb[0].mxu0
      %v1238 = vadd.f32 %v926, %v1237
      %v1239 = vpop.f32.mrb[0].mxu0
      %v1240 = vpop.f32.mrb[0].mxu0
      %v1241 = vadd.f32 %v926, %v1240
      %v1242 = vpop.f32.mrb[0].mxu0
      %1243 = vmatprep.mubr.bf16.mxu0 0
      %1244 = vmatmul.mubr.bf16.gmra.mrb[0].mxu0 %v1083
      %v1245 = vpop.f32.mrb[0].mxu0
      %v1246 = vadd.f32 %v926, %v1245
      %v1247 = vpop.f32.mrb[0].mxu0
      %v1248 = vpop.f32.mrb[0].mxu0
      %v1249 = vadd.f32 %v926, %v1248
      %v1250 = vpop.f32.mrb[0].mxu0
      %1251 = vmatprep.mubr.bf16.mxu0 0
      %1252 = vmatmul.mubr.bf16.gmra.mrb[0].mxu0 %v1086
      %v1253 = vpop.f32.mrb[0].mxu0
      %v1254 = vadd.f32 %v926, %v1253
      %v1255 = vpop.f32.mrb[0].mxu0
      %v1256 = vpop.f32.mrb[0].mxu0
      %v1257 = vadd.f32 %v926, %v1256
      %v1258 = vpop.f32.mrb[0].mxu0
      %1259 = vmatprep.mubr.bf16.mxu0 0
      %1260 = vmatmul.mubr.bf16.gmra.mrb[0].mxu0 %v1089
      %v1261 = vpop.f32.mrb[0].mxu0
      %v1262 = vadd.f32 %v926, %v1261
      %v1263 = vpop.f32.mrb[0].mxu0
      %v1264 = vpop.f32.mrb[0].mxu0
      %v1265 = vadd.f32 %v926, %v1264
      %v1266 = vpop.f32.mrb[0].mxu0
      %1267 = vdwg.mxu0
      %v1268 = vmax.f32 %v1126, 0.0
      %v1269 = vmax.f32 %v1129, 0.0
      %v1270 = vmax.f32 %v1134, 0.0
      %v1271 = vmax.f32 %v1137, 0.0
      %v1272 = vmax.f32 %v1142, 0.0
      %v1273 = vmax.f32 %v1145, 0.0
      %v1274 = vmax.f32 %v1150, 0.0
      %v1275 = vmax.f32 %v1153, 0.0
      %v1276 = vmax.f32 %v1158, 0.0
      %v1277 = vmax.f32 %v1161, 0.0
      %v1278 = vmax.f32 %v1166, 0.0
      %v1279 = vmax.f32 %v1169, 0.0
      %v1280 = vmax.f32 %v1174, 0.0
      %v1281 = vmax.f32 %v1177, 0.0
      %v1282 = vmax.f32 %v1182, 0.0
      %v1283 = vmax.f32 %v1185, 0.0
      %v1284 = vmax.f32 %v1190, 0.0
      %v1285 = vmax.f32 %v1193, 0.0
      %v1286 = vmax.f32 %v1198, 0.0
      %v1287 = vmax.f32 %v1201, 0.0
      %v1288 = vmax.f32 %v1206, 0.0
      %v1289 = vmax.f32 %v1209, 0.0
      %v1290 = vmax.f32 %v1214, 0.0
      %v1291 = vmax.f32 %v1217, 0.0
      %v1292 = vmax.f32 %v1222, 0.0
      %v1293 = vmax.f32 %v1225, 0.0
      %v1294 = vmax.f32 %v1230, 0.0
      %v1295 = vmax.f32 %v1233, 0.0
      %v1296 = vmax.f32 %v1238, 0.0
      %v1297 = vmax.f32 %v1241, 0.0
      %v1298 = vmax.f32 %v1246, 0.0
      %v1299 = vmax.f32 %v1249, 0.0
      %v1300 = vmax.f32 %v1254, 0.0
      %v1301 = vmax.f32 %v1257, 0.0
      %v1302 = vmax.f32 %v1262, 0.0
      %v1303 = vmax.f32 %v1265, 0.0
      %v1304 = vsel %vm885, 1, 0
      %v1305 = vsel %vm886, 1, 0
      %v1306 = vsel %vm887, 1, 0
      %v1307 = vsel %vm888, 1, 0
      %v1308 = vsel %vm889, 1, 0
      %v1309 = vsel %vm890, 1, 0
      %v1310 = vsel %vm891, 1, 0
      %v1311 = vsel %vm892, 1, 0
      %v1312 = vsel %vm893, 1, 0
      %v1313 = vsel %vm894, 1, 0
      %v1314 = vsel %vm895, 1, 0
      %v1315 = vsel %vm896, 1, 0
      %v1316 = vsel %vm897, 1, 0
      %v1317 = vsel %vm898, 1, 0
      %v1318 = vsel %vm899, 1, 0
      %v1319 = vsel %vm900, 1, 0
      %v1320 = vsel %vm901, 1, 0
      %v1321 = vsel %vm902, 1, 0
      %v1322 = vsel %vm903, 1, 0
      %v1323 = vsel %vm904, 1, 0
      %v1324 = vsel %vm905, 1, 0
      %v1325 = vsel %vm906, 1, 0
      %v1326 = vsel %vm907, 1, 0
      %v1327 = vsel %vm908, 1, 0
      %v1328 = vsel %vm909, 1, 0
      %v1329 = vsel %vm910, 1, 0
      %v1330 = vsel %vm911, 1, 0
      %v1331 = vsel %vm912, 1, 0
      %v1332 = vsel %vm913, 1, 0
      %v1333 = vsel %vm914, 1, 0
      %v1334 = vsel %vm915, 1, 0
      %v1335 = vsel %vm916, 1, 0
      %v1336 = vsel %vm917, 1, 0
      %v1337 = vsel %vm918, 1, 0
      %v1338 = vsel %vm919, 1, 0
      %v1339 = vsel %vm920, 1, 0
      %vm1340 = vcmp.eq.s32.totalorder %v1304, 1
      %vm1341 = vcmp.eq.s32.totalorder %v1305, 1
      %vm1342 = vcmp.eq.s32.totalorder %v1306, 1
      %vm1343 = vcmp.eq.s32.totalorder %v1307, 1
      %vm1344 = vcmp.eq.s32.totalorder %v1308, 1
      %vm1345 = vcmp.eq.s32.totalorder %v1309, 1
      %vm1346 = vcmp.eq.s32.totalorder %v1310, 1
      %vm1347 = vcmp.eq.s32.totalorder %v1311, 1
      %vm1348 = vcmp.eq.s32.totalorder %v1312, 1
      %vm1349 = vcmp.eq.s32.totalorder %v1313, 1
      %vm1350 = vcmp.eq.s32.totalorder %v1314, 1
      %vm1351 = vcmp.eq.s32.totalorder %v1315, 1
      %vm1352 = vcmp.eq.s32.totalorder %v1316, 1
      %vm1353 = vcmp.eq.s32.totalorder %v1317, 1
      %vm1354 = vcmp.eq.s32.totalorder %v1318, 1
      %vm1355 = vcmp.eq.s32.totalorder %v1319, 1
      %vm1356 = vcmp.eq.s32.totalorder %v1320, 1
      %vm1357 = vcmp.eq.s32.totalorder %v1321, 1
      %vm1358 = vcmp.eq.s32.totalorder %v1322, 1
      %vm1359 = vcmp.eq.s32.totalorder %v1323, 1
      %vm1360 = vcmp.eq.s32.totalorder %v1324, 1
      %vm1361 = vcmp.eq.s32.totalorder %v1325, 1
      %vm1362 = vcmp.eq.s32.totalorder %v1326, 1
      %vm1363 = vcmp.eq.s32.totalorder %v1327, 1
      %vm1364 = vcmp.eq.s32.totalorder %v1328, 1
      %vm1365 = vcmp.eq.s32.totalorder %v1329, 1
      %vm1366 = vcmp.eq.s32.totalorder %v1330, 1
      %vm1367 = vcmp.eq.s32.totalorder %v1331, 1
      %vm1368 = vcmp.eq.s32.totalorder %v1332, 1
      %vm1369 = vcmp.eq.s32.totalorder %v1333, 1
      %vm1370 = vcmp.eq.s32.totalorder %v1334, 1
      %vm1371 = vcmp.eq.s32.totalorder %v1335, 1
      %vm1372 = vcmp.eq.s32.totalorder %v1336, 1
      %vm1373 = vcmp.eq.s32.totalorder %v1337, 1
      %vm1374 = vcmp.eq.s32.totalorder %v1338, 1
      %vm1375 = vcmp.eq.s32.totalorder %v1339, 1
      %v1376 = vsel %vm1340, %v1268, 0.0
      %v1377 = vsel %vm1341, %v1269, 0.0
      %v1378 = vsel %vm1342, %v1270, 0.0
      %v1379 = vsel %vm1343, %v1271, 0.0
      %v1380 = vsel %vm1344, %v1272, 0.0
      %v1381 = vsel %vm1345, %v1273, 0.0
      %v1382 = vsel %vm1346, %v1274, 0.0
      %v1383 = vsel %vm1347, %v1275, 0.0
      %v1384 = vsel %vm1348, %v1276, 0.0
      %v1385 = vsel %vm1349, %v1277, 0.0
      %v1386 = vsel %vm1350, %v1278, 0.0
      %v1387 = vsel %vm1351, %v1279, 0.0
      %v1388 = vsel %vm1352, %v1280, 0.0
      %v1389 = vsel %vm1353, %v1281, 0.0
      %v1390 = vsel %vm1354, %v1282, 0.0
      %v1391 = vsel %vm1355, %v1283, 0.0
      %v1392 = vsel %vm1356, %v1284, 0.0
      %v1393 = vsel %vm1357, %v1285, 0.0
      %v1394 = vsel %vm1358, %v1286, 0.0
      %v1395 = vsel %vm1359, %v1287, 0.0
      %v1396 = vsel %vm1360, %v1288, 0.0
      %v1397 = vsel %vm1361, %v1289, 0.0
      %v1398 = vsel %vm1362, %v1290, 0.0
      %v1399 = vsel %vm1363, %v1291, 0.0
      %v1400 = vsel %vm1364, %v1292, 0.0
      %v1401 = vsel %vm1365, %v1293, 0.0
      %v1402 = vsel %vm1366, %v1294, 0.0
      %v1403 = vsel %vm1367, %v1295, 0.0
      %v1404 = vsel %vm1368, %v1296, 0.0
      %v1405 = vsel %vm1369, %v1297, 0.0
      %v1406 = vsel %vm1370, %v1298, 0.0
      %v1407 = vsel %vm1371, %v1299, 0.0
      %v1408 = vsel %vm1372, %v1300, 0.0
      %v1409 = vsel %vm1373, %v1301, 0.0
      %v1410 = vsel %vm1374, %v1302, 0.0
      %v1411 = vsel %vm1375, %v1303, 0.0
      %v1412 = vpack.c.bf16 %v1377, %v1376
      %v1413 = vpack.c.bf16 %v1379, %v1378
      %v1414 = vpack.c.bf16 %v1381, %v1380
      %v1415 = vpack.c.bf16 %v1383, %v1382
      %v1416 = vpack.c.bf16 %v1385, %v1384
      %v1417 = vpack.c.bf16 %v1387, %v1386
      %v1418 = vpack.c.bf16 %v1389, %v1388
      %v1419 = vpack.c.bf16 %v1391, %v1390
      %v1420 = vpack.c.bf16 %v1393, %v1392
      %v1421 = vpack.c.bf16 %v1395, %v1394
      %v1422 = vpack.c.bf16 %v1397, %v1396
      %v1423 = vpack.c.bf16 %v1399, %v1398
      %v1424 = vpack.c.bf16 %v1401, %v1400
      %v1425 = vpack.c.bf16 %v1403, %v1402
      %v1426 = vpack.c.bf16 %v1405, %v1404
      %v1427 = vpack.c.bf16 %v1407, %v1406
      %v1428 = vpack.c.bf16 %v1409, %v1408
      %v1429 = vpack.c.bf16 %v1411, %v1410
      %1430 = vst [vmem:[#allocation2 + $0x10] sm:$0xff] %v1412
      %1431 = vst [vmem:[#allocation2 + $0x18] sm:$0xff] %v1413
      %1432 = vst [vmem:[#allocation2 + $0x20] sm:$0xff] %v1414
      %1433 = vst [vmem:[#allocation2 + $0x28] sm:$0xff] %v1415
      %1434 = vst [vmem:[#allocation2 + $0x30] sm:$0xff] %v1416
      %1435 = vst [vmem:[#allocation2 + $0x38] sm:$0xff] %v1417
      %1436 = vst [vmem:[#allocation2 + $0x40] sm:$0xff] %v1418
      %1437 = vst [vmem:[#allocation2 + $0x48] sm:$0xff] %v1419
      %1438 = vst [vmem:[#allocation2 + $0x50] sm:$0xff] %v1420
      %1439 = vst [vmem:[#allocation2 + $0x58] sm:$0xff] %v1421
      %1440 = vst [vmem:[#allocation2 + $0x60] sm:$0xff] %v1422
      %1441 = vst [vmem:[#allocation2 + $0x68] sm:$0xff] %v1423
      %1442 = vst [vmem:[#allocation2 + $0x70] sm:$0xff] %v1424
      %1443 = vst [vmem:[#allocation2 + $0x78] sm:$0xff] %v1425
      %1444 = vst [vmem:[#allocation2 + $0x80] sm:$0xff] %v1426
      %1445 = vst [vmem:[#allocation2 + $0x88] sm:$0xff] %v1427
      %1446 = vst [vmem:[#allocation2 + $0x90] sm:$0xff] %v1428
      %1447 = vst [vmem:[#allocation2 + $0x98] sm:$0xff] %v1429
      %v1448 = vld [vmem:[#allocation2] sm:$0xff]
      %v1449 = vld [vmem:[#allocation2 + $0x8] sm:$0xff]
      %v1450 = vld [vmem:[#allocation2 + $0x10] sm:$0xff]
      %v1451 = vld [vmem:[#allocation2 + $0x18] sm:$0xff]
      %v1452 = vld [vmem:[#allocation2 + $0x20] sm:$0xff]
      %v1453 = vld [vmem:[#allocation2 + $0x28] sm:$0xff]
      %v1454 = vld [vmem:[#allocation2 + $0x30] sm:$0xff]
      %v1455 = vld [vmem:[#allocation2 + $0x38] sm:$0xff]
      %v1456 = vld [vmem:[#allocation2 + $0x40] sm:$0xff]
      %v1457 = vld [vmem:[#allocation2 + $0x48] sm:$0xff]
      %v1458 = vld [vmem:[#allocation2 + $0x50] sm:$0xff]
      %v1459 = vld [vmem:[#allocation2 + $0x58] sm:$0xff]
      %v1460 = vld [vmem:[#allocation2 + $0x60] sm:$0xff]
      %v1461 = vld [vmem:[#allocation2 + $0x68] sm:$0xff]
      %v1462 = vld [vmem:[#allocation2 + $0x70] sm:$0xff]
      %v1463 = vld [vmem:[#allocation2 + $0x78] sm:$0xff]
      %v1464 = vld [vmem:[#allocation2 + $0x80] sm:$0xff]
      %v1465 = vld [vmem:[#allocation2 + $0x88] sm:$0xff]
      %v1466 = vld [vmem:[#allocation2 + $0x90] sm:$0xff]
      %v1467 = vld [vmem:[%s3] sm:$0xf]
      %v1468 = vld [vmem:[%s3 + $0x4] sm:$0xf]
      %v1469 = vld [vmem:[%s3 + $0x8] sm:$0xf]
      %v1470 = vld [vmem:[%s3 + $0xc] sm:$0xf]
      %v1471 = vld [vmem:[%s3 + $0x10] sm:$0xf]
      %v1472 = vld [vmem:[%s3 + $0x14] sm:$0xf]
      %v1473 = vld [vmem:[%s3 + $0x18] sm:$0xf]
      %v1474 = vld [vmem:[%s3 + $0x1c] sm:$0xf]
      %v1475 = vld [vmem:[%s3 + $0x20] sm:$0xf]
      %v1476 = vld [vmem:[%s3 + $0x24] sm:$0xf]
      %v1477 = vld [vmem:[%s3 + $0x28] sm:$0xf]
      %v1478 = vld [vmem:[%s3 + $0x2c] sm:$0xf]
      %v1479 = vld [vmem:[%s3 + $0x30] sm:$0xf]
      %v1480 = vld [vmem:[%s3 + $0x34] sm:$0xf]
      %v1481 = vld [vmem:[%s3 + $0x38] sm:$0xf]
      %v1482 = vld [vmem:[%s3 + $0x3c] sm:$0xf]
      %s1483 = scalar_lea.vmem %s3, 64
      %v1484 = vld [vmem:[%s1483] sm:$0xf]
      %v1485 = vld [vmem:[%s1483 + $0x4] sm:$0xf]
      %v1486 = vld [vmem:[%s1483 + $0x8] sm:$0xf]
      %v1487 = vld [vmem:[%s1483 + $0xc] sm:$0xf]
      %v1488 = vld [vmem:[%s1483 + $0x10] sm:$0xf]
      %v1489 = vld [vmem:[%s1483 + $0x14] sm:$0xf]
      %v1490 = vld [vmem:[%s1483 + $0x18] sm:$0xf]
      %v1491 = vld [vmem:[%s1483 + $0x1c] sm:$0xf]
      %v1492 = vld [vmem:[%s1483 + $0x20] sm:$0xf]
      %v1493 = vld [vmem:[%s1483 + $0x24] sm:$0xf]
      %v1494 = vld [vmem:[%s1483 + $0x28] sm:$0xf]
      %v1495 = vld [vmem:[%s1483 + $0x2c] sm:$0xf]
      %v1496 = vld [vmem:[%s1483 + $0x30] sm:$0xf]
      %v1497 = vld [vmem:[%s1483 + $0x34] sm:$0xf]
      %v1498 = vld [vmem:[%s1483 + $0x38] sm:$0xf]
      %v1499 = vld [vmem:[%s1483 + $0x3c] sm:$0xf]
      %vm1519 = vcmask 1040384
      %v1520 = vrot.slane %v1448, 7
      %v1521 = vrot.slane %v1449, 7
      %v1522 = vsel %vm1519, %v1520, %v1521
      %v1523 = vrot.slane %v1450, 7
      %v1524 = vsel %vm1519, %v1521, %v1523
      %v1525 = vrot.slane %v1451, 7
      %v1526 = vsel %vm1519, %v1523, %v1525
      %v1527 = vrot.slane %v1452, 7
      %v1528 = vsel %vm1519, %v1525, %v1527
      %v1529 = vrot.slane %v1453, 7
      %v1530 = vsel %vm1519, %v1527, %v1529
      %v1531 = vrot.slane %v1454, 7
      %v1532 = vsel %vm1519, %v1529, %v1531
      %v1533 = vrot.slane %v1455, 7
      %v1534 = vsel %vm1519, %v1531, %v1533
      %v1535 = vrot.slane %v1456, 7
      %v1536 = vsel %vm1519, %v1533, %v1535
      %v1537 = vrot.slane %v1457, 7
      %v1538 = vsel %vm1519, %v1535, %v1537
      %v1539 = vrot.slane %v1458, 7
      %v1540 = vsel %vm1519, %v1537, %v1539
      %v1541 = vrot.slane %v1459, 7
      %v1542 = vsel %vm1519, %v1539, %v1541
      %v1543 = vrot.slane %v1460, 7
      %v1544 = vsel %vm1519, %v1541, %v1543
      %v1545 = vrot.slane %v1461, 7
      %v1546 = vsel %vm1519, %v1543, %v1545
      %v1547 = vrot.slane %v1462, 7
      %v1548 = vsel %vm1519, %v1545, %v1547
      %v1549 = vrot.slane %v1463, 7
      %v1550 = vsel %vm1519, %v1547, %v1549
      %v1551 = vrot.slane %v1464, 7
      %v1552 = vsel %vm1519, %v1549, %v1551
      %v1553 = vrot.slane %v1465, 7
      %v1554 = vsel %vm1519, %v1551, %v1553
      %v1555 = vrot.slane %v1466, 7
      %v1556 = vsel %vm1519, %v1553, %v1555
      %v1591 = vunpack.c.l.b16 %v1484
      %v1592 = vunpack.c.l.b16 %v1485
      %v1593 = vunpack.c.l.b16 %v1486
      %v1594 = vunpack.c.l.b16 %v1487
      %v1595 = vunpack.c.l.b16 %v1488
      %v1596 = vunpack.c.l.b16 %v1489
      %v1597 = vunpack.c.l.b16 %v1490
      %v1598 = vunpack.c.l.b16 %v1491
      %v1599 = vunpack.c.l.b16 %v1492
      %v1600 = vunpack.c.l.b16 %v1493
      %v1601 = vunpack.c.l.b16 %v1494
      %v1602 = vunpack.c.l.b16 %v1495
      %v1603 = vunpack.c.l.b16 %v1496
      %v1604 = vunpack.c.l.b16 %v1497
      %v1605 = vunpack.c.l.b16 %v1498
      %v1606 = vunpack.c.l.b16 %v1499
      %v1607 = vpack.c.b16 %v1592, %v1591
      %v1608 = vpack.c.b16 %v1594, %v1593
      %v1609 = vpack.c.b16 %v1596, %v1595
      %v1610 = vpack.c.b16 %v1598, %v1597
      %v1611 = vpack.c.b16 %v1600, %v1599
      %v1612 = vpack.c.b16 %v1602, %v1601
      %v1613 = vpack.c.b16 %v1604, %v1603
      %v1614 = vpack.c.b16 %v1606, %v1605
      %1623 = vmatprep.subr.bf16.mxu0 0
      %1624 = vmatpush1.bf16.msra.mxu0 %v1607
      %1625 = vmatprep.subr.bf16.mxu0 0
      %1626 = vmatpush1.bf16.msra.mxu0 %v1608
      %1627 = vmatprep.subr.bf16.mxu0 0
      %1628 = vmatpush1.bf16.msra.mxu0 %v1609
      %1629 = vmatprep.subr.bf16.mxu0 0
      %1630 = vmatpush1.bf16.msra.mxu0 %v1610
      %1631 = vmatprep.subr.bf16.mxu0 0
      %1632 = vmatpush1.bf16.msra.mxu0 %v1611
      %1633 = vmatprep.subr.bf16.mxu0 0
      %1634 = vmatpush1.bf16.msra.mxu0 %v1612
      %1635 = vmatprep.subr.bf16.mxu0 0
      %1636 = vmatpush1.bf16.msra.mxu0 %v1613
      %1637 = vmatprep.subr.bf16.mxu0 0
      %1638 = vmatpush1.bf16.msra.mxu0 %v1614
      %1639 = vmatprep.subr.bf16.mxu0 0
      %1640 = vmatpush1.bf16.msra.mxu0 0
      %1641 = vmatprep.subr.bf16.mxu0 0
      %1642 = vmatpush1.bf16.msra.mxu0 0
      %1643 = vmatprep.subr.bf16.mxu0 0
      %1644 = vmatpush1.bf16.msra.mxu0 0
      %1645 = vmatprep.subr.bf16.mxu0 0
      %1646 = vmatpush1.bf16.msra.mxu0 0
      %1647 = vmatprep.subr.bf16.mxu0 0
      %1648 = vmatpush1.bf16.msra.mxu0 0
      %1649 = vmatprep.subr.bf16.mxu0 0
      %1650 = vmatpush1.bf16.msra.mxu0 0
      %1651 = vmatprep.subr.bf16.mxu0 0
      %1652 = vmatpush1.bf16.msra.mxu0 0
      %1653 = vmatprep.subr.bf16.mxu0 0
      %1654 = vmatpush1.bf16.msra.mxu0 0
      %1655 = vmatprep.mubr.bf16.mxu0 0
      %1656 = vmatmul.mubr.bf16.gmra.mrb[0].mxu0 %v1522
      %v1657 = vpop.f32.mrb[0].mxu0
      %v1658 = vadd.f32 0.0, %v1657
      %v1659 = vpop.f32.mrb[0].mxu0
      %v1660 = vpop.f32.mrb[0].mxu0
      %v1661 = vadd.f32 0.0, %v1660
      %v1662 = vpop.f32.mrb[0].mxu0
      %1663 = vmatprep.mubr.bf16.mxu0 0
      %1664 = vmatmul.mubr.bf16.gmra.mrb[0].mxu0 %v1524
      %v1665 = vpop.f32.mrb[0].mxu0
      %v1666 = vadd.f32 0.0, %v1665
      %v1667 = vpop.f32.mrb[0].mxu0
      %v1668 = vpop.f32.mrb[0].mxu0
      %v1669 = vadd.f32 0.0, %v1668
      %v1670 = vpop.f32.mrb[0].mxu0
      %1671 = vmatprep.mubr.bf16.mxu0 0
      %1672 = vmatmul.mubr.bf16.gmra.mrb[0].mxu0 %v1526
      %v1673 = vpop.f32.mrb[0].mxu0
      %v1674 = vadd.f32 0.0, %v1673
      %v1675 = vpop.f32.mrb[0].mxu0
      %v1676 = vpop.f32.mrb[0].mxu0
      %v1677 = vadd.f32 0.0, %v1676
      %v1678 = vpop.f32.mrb[0].mxu0
      %1679 = vmatprep.mubr.bf16.mxu0 0
      %1680 = vmatmul.mubr.bf16.gmra.mrb[0].mxu0 %v1528
      %v1681 = vpop.f32.mrb[0].mxu0
      %v1682 = vadd.f32 0.0, %v1681
      %v1683 = vpop.f32.mrb[0].mxu0
      %v1684 = vpop.f32.mrb[0].mxu0
      %v1685 = vadd.f32 0.0, %v1684
      %v1686 = vpop.f32.mrb[0].mxu0
      %1687 = vmatprep.mubr.bf16.mxu0 0
      %1688 = vmatmul.mubr.bf16.gmra.mrb[0].mxu0 %v1530
      %v1689 = vpop.f32.mrb[0].mxu0
      %v1690 = vadd.f32 0.0, %v1689
      %v1691 = vpop.f32.mrb[0].mxu0
      %v1692 = vpop.f32.mrb[0].mxu0
      %v1693 = vadd.f32 0.0, %v1692
      %v1694 = vpop.f32.mrb[0].mxu0
      %1695 = vmatprep.mubr.bf16.mxu0 0
      %1696 = vmatmul.mubr.bf16.gmra.mrb[0].mxu0 %v1532
      %v1697 = vpop.f32.mrb[0].mxu0
      %v1698 = vadd.f32 0.0, %v1697
      %v1699 = vpop.f32.mrb[0].mxu0
      %v1700 = vpop.f32.mrb[0].mxu0
      %v1701 = vadd.f32 0.0, %v1700
      %v1702 = vpop.f32.mrb[0].mxu0
      %1703 = vmatprep.mubr.bf16.mxu0 0
      %1704 = vmatmul.mubr.bf16.gmra.mrb[0].mxu0 %v1534
      %v1705 = vpop.f32.mrb[0].mxu0
      %v1706 = vadd.f32 0.0, %v1705
      %v1707 = vpop.f32.mrb[0].mxu0
      %v1708 = vpop.f32.mrb[0].mxu0
      %v1709 = vadd.f32 0.0, %v1708
      %v1710 = vpop.f32.mrb[0].mxu0
      %1711 = vmatprep.mubr.bf16.mxu0 0
      %1712 = vmatmul.mubr.bf16.gmra.mrb[0].mxu0 %v1536
      %v1713 = vpop.f32.mrb[0].mxu0
      %v1714 = vadd.f32 0.0, %v1713
      %v1715 = vpop.f32.mrb[0].mxu0
      %v1716 = vpop.f32.mrb[0].mxu0
      %v1717 = vadd.f32 0.0, %v1716
      %v1718 = vpop.f32.mrb[0].mxu0
      %1719 = vmatprep.mubr.bf16.mxu0 0
      %1720 = vmatmul.mubr.bf16.gmra.mrb[0].mxu0 %v1538
      %v1721 = vpop.f32.mrb[0].mxu0
      %v1722 = vadd.f32 0.0, %v1721
      %v1723 = vpop.f32.mrb[0].mxu0
      %v1724 = vpop.f32.mrb[0].mxu0
      %v1725 = vadd.f32 0.0, %v1724
      %v1726 = vpop.f32.mrb[0].mxu0
      %1727 = vmatprep.mubr.bf16.mxu0 0
      %1728 = vmatmul.mubr.bf16.gmra.mrb[0].mxu0 %v1540
      %v1729 = vpop.f32.mrb[0].mxu0
      %v1730 = vadd.f32 0.0, %v1729
      %v1731 = vpop.f32.mrb[0].mxu0
      %v1732 = vpop.f32.mrb[0].mxu0
      %v1733 = vadd.f32 0.0, %v1732
      %v1734 = vpop.f32.mrb[0].mxu0
      %1735 = vmatprep.mubr.bf16.mxu0 0
      %1736 = vmatmul.mubr.bf16.gmra.mrb[0].mxu0 %v1542
      %v1737 = vpop.f32.mrb[0].mxu0
      %v1738 = vadd.f32 0.0, %v1737
      %v1739 = vpop.f32.mrb[0].mxu0
      %v1740 = vpop.f32.mrb[0].mxu0
      %v1741 = vadd.f32 0.0, %v1740
      %v1742 = vpop.f32.mrb[0].mxu0
      %1743 = vmatprep.mubr.bf16.mxu0 0
      %1744 = vmatmul.mubr.bf16.gmra.mrb[0].mxu0 %v1544
      %v1745 = vpop.f32.mrb[0].mxu0
      %v1746 = vadd.f32 0.0, %v1745
      %v1747 = vpop.f32.mrb[0].mxu0
      %v1748 = vpop.f32.mrb[0].mxu0
      %v1749 = vadd.f32 0.0, %v1748
      %v1750 = vpop.f32.mrb[0].mxu0
      %1751 = vmatprep.mubr.bf16.mxu0 0
      %1752 = vmatmul.mubr.bf16.gmra.mrb[0].mxu0 %v1546
      %v1753 = vpop.f32.mrb[0].mxu0
      %v1754 = vadd.f32 0.0, %v1753
      %v1755 = vpop.f32.mrb[0].mxu0
      %v1756 = vpop.f32.mrb[0].mxu0
      %v1757 = vadd.f32 0.0, %v1756
      %v1758 = vpop.f32.mrb[0].mxu0
      %1759 = vmatprep.mubr.bf16.mxu0 0
      %1760 = vmatmul.mubr.bf16.gmra.mrb[0].mxu0 %v1548
      %v1761 = vpop.f32.mrb[0].mxu0
      %v1762 = vadd.f32 0.0, %v1761
      %v1763 = vpop.f32.mrb[0].mxu0
      %v1764 = vpop.f32.mrb[0].mxu0
      %v1765 = vadd.f32 0.0, %v1764
      %v1766 = vpop.f32.mrb[0].mxu0
      %1767 = vmatprep.mubr.bf16.mxu0 0
      %1768 = vmatmul.mubr.bf16.gmra.mrb[0].mxu0 %v1550
      %v1769 = vpop.f32.mrb[0].mxu0
      %v1770 = vadd.f32 0.0, %v1769
      %v1771 = vpop.f32.mrb[0].mxu0
      %v1772 = vpop.f32.mrb[0].mxu0
      %v1773 = vadd.f32 0.0, %v1772
      %v1774 = vpop.f32.mrb[0].mxu0
      %1775 = vmatprep.mubr.bf16.mxu0 0
      %1776 = vmatmul.mubr.bf16.gmra.mrb[0].mxu0 %v1552
      %v1777 = vpop.f32.mrb[0].mxu0
      %v1778 = vadd.f32 0.0, %v1777
      %v1779 = vpop.f32.mrb[0].mxu0
      %v1780 = vpop.f32.mrb[0].mxu0
      %v1781 = vadd.f32 0.0, %v1780
      %v1782 = vpop.f32.mrb[0].mxu0
      %1783 = vmatprep.mubr.bf16.mxu0 0
      %1784 = vmatmul.mubr.bf16.gmra.mrb[0].mxu0 %v1554
      %v1785 = vpop.f32.mrb[0].mxu0
      %v1786 = vadd.f32 0.0, %v1785
      %v1787 = vpop.f32.mrb[0].mxu0
      %v1788 = vpop.f32.mrb[0].mxu0
      %v1789 = vadd.f32 0.0, %v1788
      %v1790 = vpop.f32.mrb[0].mxu0
      %1791 = vmatprep.mubr.bf16.mxu0 0
      %1792 = vmatmul.mubr.bf16.gmra.mrb[0].mxu0 %v1556
      %v1793 = vpop.f32.mrb[0].mxu0
      %v1794 = vadd.f32 0.0, %v1793
      %v1795 = vpop.f32.mrb[0].mxu0
      %v1796 = vpop.f32.mrb[0].mxu0
      %v1797 = vadd.f32 0.0, %v1796
      %v1798 = vpop.f32.mrb[0].mxu0
      %1799 = vdwg.mxu0
      %vm1800 = vsmask.f32 1280
      %v1802 = vshrl.u32 %v1448, 16
      %v1804 = vrot.slane %v1802, 6
      %v1805 = vshll.u32 %v1448, 16
      %v1807 = vrot.slane %v1805, 7
      %v1808 = vor.u32 %v1804, %v1807
      %v1810 = vshrl.u32 %v1449, 16
      %v1812 = vrot.slane %v1810, 6
      %v1813 = vshll.u32 %v1449, 16
      %v1815 = vrot.slane %v1813, 7
      %v1816 = vor.u32 %v1812, %v1815
      %v1817 = vsel %vm1800, %v1808, %v1816
      %v1819 = vshrl.u32 %v1450, 16
      %v1821 = vrot.slane %v1819, 6
      %v1822 = vshll.u32 %v1450, 16
      %v1824 = vrot.slane %v1822, 7
      %v1825 = vor.u32 %v1821, %v1824
      %v1826 = vsel %vm1800, %v1816, %v1825
      %v1828 = vshrl.u32 %v1451, 16
      %v1830 = vrot.slane %v1828, 6
      %v1831 = vshll.u32 %v1451, 16
      %v1833 = vrot.slane %v1831, 7
      %v1834 = vor.u32 %v1830, %v1833
      %v1835 = vsel %vm1800, %v1825, %v1834
      %v1837 = vshrl.u32 %v1452, 16
      %v1839 = vrot.slane %v1837, 6
      %v1840 = vshll.u32 %v1452, 16
      %v1842 = vrot.slane %v1840, 7
      %v1843 = vor.u32 %v1839, %v1842
      %v1844 = vsel %vm1800, %v1834, %v1843
      %v1846 = vshrl.u32 %v1453, 16
      %v1848 = vrot.slane %v1846, 6
      %v1849 = vshll.u32 %v1453, 16
      %v1851 = vrot.slane %v1849, 7
      %v1852 = vor.u32 %v1848, %v1851
      %v1853 = vsel %vm1800, %v1843, %v1852
      %v1855 = vshrl.u32 %v1454, 16
      %v1857 = vrot.slane %v1855, 6
      %v1858 = vshll.u32 %v1454, 16
      %v1860 = vrot.slane %v1858, 7
      %v1861 = vor.u32 %v1857, %v1860
      %v1862 = vsel %vm1800, %v1852, %v1861
      %v1864 = vshrl.u32 %v1455, 16
      %v1866 = vrot.slane %v1864, 6
      %v1867 = vshll.u32 %v1455, 16
      %v1869 = vrot.slane %v1867, 7
      %v1870 = vor.u32 %v1866, %v1869
      %v1871 = vsel %vm1800, %v1861, %v1870
      %v1873 = vshrl.u32 %v1456, 16
      %v1875 = vrot.slane %v1873, 6
      %v1876 = vshll.u32 %v1456, 16
      %v1878 = vrot.slane %v1876, 7
      %v1879 = vor.u32 %v1875, %v1878
      %v1880 = vsel %vm1800, %v1870, %v1879
      %v1882 = vshrl.u32 %v1457, 16
      %v1884 = vrot.slane %v1882, 6
      %v1885 = vshll.u32 %v1457, 16
      %v1887 = vrot.slane %v1885, 7
      %v1888 = vor.u32 %v1884, %v1887
      %v1889 = vsel %vm1800, %v1879, %v1888
      %v1891 = vshrl.u32 %v1458, 16
      %v1893 = vrot.slane %v1891, 6
      %v1894 = vshll.u32 %v1458, 16
      %v1896 = vrot.slane %v1894, 7
      %v1897 = vor.u32 %v1893, %v1896
      %v1898 = vsel %vm1800, %v1888, %v1897
      %v1900 = vshrl.u32 %v1459, 16
      %v1902 = vrot.slane %v1900, 6
      %v1903 = vshll.u32 %v1459, 16
      %v1905 = vrot.slane %v1903, 7
      %v1906 = vor.u32 %v1902, %v1905
      %v1907 = vsel %vm1800, %v1897, %v1906
      %v1909 = vshrl.u32 %v1460, 16
      %v1911 = vrot.slane %v1909, 6
      %v1912 = vshll.u32 %v1460, 16
      %v1914 = vrot.slane %v1912, 7
      %v1915 = vor.u32 %v1911, %v1914
      %v1916 = vsel %vm1800, %v1906, %v1915
      %v1918 = vshrl.u32 %v1461, 16
      %v1920 = vrot.slane %v1918, 6
      %v1921 = vshll.u32 %v1461, 16
      %v1923 = vrot.slane %v1921, 7
      %v1924 = vor.u32 %v1920, %v1923
      %v1925 = vsel %vm1800, %v1915, %v1924
      %v1927 = vshrl.u32 %v1462, 16
      %v1929 = vrot.slane %v1927, 6
      %v1930 = vshll.u32 %v1462, 16
      %v1932 = vrot.slane %v1930, 7
      %v1933 = vor.u32 %v1929, %v1932
      %v1934 = vsel %vm1800, %v1924, %v1933
      %v1936 = vshrl.u32 %v1463, 16
      %v1938 = vrot.slane %v1936, 6
      %v1939 = vshll.u32 %v1463, 16
      %v1941 = vrot.slane %v1939, 7
      %v1942 = vor.u32 %v1938, %v1941
      %v1943 = vsel %vm1800, %v1933, %v1942
      %v1945 = vshrl.u32 %v1464, 16
      %v1947 = vrot.slane %v1945, 6
      %v1948 = vshll.u32 %v1464, 16
      %v1950 = vrot.slane %v1948, 7
      %v1951 = vor.u32 %v1947, %v1950
      %v1952 = vsel %vm1800, %v1942, %v1951
      %v1954 = vshrl.u32 %v1465, 16
      %v1956 = vrot.slane %v1954, 6
      %v1957 = vshll.u32 %v1465, 16
      %v1959 = vrot.slane %v1957, 7
      %v1960 = vor.u32 %v1956, %v1959
      %v1961 = vsel %vm1800, %v1951, %v1960
      %v1963 = vshrl.u32 %v1466, 16
      %v1965 = vrot.slane %v1963, 6
      %v1966 = vshll.u32 %v1466, 16
      %v1968 = vrot.slane %v1966, 7
      %v1969 = vor.u32 %v1965, %v1968
      %v1970 = vsel %vm1800, %v1960, %v1969
      %v2005 = vunpack.c.l.b16 %v1467
      %v2006 = vunpack.c.l.b16 %v1468
      %v2007 = vunpack.c.l.b16 %v1469
      %v2008 = vunpack.c.l.b16 %v1470
      %v2009 = vunpack.c.l.b16 %v1471
      %v2010 = vunpack.c.l.b16 %v1472
      %v2011 = vunpack.c.l.b16 %v1473
      %v2012 = vunpack.c.l.b16 %v1474
      %v2013 = vunpack.c.l.b16 %v1475
      %v2014 = vunpack.c.l.b16 %v1476
      %v2015 = vunpack.c.l.b16 %v1477
      %v2016 = vunpack.c.l.b16 %v1478
      %v2017 = vunpack.c.l.b16 %v1479
      %v2018 = vunpack.c.l.b16 %v1480
      %v2019 = vunpack.c.l.b16 %v1481
      %v2020 = vunpack.c.l.b16 %v1482
      %v2021 = vpack.c.b16 %v2006, %v2005
      %v2022 = vpack.c.b16 %v2008, %v2007
      %v2023 = vpack.c.b16 %v2010, %v2009
      %v2024 = vpack.c.b16 %v2012, %v2011
      %v2025 = vpack.c.b16 %v2014, %v2013
      %v2026 = vpack.c.b16 %v2016, %v2015
      %v2027 = vpack.c.b16 %v2018, %v2017
      %v2028 = vpack.c.b16 %v2020, %v2019
      %2037 = vmatprep.subr.bf16.mxu0 0
      %2038 = vmatpush1.bf16.msra.mxu0 %v2021
      %2039 = vmatprep.subr.bf16.mxu0 0
      %2040 = vmatpush1.bf16.msra.mxu0 %v2022
      %2041 = vmatprep.subr.bf16.mxu0 0
      %2042 = vmatpush1.bf16.msra.mxu0 %v2023
      %2043 = vmatprep.subr.bf16.mxu0 0
      %2044 = vmatpush1.bf16.msra.mxu0 %v2024
      %2045 = vmatprep.subr.bf16.mxu0 0
      %2046 = vmatpush1.bf16.msra.mxu0 %v2025
      %2047 = vmatprep.subr.bf16.mxu0 0
      %2048 = vmatpush1.bf16.msra.mxu0 %v2026
      %2049 = vmatprep.subr.bf16.mxu0 0
      %2050 = vmatpush1.bf16.msra.mxu0 %v2027
      %2051 = vmatprep.subr.bf16.mxu0 0
      %2052 = vmatpush1.bf16.msra.mxu0 %v2028
      %2053 = vmatprep.subr.bf16.mxu0 0
      %2054 = vmatpush1.bf16.msra.mxu0 0
      %2055 = vmatprep.subr.bf16.mxu0 0
      %2056 = vmatpush1.bf16.msra.mxu0 0
      %2057 = vmatprep.subr.bf16.mxu0 0
      %2058 = vmatpush1.bf16.msra.mxu0 0
      %2059 = vmatprep.subr.bf16.mxu0 0
      %2060 = vmatpush1.bf16.msra.mxu0 0
      %2061 = vmatprep.subr.bf16.mxu0 0
      %2062 = vmatpush1.bf16.msra.mxu0 0
      %2063 = vmatprep.subr.bf16.mxu0 0
      %2064 = vmatpush1.bf16.msra.mxu0 0
      %2065 = vmatprep.subr.bf16.mxu0 0
      %2066 = vmatpush1.bf16.msra.mxu0 0
      %2067 = vmatprep.subr.bf16.mxu0 0
      %2068 = vmatpush1.bf16.msra.mxu0 0
      %2069 = vmatprep.mubr.bf16.mxu0 0
      %2070 = vmatmul.mubr.bf16.gmra.mrb[0].mxu0 %v1817
      %v2071 = vpop.f32.mrb[0].mxu0
      %v2072 = vadd.f32 %v1658, %v2071
      %v2073 = vpop.f32.mrb[0].mxu0
      %v2074 = vpop.f32.mrb[0].mxu0
      %v2075 = vadd.f32 %v1661, %v2074
      %v2076 = vpop.f32.mrb[0].mxu0
      %2077 = vmatprep.mubr.bf16.mxu0 0
      %2078 = vmatmul.mubr.bf16.gmra.mrb[0].mxu0 %v1826
      %v2079 = vpop.f32.mrb[0].mxu0
      %v2080 = vadd.f32 %v1666, %v2079
      %v2081 = vpop.f32.mrb[0].mxu0
      %v2082 = vpop.f32.mrb[0].mxu0
      %v2083 = vadd.f32 %v1669, %v2082
      %v2084 = vpop.f32.mrb[0].mxu0
      %2085 = vmatprep.mubr.bf16.mxu0 0
      %2086 = vmatmul.mubr.bf16.gmra.mrb[0].mxu0 %v1835
      %v2087 = vpop.f32.mrb[0].mxu0
      %v2088 = vadd.f32 %v1674, %v2087
      %v2089 = vpop.f32.mrb[0].mxu0
      %v2090 = vpop.f32.mrb[0].mxu0
      %v2091 = vadd.f32 %v1677, %v2090
      %v2092 = vpop.f32.mrb[0].mxu0
      %2093 = vmatprep.mubr.bf16.mxu0 0
      %2094 = vmatmul.mubr.bf16.gmra.mrb[0].mxu0 %v1844
      %v2095 = vpop.f32.mrb[0].mxu0
      %v2096 = vadd.f32 %v1682, %v2095
      %v2097 = vpop.f32.mrb[0].mxu0
      %v2098 = vpop.f32.mrb[0].mxu0
      %v2099 = vadd.f32 %v1685, %v2098
      %v2100 = vpop.f32.mrb[0].mxu0
      %2101 = vmatprep.mubr.bf16.mxu0 0
      %2102 = vmatmul.mubr.bf16.gmra.mrb[0].mxu0 %v1853
      %v2103 = vpop.f32.mrb[0].mxu0
      %v2104 = vadd.f32 %v1690, %v2103
      %v2105 = vpop.f32.mrb[0].mxu0
      %v2106 = vpop.f32.mrb[0].mxu0
      %v2107 = vadd.f32 %v1693, %v2106
      %v2108 = vpop.f32.mrb[0].mxu0
      %2109 = vmatprep.mubr.bf16.mxu0 0
      %2110 = vmatmul.mubr.bf16.gmra.mrb[0].mxu0 %v1862
      %v2111 = vpop.f32.mrb[0].mxu0
      %v2112 = vadd.f32 %v1698, %v2111
      %v2113 = vpop.f32.mrb[0].mxu0
      %v2114 = vpop.f32.mrb[0].mxu0
      %v2115 = vadd.f32 %v1701, %v2114
      %v2116 = vpop.f32.mrb[0].mxu0
      %2117 = vmatprep.mubr.bf16.mxu0 0
      %2118 = vmatmul.mubr.bf16.gmra.mrb[0].mxu0 %v1871
      %v2119 = vpop.f32.mrb[0].mxu0
      %v2120 = vadd.f32 %v1706, %v2119
      %v2121 = vpop.f32.mrb[0].mxu0
      %v2122 = vpop.f32.mrb[0].mxu0
      %v2123 = vadd.f32 %v1709, %v2122
      %v2124 = vpop.f32.mrb[0].mxu0
      %2125 = vmatprep.mubr.bf16.mxu0 0
      %2126 = vmatmul.mubr.bf16.gmra.mrb[0].mxu0 %v1880
      %v2127 = vpop.f32.mrb[0].mxu0
      %v2128 = vadd.f32 %v1714, %v2127
      %v2129 = vpop.f32.mrb[0].mxu0
      %v2130 = vpop.f32.mrb[0].mxu0
      %v2131 = vadd.f32 %v1717, %v2130
      %v2132 = vpop.f32.mrb[0].mxu0
      %2133 = vmatprep.mubr.bf16.mxu0 0
      %2134 = vmatmul.mubr.bf16.gmra.mrb[0].mxu0 %v1889
      %v2135 = vpop.f32.mrb[0].mxu0
      %v2136 = vadd.f32 %v1722, %v2135
      %v2137 = vpop.f32.mrb[0].mxu0
      %v2138 = vpop.f32.mrb[0].mxu0
      %v2139 = vadd.f32 %v1725, %v2138
      %v2140 = vpop.f32.mrb[0].mxu0
      %2141 = vmatprep.mubr.bf16.mxu0 0
      %2142 = vmatmul.mubr.bf16.gmra.mrb[0].mxu0 %v1898
      %v2143 = vpop.f32.mrb[0].mxu0
      %v2144 = vadd.f32 %v1730, %v2143
      %v2145 = vpop.f32.mrb[0].mxu0
      %v2146 = vpop.f32.mrb[0].mxu0
      %v2147 = vadd.f32 %v1733, %v2146
      %v2148 = vpop.f32.mrb[0].mxu0
      %2149 = vmatprep.mubr.bf16.mxu0 0
      %2150 = vmatmul.mubr.bf16.gmra.mrb[0].mxu0 %v1907
      %v2151 = vpop.f32.mrb[0].mxu0
      %v2152 = vadd.f32 %v1738, %v2151
      %v2153 = vpop.f32.mrb[0].mxu0
      %v2154 = vpop.f32.mrb[0].mxu0
      %v2155 = vadd.f32 %v1741, %v2154
      %v2156 = vpop.f32.mrb[0].mxu0
      %2157 = vmatprep.mubr.bf16.mxu0 0
      %2158 = vmatmul.mubr.bf16.gmra.mrb[0].mxu0 %v1916
      %v2159 = vpop.f32.mrb[0].mxu0
      %v2160 = vadd.f32 %v1746, %v2159
      %v2161 = vpop.f32.mrb[0].mxu0
      %v2162 = vpop.f32.mrb[0].mxu0
      %v2163 = vadd.f32 %v1749, %v2162
      %v2164 = vpop.f32.mrb[0].mxu0
      %2165 = vmatprep.mubr.bf16.mxu0 0
      %2166 = vmatmul.mubr.bf16.gmra.mrb[0].mxu0 %v1925
      %v2167 = vpop.f32.mrb[0].mxu0
      %v2168 = vadd.f32 %v1754, %v2167
      %v2169 = vpop.f32.mrb[0].mxu0
      %v2170 = vpop.f32.mrb[0].mxu0
      %v2171 = vadd.f32 %v1757, %v2170
      %v2172 = vpop.f32.mrb[0].mxu0
      %2173 = vmatprep.mubr.bf16.mxu0 0
      %2174 = vmatmul.mubr.bf16.gmra.mrb[0].mxu0 %v1934
      %v2175 = vpop.f32.mrb[0].mxu0
      %v2176 = vadd.f32 %v1762, %v2175
      %v2177 = vpop.f32.mrb[0].mxu0
      %v2178 = vpop.f32.mrb[0].mxu0
      %v2179 = vadd.f32 %v1765, %v2178
      %v2180 = vpop.f32.mrb[0].mxu0
      %2181 = vmatprep.mubr.bf16.mxu0 0
      %2182 = vmatmul.mubr.bf16.gmra.mrb[0].mxu0 %v1943
      %v2183 = vpop.f32.mrb[0].mxu0
      %v2184 = vadd.f32 %v1770, %v2183
      %v2185 = vpop.f32.mrb[0].mxu0
      %v2186 = vpop.f32.mrb[0].mxu0
      %v2187 = vadd.f32 %v1773, %v2186
      %v2188 = vpop.f32.mrb[0].mxu0
      %2189 = vmatprep.mubr.bf16.mxu0 0
      %2190 = vmatmul.mubr.bf16.gmra.mrb[0].mxu0 %v1952
      %v2191 = vpop.f32.mrb[0].mxu0
      %v2192 = vadd.f32 %v1778, %v2191
      %v2193 = vpop.f32.mrb[0].mxu0
      %v2194 = vpop.f32.mrb[0].mxu0
      %v2195 = vadd.f32 %v1781, %v2194
      %v2196 = vpop.f32.mrb[0].mxu0
      %2197 = vmatprep.mubr.bf16.mxu0 0
      %2198 = vmatmul.mubr.bf16.gmra.mrb[0].mxu0 %v1961
      %v2199 = vpop.f32.mrb[0].mxu0
      %v2200 = vadd.f32 %v1786, %v2199
      %v2201 = vpop.f32.mrb[0].mxu0
      %v2202 = vpop.f32.mrb[0].mxu0
      %v2203 = vadd.f32 %v1789, %v2202
      %v2204 = vpop.f32.mrb[0].mxu0
      %2205 = vmatprep.mubr.bf16.mxu0 0
      %2206 = vmatmul.mubr.bf16.gmra.mrb[0].mxu0 %v1970
      %v2207 = vpop.f32.mrb[0].mxu0
      %v2208 = vadd.f32 %v1794, %v2207
      %v2209 = vpop.f32.mrb[0].mxu0
      %v2210 = vpop.f32.mrb[0].mxu0
      %v2211 = vadd.f32 %v1797, %v2210
      %v2212 = vpop.f32.mrb[0].mxu0
      %2213 = vdwg.mxu0
      %s2214 = scalar_lea.vmem %s3, 128
      %v2215 = vld [vmem:[%s2214] sm:$0xf]
      %v2216 = vld [vmem:[%s2214 + $0x4] sm:$0xf]
      %v2217 = vld [vmem:[%s2214 + $0x8] sm:$0xf]
      %v2218 = vld [vmem:[%s2214 + $0xc] sm:$0xf]
      %v2219 = vld [vmem:[%s2214 + $0x10] sm:$0xf]
      %v2220 = vld [vmem:[%s2214 + $0x14] sm:$0xf]
      %v2221 = vld [vmem:[%s2214 + $0x18] sm:$0xf]
      %v2222 = vld [vmem:[%s2214 + $0x1c] sm:$0xf]
      %v2223 = vld [vmem:[%s2214 + $0x20] sm:$0xf]
      %v2224 = vld [vmem:[%s2214 + $0x24] sm:$0xf]
      %v2225 = vld [vmem:[%s2214 + $0x28] sm:$0xf]
      %v2226 = vld [vmem:[%s2214 + $0x2c] sm:$0xf]
      %v2227 = vld [vmem:[%s2214 + $0x30] sm:$0xf]
      %v2228 = vld [vmem:[%s2214 + $0x34] sm:$0xf]
      %v2229 = vld [vmem:[%s2214 + $0x38] sm:$0xf]
      %v2230 = vld [vmem:[%s2214 + $0x3c] sm:$0xf]
      %vm2231 = vsmask.f32 256
      %v2232 = vrot.slane %v1802, 7
      %v2233 = vrot.slane %v1810, 7
      %v2234 = vor.u32 %v2233, %v1813
      %v2235 = vsel %vm2231, %v2232, %v2234
      %v2236 = vrot.slane %v1819, 7
      %v2237 = vor.u32 %v2236, %v1822
      %v2238 = vsel %vm2231, %v2233, %v2237
      %v2239 = vrot.slane %v1828, 7
      %v2240 = vor.u32 %v2239, %v1831
      %v2241 = vsel %vm2231, %v2236, %v2240
      %v2242 = vrot.slane %v1837, 7
      %v2243 = vor.u32 %v2242, %v1840
      %v2244 = vsel %vm2231, %v2239, %v2243
      %v2245 = vrot.slane %v1846, 7
      %v2246 = vor.u32 %v2245, %v1849
      %v2247 = vsel %vm2231, %v2242, %v2246
      %v2248 = vrot.slane %v1855, 7
      %v2249 = vor.u32 %v2248, %v1858
      %v2250 = vsel %vm2231, %v2245, %v2249
      %v2251 = vrot.slane %v1864, 7
      %v2252 = vor.u32 %v2251, %v1867
      %v2253 = vsel %vm2231, %v2248, %v2252
      %v2254 = vrot.slane %v1873, 7
      %v2255 = vor.u32 %v2254, %v1876
      %v2256 = vsel %vm2231, %v2251, %v2255
      %v2257 = vrot.slane %v1882, 7
      %v2258 = vor.u32 %v2257, %v1885
      %v2259 = vsel %vm2231, %v2254, %v2258
      %v2260 = vrot.slane %v1891, 7
      %v2261 = vor.u32 %v2260, %v1894
      %v2262 = vsel %vm2231, %v2257, %v2261
      %v2263 = vrot.slane %v1900, 7
      %v2264 = vor.u32 %v2263, %v1903
      %v2265 = vsel %vm2231, %v2260, %v2264
      %v2266 = vrot.slane %v1909, 7
      %v2267 = vor.u32 %v2266, %v1912
      %v2268 = vsel %vm2231, %v2263, %v2267
      %v2269 = vrot.slane %v1918, 7
      %v2270 = vor.u32 %v2269, %v1921
      %v2271 = vsel %vm2231, %v2266, %v2270
      %v2272 = vrot.slane %v1927, 7
      %v2273 = vor.u32 %v2272, %v1930
      %v2274 = vsel %vm2231, %v2269, %v2273
      %v2275 = vrot.slane %v1936, 7
      %v2276 = vor.u32 %v2275, %v1939
      %v2277 = vsel %vm2231, %v2272, %v2276
      %v2278 = vrot.slane %v1945, 7
      %v2279 = vor.u32 %v2278, %v1948
      %v2280 = vsel %vm2231, %v2275, %v2279
      %v2281 = vrot.slane %v1954, 7
      %v2282 = vor.u32 %v2281, %v1957
      %v2283 = vsel %vm2231, %v2278, %v2282
      %v2284 = vrot.slane %v1963, 7
      %v2285 = vor.u32 %v2284, %v1966
      %v2286 = vsel %vm2231, %v2281, %v2285
      %v2321 = vunpack.c.l.b16 %v2215
      %v2322 = vunpack.c.l.b16 %v2216
      %v2323 = vunpack.c.l.b16 %v2217
      %v2324 = vunpack.c.l.b16 %v2218
      %v2325 = vunpack.c.l.b16 %v2219
      %v2326 = vunpack.c.l.b16 %v2220
      %v2327 = vunpack.c.l.b16 %v2221
      %v2328 = vunpack.c.l.b16 %v2222
      %v2329 = vunpack.c.l.b16 %v2223
      %v2330 = vunpack.c.l.b16 %v2224
      %v2331 = vunpack.c.l.b16 %v2225
      %v2332 = vunpack.c.l.b16 %v2226
      %v2333 = vunpack.c.l.b16 %v2227
      %v2334 = vunpack.c.l.b16 %v2228
      %v2335 = vunpack.c.l.b16 %v2229
      %v2336 = vunpack.c.l.b16 %v2230
      %v2337 = vpack.c.b16 %v2322, %v2321
      %v2338 = vpack.c.b16 %v2324, %v2323
      %v2339 = vpack.c.b16 %v2326, %v2325
      %v2340 = vpack.c.b16 %v2328, %v2327
      %v2341 = vpack.c.b16 %v2330, %v2329
      %v2342 = vpack.c.b16 %v2332, %v2331
      %v2343 = vpack.c.b16 %v2334, %v2333
      %v2344 = vpack.c.b16 %v2336, %v2335
      %2353 = vmatprep.subr.bf16.mxu0 0
      %2354 = vmatpush1.bf16.msra.mxu0 %v2337
      %2355 = vmatprep.subr.bf16.mxu0 0
      %2356 = vmatpush1.bf16.msra.mxu0 %v2338
      %2357 = vmatprep.subr.bf16.mxu0 0
      %2358 = vmatpush1.bf16.msra.mxu0 %v2339
      %2359 = vmatprep.subr.bf16.mxu0 0
      %2360 = vmatpush1.bf16.msra.mxu0 %v2340
      %2361 = vmatprep.subr.bf16.mxu0 0
      %2362 = vmatpush1.bf16.msra.mxu0 %v2341
      %2363 = vmatprep.subr.bf16.mxu0 0
      %2364 = vmatpush1.bf16.msra.mxu0 %v2342
      %2365 = vmatprep.subr.bf16.mxu0 0
      %2366 = vmatpush1.bf16.msra.mxu0 %v2343
      %2367 = vmatprep.subr.bf16.mxu0 0
      %2368 = vmatpush1.bf16.msra.mxu0 %v2344
      %2369 = vmatprep.subr.bf16.mxu0 0
      %2370 = vmatpush1.bf16.msra.mxu0 0
      %2371 = vmatprep.subr.bf16.mxu0 0
      %2372 = vmatpush1.bf16.msra.mxu0 0
      %2373 = vmatprep.subr.bf16.mxu0 0
      %2374 = vmatpush1.bf16.msra.mxu0 0
      %2375 = vmatprep.subr.bf16.mxu0 0
      %2376 = vmatpush1.bf16.msra.mxu0 0
      %2377 = vmatprep.subr.bf16.mxu0 0
      %2378 = vmatpush1.bf16.msra.mxu0 0
      %2379 = vmatprep.subr.bf16.mxu0 0
      %2380 = vmatpush1.bf16.msra.mxu0 0
      %2381 = vmatprep.subr.bf16.mxu0 0
      %2382 = vmatpush1.bf16.msra.mxu0 0
      %2383 = vmatprep.subr.bf16.mxu0 0
      %2384 = vmatpush1.bf16.msra.mxu0 0
      %2385 = vmatprep.mubr.bf16.mxu0 0
      %2386 = vmatmul.mubr.bf16.gmra.mrb[0].mxu0 %v2235
      %v2387 = vpop.f32.mrb[0].mxu0
      %v2388 = vadd.f32 0.0, %v2387
      %v2389 = vpop.f32.mrb[0].mxu0
      %v2390 = vpop.f32.mrb[0].mxu0
      %v2391 = vadd.f32 0.0, %v2390
      %v2392 = vpop.f32.mrb[0].mxu0
      %2393 = vmatprep.mubr.bf16.mxu0 0
      %2394 = vmatmul.mubr.bf16.gmra.mrb[0].mxu0 %v2238
      %v2395 = vpop.f32.mrb[0].mxu0
      %v2396 = vadd.f32 0.0, %v2395
      %v2397 = vpop.f32.mrb[0].mxu0
      %v2398 = vpop.f32.mrb[0].mxu0
      %v2399 = vadd.f32 0.0, %v2398
      %v2400 = vpop.f32.mrb[0].mxu0
      %2401 = vmatprep.mubr.bf16.mxu0 0
      %2402 = vmatmul.mubr.bf16.gmra.mrb[0].mxu0 %v2241
      %v2403 = vpop.f32.mrb[0].mxu0
      %v2404 = vadd.f32 0.0, %v2403
      %v2405 = vpop.f32.mrb[0].mxu0
      %v2406 = vpop.f32.mrb[0].mxu0
      %v2407 = vadd.f32 0.0, %v2406
      %v2408 = vpop.f32.mrb[0].mxu0
      %2409 = vmatprep.mubr.bf16.mxu0 0
      %2410 = vmatmul.mubr.bf16.gmra.mrb[0].mxu0 %v2244
      %v2411 = vpop.f32.mrb[0].mxu0
      %v2412 = vadd.f32 0.0, %v2411
      %v2413 = vpop.f32.mrb[0].mxu0
      %v2414 = vpop.f32.mrb[0].mxu0
      %v2415 = vadd.f32 0.0, %v2414
      %v2416 = vpop.f32.mrb[0].mxu0
      %2417 = vmatprep.mubr.bf16.mxu0 0
      %2418 = vmatmul.mubr.bf16.gmra.mrb[0].mxu0 %v2247
      %v2419 = vpop.f32.mrb[0].mxu0
      %v2420 = vadd.f32 0.0, %v2419
      %v2421 = vpop.f32.mrb[0].mxu0
      %v2422 = vpop.f32.mrb[0].mxu0
      %v2423 = vadd.f32 0.0, %v2422
      %v2424 = vpop.f32.mrb[0].mxu0
      %2425 = vmatprep.mubr.bf16.mxu0 0
      %2426 = vmatmul.mubr.bf16.gmra.mrb[0].mxu0 %v2250
      %v2427 = vpop.f32.mrb[0].mxu0
      %v2428 = vadd.f32 0.0, %v2427
      %v2429 = vpop.f32.mrb[0].mxu0
      %v2430 = vpop.f32.mrb[0].mxu0
      %v2431 = vadd.f32 0.0, %v2430
      %v2432 = vpop.f32.mrb[0].mxu0
      %2433 = vmatprep.mubr.bf16.mxu0 0
      %2434 = vmatmul.mubr.bf16.gmra.mrb[0].mxu0 %v2253
      %v2435 = vpop.f32.mrb[0].mxu0
      %v2436 = vadd.f32 0.0, %v2435
      %v2437 = vpop.f32.mrb[0].mxu0
      %v2438 = vpop.f32.mrb[0].mxu0
      %v2439 = vadd.f32 0.0, %v2438
      %v2440 = vpop.f32.mrb[0].mxu0
      %2441 = vmatprep.mubr.bf16.mxu0 0
      %2442 = vmatmul.mubr.bf16.gmra.mrb[0].mxu0 %v2256
      %v2443 = vpop.f32.mrb[0].mxu0
      %v2444 = vadd.f32 0.0, %v2443
      %v2445 = vpop.f32.mrb[0].mxu0
      %v2446 = vpop.f32.mrb[0].mxu0
      %v2447 = vadd.f32 0.0, %v2446
      %v2448 = vpop.f32.mrb[0].mxu0
      %2449 = vmatprep.mubr.bf16.mxu0 0
      %2450 = vmatmul.mubr.bf16.gmra.mrb[0].mxu0 %v2259
      %v2451 = vpop.f32.mrb[0].mxu0
      %v2452 = vadd.f32 0.0, %v2451
      %v2453 = vpop.f32.mrb[0].mxu0
      %v2454 = vpop.f32.mrb[0].mxu0
      %v2455 = vadd.f32 0.0, %v2454
      %v2456 = vpop.f32.mrb[0].mxu0
      %2457 = vmatprep.mubr.bf16.mxu0 0
      %2458 = vmatmul.mubr.bf16.gmra.mrb[0].mxu0 %v2262
      %v2459 = vpop.f32.mrb[0].mxu0
      %v2460 = vadd.f32 0.0, %v2459
      %v2461 = vpop.f32.mrb[0].mxu0
      %v2462 = vpop.f32.mrb[0].mxu0
      %v2463 = vadd.f32 0.0, %v2462
      %v2464 = vpop.f32.mrb[0].mxu0
      %2465 = vmatprep.mubr.bf16.mxu0 0
      %2466 = vmatmul.mubr.bf16.gmra.mrb[0].mxu0 %v2265
      %v2467 = vpop.f32.mrb[0].mxu0
      %v2468 = vadd.f32 0.0, %v2467
      %v2469 = vpop.f32.mrb[0].mxu0
      %v2470 = vpop.f32.mrb[0].mxu0
      %v2471 = vadd.f32 0.0, %v2470
      %v2472 = vpop.f32.mrb[0].mxu0
      %2473 = vmatprep.mubr.bf16.mxu0 0
      %2474 = vmatmul.mubr.bf16.gmra.mrb[0].mxu0 %v2268
      %v2475 = vpop.f32.mrb[0].mxu0
      %v2476 = vadd.f32 0.0, %v2475
      %v2477 = vpop.f32.mrb[0].mxu0
      %v2478 = vpop.f32.mrb[0].mxu0
      %v2479 = vadd.f32 0.0, %v2478
      %v2480 = vpop.f32.mrb[0].mxu0
      %2481 = vmatprep.mubr.bf16.mxu0 0
      %2482 = vmatmul.mubr.bf16.gmra.mrb[0].mxu0 %v2271
      %v2483 = vpop.f32.mrb[0].mxu0
      %v2484 = vadd.f32 0.0, %v2483
      %v2485 = vpop.f32.mrb[0].mxu0
      %v2486 = vpop.f32.mrb[0].mxu0
      %v2487 = vadd.f32 0.0, %v2486
      %v2488 = vpop.f32.mrb[0].mxu0
      %2489 = vmatprep.mubr.bf16.mxu0 0
      %2490 = vmatmul.mubr.bf16.gmra.mrb[0].mxu0 %v2274
      %v2491 = vpop.f32.mrb[0].mxu0
      %v2492 = vadd.f32 0.0, %v2491
      %v2493 = vpop.f32.mrb[0].mxu0
      %v2494 = vpop.f32.mrb[0].mxu0
      %v2495 = vadd.f32 0.0, %v2494
      %v2496 = vpop.f32.mrb[0].mxu0
      %2497 = vmatprep.mubr.bf16.mxu0 0
      %2498 = vmatmul.mubr.bf16.gmra.mrb[0].mxu0 %v2277
      %v2499 = vpop.f32.mrb[0].mxu0
      %v2500 = vadd.f32 0.0, %v2499
      %v2501 = vpop.f32.mrb[0].mxu0
      %v2502 = vpop.f32.mrb[0].mxu0
      %v2503 = vadd.f32 0.0, %v2502
      %v2504 = vpop.f32.mrb[0].mxu0
      %2505 = vmatprep.mubr.bf16.mxu0 0
      %2506 = vmatmul.mubr.bf16.gmra.mrb[0].mxu0 %v2280
      %v2507 = vpop.f32.mrb[0].mxu0
      %v2508 = vadd.f32 0.0, %v2507
      %v2509 = vpop.f32.mrb[0].mxu0
      %v2510 = vpop.f32.mrb[0].mxu0
      %v2511 = vadd.f32 0.0, %v2510
      %v2512 = vpop.f32.mrb[0].mxu0
      %2513 = vmatprep.mubr.bf16.mxu0 0
      %2514 = vmatmul.mubr.bf16.gmra.mrb[0].mxu0 %v2283
      %v2515 = vpop.f32.mrb[0].mxu0
      %v2516 = vadd.f32 0.0, %v2515
      %v2517 = vpop.f32.mrb[0].mxu0
      %v2518 = vpop.f32.mrb[0].mxu0
      %v2519 = vadd.f32 0.0, %v2518
      %v2520 = vpop.f32.mrb[0].mxu0
      %2521 = vmatprep.mubr.bf16.mxu0 0
      %2522 = vmatmul.mubr.bf16.gmra.mrb[0].mxu0 %v2286
      %v2523 = vpop.f32.mrb[0].mxu0
      %v2524 = vadd.f32 0.0, %v2523
      %v2525 = vpop.f32.mrb[0].mxu0
      %v2526 = vpop.f32.mrb[0].mxu0
      %v2527 = vadd.f32 0.0, %v2526
      %v2528 = vpop.f32.mrb[0].mxu0
      %2529 = vdwg.mxu0
      %v2530 = vadd.f32 %v2072, %v2388
      %v2531 = vadd.f32 %v2075, %v2391
      %v2532 = vadd.f32 %v2080, %v2396
      %v2533 = vadd.f32 %v2083, %v2399
      %v2534 = vadd.f32 %v2088, %v2404
      %v2535 = vadd.f32 %v2091, %v2407
      %v2536 = vadd.f32 %v2096, %v2412
      %v2537 = vadd.f32 %v2099, %v2415
      %v2538 = vadd.f32 %v2104, %v2420
      %v2539 = vadd.f32 %v2107, %v2423
      %v2540 = vadd.f32 %v2112, %v2428
      %v2541 = vadd.f32 %v2115, %v2431
      %v2542 = vadd.f32 %v2120, %v2436
      %v2543 = vadd.f32 %v2123, %v2439
      %v2544 = vadd.f32 %v2128, %v2444
      %v2545 = vadd.f32 %v2131, %v2447
      %v2546 = vadd.f32 %v2136, %v2452
      %v2547 = vadd.f32 %v2139, %v2455
      %v2548 = vadd.f32 %v2144, %v2460
      %v2549 = vadd.f32 %v2147, %v2463
      %v2550 = vadd.f32 %v2152, %v2468
      %v2551 = vadd.f32 %v2155, %v2471
      %v2552 = vadd.f32 %v2160, %v2476
      %v2553 = vadd.f32 %v2163, %v2479
      %v2554 = vadd.f32 %v2168, %v2484
      %v2555 = vadd.f32 %v2171, %v2487
      %v2556 = vadd.f32 %v2176, %v2492
      %v2557 = vadd.f32 %v2179, %v2495
      %v2558 = vadd.f32 %v2184, %v2500
      %v2559 = vadd.f32 %v2187, %v2503
      %v2560 = vadd.f32 %v2192, %v2508
      %v2561 = vadd.f32 %v2195, %v2511
      %v2562 = vadd.f32 %v2200, %v2516
      %v2563 = vadd.f32 %v2203, %v2519
      %v2564 = vadd.f32 %v2208, %v2524
      %v2565 = vadd.f32 %v2211, %v2527
      %v2566 = vld [vmem:[#allocation2 + $0x8] sm:$0xff]
      %v2567 = vld [vmem:[#allocation2 + $0x10] sm:$0xff]
      %v2568 = vld [vmem:[#allocation2 + $0x18] sm:$0xff]
      %v2569 = vld [vmem:[#allocation2 + $0x20] sm:$0xff]
      %v2570 = vld [vmem:[#allocation2 + $0x28] sm:$0xff]
      %v2571 = vld [vmem:[#allocation2 + $0x30] sm:$0xff]
      %v2572 = vld [vmem:[#allocation2 + $0x38] sm:$0xff]
      %v2573 = vld [vmem:[#allocation2 + $0x40] sm:$0xff]
      %v2574 = vld [vmem:[#allocation2 + $0x48] sm:$0xff]
      %v2575 = vld [vmem:[#allocation2 + $0x50] sm:$0xff]
      %v2576 = vld [vmem:[#allocation2 + $0x58] sm:$0xff]
      %v2577 = vld [vmem:[#allocation2 + $0x60] sm:$0xff]
      %v2578 = vld [vmem:[#allocation2 + $0x68] sm:$0xff]
      %v2579 = vld [vmem:[#allocation2 + $0x70] sm:$0xff]
      %v2580 = vld [vmem:[#allocation2 + $0x78] sm:$0xff]
      %v2581 = vld [vmem:[#allocation2 + $0x80] sm:$0xff]
      %v2582 = vld [vmem:[#allocation2 + $0x88] sm:$0xff]
      %v2583 = vld [vmem:[#allocation2 + $0x90] sm:$0xff]
      %v2584 = vld [vmem:[#allocation2 + $0x98] sm:$0xff]
      %v2585 = vld [vmem:[#allocation2 + $0xa0] sm:$0x1]
      %s2586 = scalar_lea.vmem %s3, 192
      %v2587 = vld [vmem:[%s2586] sm:$0xf]
      %v2588 = vld [vmem:[%s2586 + $0x4] sm:$0xf]
      %v2589 = vld [vmem:[%s2586 + $0x8] sm:$0xf]
      %v2590 = vld [vmem:[%s2586 + $0xc] sm:$0xf]
      %v2591 = vld [vmem:[%s2586 + $0x10] sm:$0xf]
      %v2592 = vld [vmem:[%s2586 + $0x14] sm:$0xf]
      %v2593 = vld [vmem:[%s2586 + $0x18] sm:$0xf]
      %v2594 = vld [vmem:[%s2586 + $0x1c] sm:$0xf]
      %v2595 = vld [vmem:[%s2586 + $0x20] sm:$0xf]
      %v2596 = vld [vmem:[%s2586 + $0x24] sm:$0xf]
      %v2597 = vld [vmem:[%s2586 + $0x28] sm:$0xf]
      %v2598 = vld [vmem:[%s2586 + $0x2c] sm:$0xf]
      %v2599 = vld [vmem:[%s2586 + $0x30] sm:$0xf]
      %v2600 = vld [vmem:[%s2586 + $0x34] sm:$0xf]
      %v2601 = vld [vmem:[%s2586 + $0x38] sm:$0xf]
      %v2602 = vld [vmem:[%s2586 + $0x3c] sm:$0xf]
      %v2604 = vshrl.u32 %v2566, 16
      %v2606 = vrot.slane %v2604, 7
      %v2608 = vshrl.u32 %v2567, 16
      %v2610 = vrot.slane %v2608, 7
      %v2611 = vshll.u32 %v2567, 16
      %v2613 = vor.u32 %v2610, %v2611
      %v2614 = vsel %vm2231, %v2606, %v2613
      %v2616 = vshrl.u32 %v2568, 16
      %v2618 = vrot.slane %v2616, 7
      %v2619 = vshll.u32 %v2568, 16
      %v2621 = vor.u32 %v2618, %v2619
      %v2622 = vsel %vm2231, %v2610, %v2621
      %v2624 = vshrl.u32 %v2569, 16
      %v2626 = vrot.slane %v2624, 7
      %v2627 = vshll.u32 %v2569, 16
      %v2629 = vor.u32 %v2626, %v2627
      %v2630 = vsel %vm2231, %v2618, %v2629
      %v2632 = vshrl.u32 %v2570, 16
      %v2634 = vrot.slane %v2632, 7
      %v2635 = vshll.u32 %v2570, 16
      %v2637 = vor.u32 %v2634, %v2635
      %v2638 = vsel %vm2231, %v2626, %v2637
      %v2640 = vshrl.u32 %v2571, 16
      %v2642 = vrot.slane %v2640, 7
      %v2643 = vshll.u32 %v2571, 16
      %v2645 = vor.u32 %v2642, %v2643
      %v2646 = vsel %vm2231, %v2634, %v2645
      %v2648 = vshrl.u32 %v2572, 16
      %v2650 = vrot.slane %v2648, 7
      %v2651 = vshll.u32 %v2572, 16
      %v2653 = vor.u32 %v2650, %v2651
      %v2654 = vsel %vm2231, %v2642, %v2653
      %v2656 = vshrl.u32 %v2573, 16
      %v2658 = vrot.slane %v2656, 7
      %v2659 = vshll.u32 %v2573, 16
      %v2661 = vor.u32 %v2658, %v2659
      %v2662 = vsel %vm2231, %v2650, %v2661
      %v2664 = vshrl.u32 %v2574, 16
      %v2666 = vrot.slane %v2664, 7
      %v2667 = vshll.u32 %v2574, 16
      %v2669 = vor.u32 %v2666, %v2667
      %v2670 = vsel %vm2231, %v2658, %v2669
      %v2672 = vshrl.u32 %v2575, 16
      %v2674 = vrot.slane %v2672, 7
      %v2675 = vshll.u32 %v2575, 16
      %v2677 = vor.u32 %v2674, %v2675
      %v2678 = vsel %vm2231, %v2666, %v2677
      %v2680 = vshrl.u32 %v2576, 16
      %v2682 = vrot.slane %v2680, 7
      %v2683 = vshll.u32 %v2576, 16
      %v2685 = vor.u32 %v2682, %v2683
      %v2686 = vsel %vm2231, %v2674, %v2685
      %v2688 = vshrl.u32 %v2577, 16
      %v2690 = vrot.slane %v2688, 7
      %v2691 = vshll.u32 %v2577, 16
      %v2693 = vor.u32 %v2690, %v2691
      %v2694 = vsel %vm2231, %v2682, %v2693
      %v2696 = vshrl.u32 %v2578, 16
      %v2698 = vrot.slane %v2696, 7
      %v2699 = vshll.u32 %v2578, 16
      %v2701 = vor.u32 %v2698, %v2699
      %v2702 = vsel %vm2231, %v2690, %v2701
      %v2704 = vshrl.u32 %v2579, 16
      %v2706 = vrot.slane %v2704, 7
      %v2707 = vshll.u32 %v2579, 16
      %v2709 = vor.u32 %v2706, %v2707
      %v2710 = vsel %vm2231, %v2698, %v2709
      %v2712 = vshrl.u32 %v2580, 16
      %v2714 = vrot.slane %v2712, 7
      %v2715 = vshll.u32 %v2580, 16
      %v2717 = vor.u32 %v2714, %v2715
      %v2718 = vsel %vm2231, %v2706, %v2717
      %v2720 = vshrl.u32 %v2581, 16
      %v2722 = vrot.slane %v2720, 7
      %v2723 = vshll.u32 %v2581, 16
      %v2725 = vor.u32 %v2722, %v2723
      %v2726 = vsel %vm2231, %v2714, %v2725
      %v2728 = vshrl.u32 %v2582, 16
      %v2730 = vrot.slane %v2728, 7
      %v2731 = vshll.u32 %v2582, 16
      %v2733 = vor.u32 %v2730, %v2731
      %v2734 = vsel %vm2231, %v2722, %v2733
      %v2736 = vshrl.u32 %v2583, 16
      %v2738 = vrot.slane %v2736, 7
      %v2739 = vshll.u32 %v2583, 16
      %v2741 = vor.u32 %v2738, %v2739
      %v2742 = vsel %vm2231, %v2730, %v2741
      %v2744 = vshrl.u32 %v2584, 16
      %v2746 = vrot.slane %v2744, 7
      %v2747 = vshll.u32 %v2584, 16
      %v2749 = vor.u32 %v2746, %v2747
      %v2750 = vsel %vm2231, %v2738, %v2749
      %v2785 = vunpack.c.l.b16 %v2587
      %v2786 = vunpack.c.l.b16 %v2588
      %v2787 = vunpack.c.l.b16 %v2589
      %v2788 = vunpack.c.l.b16 %v2590
      %v2789 = vunpack.c.l.b16 %v2591
      %v2790 = vunpack.c.l.b16 %v2592
      %v2791 = vunpack.c.l.b16 %v2593
      %v2792 = vunpack.c.l.b16 %v2594
      %v2793 = vunpack.c.l.b16 %v2595
      %v2794 = vunpack.c.l.b16 %v2596
      %v2795 = vunpack.c.l.b16 %v2597
      %v2796 = vunpack.c.l.b16 %v2598
      %v2797 = vunpack.c.l.b16 %v2599
      %v2798 = vunpack.c.l.b16 %v2600
      %v2799 = vunpack.c.l.b16 %v2601
      %v2800 = vunpack.c.l.b16 %v2602
      %v2801 = vpack.c.b16 %v2786, %v2785
      %v2802 = vpack.c.b16 %v2788, %v2787
      %v2803 = vpack.c.b16 %v2790, %v2789
      %v2804 = vpack.c.b16 %v2792, %v2791
      %v2805 = vpack.c.b16 %v2794, %v2793
      %v2806 = vpack.c.b16 %v2796, %v2795
      %v2807 = vpack.c.b16 %v2798, %v2797
      %v2808 = vpack.c.b16 %v2800, %v2799
      %2817 = vmatprep.subr.bf16.mxu0 0
      %2818 = vmatpush1.bf16.msra.mxu0 %v2801
      %2819 = vmatprep.subr.bf16.mxu0 0
      %2820 = vmatpush1.bf16.msra.mxu0 %v2802
      %2821 = vmatprep.subr.bf16.mxu0 0
      %2822 = vmatpush1.bf16.msra.mxu0 %v2803
      %2823 = vmatprep.subr.bf16.mxu0 0
      %2824 = vmatpush1.bf16.msra.mxu0 %v2804
      %2825 = vmatprep.subr.bf16.mxu0 0
      %2826 = vmatpush1.bf16.msra.mxu0 %v2805
      %2827 = vmatprep.subr.bf16.mxu0 0
      %2828 = vmatpush1.bf16.msra.mxu0 %v2806
      %2829 = vmatprep.subr.bf16.mxu0 0
      %2830 = vmatpush1.bf16.msra.mxu0 %v2807
      %2831 = vmatprep.subr.bf16.mxu0 0
      %2832 = vmatpush1.bf16.msra.mxu0 %v2808
      %2833 = vmatprep.subr.bf16.mxu0 0
      %2834 = vmatpush1.bf16.msra.mxu0 0
      %2835 = vmatprep.subr.bf16.mxu0 0
      %2836 = vmatpush1.bf16.msra.mxu0 0
      %2837 = vmatprep.subr.bf16.mxu0 0
      %2838 = vmatpush1.bf16.msra.mxu0 0
      %2839 = vmatprep.subr.bf16.mxu0 0
      %2840 = vmatpush1.bf16.msra.mxu0 0
      %2841 = vmatprep.subr.bf16.mxu0 0
      %2842 = vmatpush1.bf16.msra.mxu0 0
      %2843 = vmatprep.subr.bf16.mxu0 0
      %2844 = vmatpush1.bf16.msra.mxu0 0
      %2845 = vmatprep.subr.bf16.mxu0 0
      %2846 = vmatpush1.bf16.msra.mxu0 0
      %2847 = vmatprep.subr.bf16.mxu0 0
      %2848 = vmatpush1.bf16.msra.mxu0 0
      %2849 = vmatprep.mubr.bf16.mxu0 0
      %2850 = vmatmul.mubr.bf16.gmra.mrb[0].mxu0 %v2614
      %v2851 = vpop.f32.mrb[0].mxu0
      %v2852 = vadd.f32 0.0, %v2851
      %v2853 = vpop.f32.mrb[0].mxu0
      %v2854 = vpop.f32.mrb[0].mxu0
      %v2855 = vadd.f32 0.0, %v2854
      %v2856 = vpop.f32.mrb[0].mxu0
      %2857 = vmatprep.mubr.bf16.mxu0 0
      %2858 = vmatmul.mubr.bf16.gmra.mrb[0].mxu0 %v2622
      %v2859 = vpop.f32.mrb[0].mxu0
      %v2860 = vadd.f32 0.0, %v2859
      %v2861 = vpop.f32.mrb[0].mxu0
      %v2862 = vpop.f32.mrb[0].mxu0
      %v2863 = vadd.f32 0.0, %v2862
      %v2864 = vpop.f32.mrb[0].mxu0
      %2865 = vmatprep.mubr.bf16.mxu0 0
      %2866 = vmatmul.mubr.bf16.gmra.mrb[0].mxu0 %v2630
      %v2867 = vpop.f32.mrb[0].mxu0
      %v2868 = vadd.f32 0.0, %v2867
      %v2869 = vpop.f32.mrb[0].mxu0
      %v2870 = vpop.f32.mrb[0].mxu0
      %v2871 = vadd.f32 0.0, %v2870
      %v2872 = vpop.f32.mrb[0].mxu0
      %2873 = vmatprep.mubr.bf16.mxu0 0
      %2874 = vmatmul.mubr.bf16.gmra.mrb[0].mxu0 %v2638
      %v2875 = vpop.f32.mrb[0].mxu0
      %v2876 = vadd.f32 0.0, %v2875
      %v2877 = vpop.f32.mrb[0].mxu0
      %v2878 = vpop.f32.mrb[0].mxu0
      %v2879 = vadd.f32 0.0, %v2878
      %v2880 = vpop.f32.mrb[0].mxu0
      %2881 = vmatprep.mubr.bf16.mxu0 0
      %2882 = vmatmul.mubr.bf16.gmra.mrb[0].mxu0 %v2646
      %v2883 = vpop.f32.mrb[0].mxu0
      %v2884 = vadd.f32 0.0, %v2883
      %v2885 = vpop.f32.mrb[0].mxu0
      %v2886 = vpop.f32.mrb[0].mxu0
      %v2887 = vadd.f32 0.0, %v2886
      %v2888 = vpop.f32.mrb[0].mxu0
      %2889 = vmatprep.mubr.bf16.mxu0 0
      %2890 = vmatmul.mubr.bf16.gmra.mrb[0].mxu0 %v2654
      %v2891 = vpop.f32.mrb[0].mxu0
      %v2892 = vadd.f32 0.0, %v2891
      %v2893 = vpop.f32.mrb[0].mxu0
      %v2894 = vpop.f32.mrb[0].mxu0
      %v2895 = vadd.f32 0.0, %v2894
      %v2896 = vpop.f32.mrb[0].mxu0
      %2897 = vmatprep.mubr.bf16.mxu0 0
      %2898 = vmatmul.mubr.bf16.gmra.mrb[0].mxu0 %v2662
      %v2899 = vpop.f32.mrb[0].mxu0
      %v2900 = vadd.f32 0.0, %v2899
      %v2901 = vpop.f32.mrb[0].mxu0
      %v2902 = vpop.f32.mrb[0].mxu0
      %v2903 = vadd.f32 0.0, %v2902
      %v2904 = vpop.f32.mrb[0].mxu0
      %2905 = vmatprep.mubr.bf16.mxu0 0
      %2906 = vmatmul.mubr.bf16.gmra.mrb[0].mxu0 %v2670
      %v2907 = vpop.f32.mrb[0].mxu0
      %v2908 = vadd.f32 0.0, %v2907
      %v2909 = vpop.f32.mrb[0].mxu0
      %v2910 = vpop.f32.mrb[0].mxu0
      %v2911 = vadd.f32 0.0, %v2910
      %v2912 = vpop.f32.mrb[0].mxu0
      %2913 = vmatprep.mubr.bf16.mxu0 0
      %2914 = vmatmul.mubr.bf16.gmra.mrb[0].mxu0 %v2678
      %v2915 = vpop.f32.mrb[0].mxu0
      %v2916 = vadd.f32 0.0, %v2915
      %v2917 = vpop.f32.mrb[0].mxu0
      %v2918 = vpop.f32.mrb[0].mxu0
      %v2919 = vadd.f32 0.0, %v2918
      %v2920 = vpop.f32.mrb[0].mxu0
      %2921 = vmatprep.mubr.bf16.mxu0 0
      %2922 = vmatmul.mubr.bf16.gmra.mrb[0].mxu0 %v2686
      %v2923 = vpop.f32.mrb[0].mxu0
      %v2924 = vadd.f32 0.0, %v2923
      %v2925 = vpop.f32.mrb[0].mxu0
      %v2926 = vpop.f32.mrb[0].mxu0
      %v2927 = vadd.f32 0.0, %v2926
      %v2928 = vpop.f32.mrb[0].mxu0
      %2929 = vmatprep.mubr.bf16.mxu0 0
      %2930 = vmatmul.mubr.bf16.gmra.mrb[0].mxu0 %v2694
      %v2931 = vpop.f32.mrb[0].mxu0
      %v2932 = vadd.f32 0.0, %v2931
      %v2933 = vpop.f32.mrb[0].mxu0
      %v2934 = vpop.f32.mrb[0].mxu0
      %v2935 = vadd.f32 0.0, %v2934
      %v2936 = vpop.f32.mrb[0].mxu0
      %2937 = vmatprep.mubr.bf16.mxu0 0
      %2938 = vmatmul.mubr.bf16.gmra.mrb[0].mxu0 %v2702
      %v2939 = vpop.f32.mrb[0].mxu0
      %v2940 = vadd.f32 0.0, %v2939
      %v2941 = vpop.f32.mrb[0].mxu0
      %v2942 = vpop.f32.mrb[0].mxu0
      %v2943 = vadd.f32 0.0, %v2942
      %v2944 = vpop.f32.mrb[0].mxu0
      %2945 = vmatprep.mubr.bf16.mxu0 0
      %2946 = vmatmul.mubr.bf16.gmra.mrb[0].mxu0 %v2710
      %v2947 = vpop.f32.mrb[0].mxu0
      %v2948 = vadd.f32 0.0, %v2947
      %v2949 = vpop.f32.mrb[0].mxu0
      %v2950 = vpop.f32.mrb[0].mxu0
      %v2951 = vadd.f32 0.0, %v2950
      %v2952 = vpop.f32.mrb[0].mxu0
      %2953 = vmatprep.mubr.bf16.mxu0 0
      %2954 = vmatmul.mubr.bf16.gmra.mrb[0].mxu0 %v2718
      %v2955 = vpop.f32.mrb[0].mxu0
      %v2956 = vadd.f32 0.0, %v2955
      %v2957 = vpop.f32.mrb[0].mxu0
      %v2958 = vpop.f32.mrb[0].mxu0
      %v2959 = vadd.f32 0.0, %v2958
      %v2960 = vpop.f32.mrb[0].mxu0
      %2961 = vmatprep.mubr.bf16.mxu0 0
      %2962 = vmatmul.mubr.bf16.gmra.mrb[0].mxu0 %v2726
      %v2963 = vpop.f32.mrb[0].mxu0
      %v2964 = vadd.f32 0.0, %v2963
      %v2965 = vpop.f32.mrb[0].mxu0
      %v2966 = vpop.f32.mrb[0].mxu0
      %v2967 = vadd.f32 0.0, %v2966
      %v2968 = vpop.f32.mrb[0].mxu0
      %2969 = vmatprep.mubr.bf16.mxu0 0
      %2970 = vmatmul.mubr.bf16.gmra.mrb[0].mxu0 %v2734
      %v2971 = vpop.f32.mrb[0].mxu0
      %v2972 = vadd.f32 0.0, %v2971
      %v2973 = vpop.f32.mrb[0].mxu0
      %v2974 = vpop.f32.mrb[0].mxu0
      %v2975 = vadd.f32 0.0, %v2974
      %v2976 = vpop.f32.mrb[0].mxu0
      %2977 = vmatprep.mubr.bf16.mxu0 0
      %2978 = vmatmul.mubr.bf16.gmra.mrb[0].mxu0 %v2742
      %v2979 = vpop.f32.mrb[0].mxu0
      %v2980 = vadd.f32 0.0, %v2979
      %v2981 = vpop.f32.mrb[0].mxu0
      %v2982 = vpop.f32.mrb[0].mxu0
      %v2983 = vadd.f32 0.0, %v2982
      %v2984 = vpop.f32.mrb[0].mxu0
      %2985 = vmatprep.mubr.bf16.mxu0 0
      %2986 = vmatmul.mubr.bf16.gmra.mrb[0].mxu0 %v2750
      %v2987 = vpop.f32.mrb[0].mxu0
      %v2988 = vadd.f32 0.0, %v2987
      %v2989 = vpop.f32.mrb[0].mxu0
      %v2990 = vpop.f32.mrb[0].mxu0
      %v2991 = vadd.f32 0.0, %v2990
      %v2992 = vpop.f32.mrb[0].mxu0
      %2993 = vdwg.mxu0
      %v2994 = vadd.f32 %v2530, %v2852
      %v2995 = vadd.f32 %v2531, %v2855
      %v2996 = vadd.f32 %v2532, %v2860
      %v2997 = vadd.f32 %v2533, %v2863
      %v2998 = vadd.f32 %v2534, %v2868
      %v2999 = vadd.f32 %v2535, %v2871
      %v3000 = vadd.f32 %v2536, %v2876
      %v3001 = vadd.f32 %v2537, %v2879
      %v3002 = vadd.f32 %v2538, %v2884
      %v3003 = vadd.f32 %v2539, %v2887
      %v3004 = vadd.f32 %v2540, %v2892
      %v3005 = vadd.f32 %v2541, %v2895
      %v3006 = vadd.f32 %v2542, %v2900
      %v3007 = vadd.f32 %v2543, %v2903
      %v3008 = vadd.f32 %v2544, %v2908
      %v3009 = vadd.f32 %v2545, %v2911
      %v3010 = vadd.f32 %v2546, %v2916
      %v3011 = vadd.f32 %v2547, %v2919
      %v3012 = vadd.f32 %v2548, %v2924
      %v3013 = vadd.f32 %v2549, %v2927
      %v3014 = vadd.f32 %v2550, %v2932
      %v3015 = vadd.f32 %v2551, %v2935
      %v3016 = vadd.f32 %v2552, %v2940
      %v3017 = vadd.f32 %v2553, %v2943
      %v3018 = vadd.f32 %v2554, %v2948
      %v3019 = vadd.f32 %v2555, %v2951
      %v3020 = vadd.f32 %v2556, %v2956
      %v3021 = vadd.f32 %v2557, %v2959
      %v3022 = vadd.f32 %v2558, %v2964
      %v3023 = vadd.f32 %v2559, %v2967
      %v3024 = vadd.f32 %v2560, %v2972
      %v3025 = vadd.f32 %v2561, %v2975
      %v3026 = vadd.f32 %v2562, %v2980
      %v3027 = vadd.f32 %v2563, %v2983
      %v3028 = vadd.f32 %v2564, %v2988
      %v3029 = vadd.f32 %v2565, %v2991
      %s3030 = scalar_lea.vmem %s3, 256
      %v3031 = vld [vmem:[%s3030] sm:$0xf]
      %v3032 = vld [vmem:[%s3030 + $0x4] sm:$0xf]
      %v3033 = vld [vmem:[%s3030 + $0x8] sm:$0xf]
      %v3034 = vld [vmem:[%s3030 + $0xc] sm:$0xf]
      %v3035 = vld [vmem:[%s3030 + $0x10] sm:$0xf]
      %v3036 = vld [vmem:[%s3030 + $0x14] sm:$0xf]
      %v3037 = vld [vmem:[%s3030 + $0x18] sm:$0xf]
      %v3038 = vld [vmem:[%s3030 + $0x1c] sm:$0xf]
      %v3039 = vld [vmem:[%s3030 + $0x20] sm:$0xf]
      %v3040 = vld [vmem:[%s3030 + $0x24] sm:$0xf]
      %v3041 = vld [vmem:[%s3030 + $0x28] sm:$0xf]
      %v3042 = vld [vmem:[%s3030 + $0x2c] sm:$0xf]
      %v3043 = vld [vmem:[%s3030 + $0x30] sm:$0xf]
      %v3044 = vld [vmem:[%s3030 + $0x34] sm:$0xf]
      %v3045 = vld [vmem:[%s3030 + $0x38] sm:$0xf]
      %v3046 = vld [vmem:[%s3030 + $0x3c] sm:$0xf]
      %v3063 = vunpack.c.l.b16 %v3031
      %v3064 = vunpack.c.l.b16 %v3032
      %v3065 = vunpack.c.l.b16 %v3033
      %v3066 = vunpack.c.l.b16 %v3034
      %v3067 = vunpack.c.l.b16 %v3035
      %v3068 = vunpack.c.l.b16 %v3036
      %v3069 = vunpack.c.l.b16 %v3037
      %v3070 = vunpack.c.l.b16 %v3038
      %v3071 = vunpack.c.l.b16 %v3039
      %v3072 = vunpack.c.l.b16 %v3040
      %v3073 = vunpack.c.l.b16 %v3041
      %v3074 = vunpack.c.l.b16 %v3042
      %v3075 = vunpack.c.l.b16 %v3043
      %v3076 = vunpack.c.l.b16 %v3044
      %v3077 = vunpack.c.l.b16 %v3045
      %v3078 = vunpack.c.l.b16 %v3046
      %v3079 = vpack.c.b16 %v3064, %v3063
      %v3080 = vpack.c.b16 %v3066, %v3065
      %v3081 = vpack.c.b16 %v3068, %v3067
      %v3082 = vpack.c.b16 %v3070, %v3069
      %v3083 = vpack.c.b16 %v3072, %v3071
      %v3084 = vpack.c.b16 %v3074, %v3073
      %v3085 = vpack.c.b16 %v3076, %v3075
      %v3086 = vpack.c.b16 %v3078, %v3077
      %3095 = vmatprep.subr.bf16.mxu0 0
      %3096 = vmatpush1.bf16.msra.mxu0 %v3079
      %3097 = vmatprep.subr.bf16.mxu0 0
      %3098 = vmatpush1.bf16.msra.mxu0 %v3080
      %3099 = vmatprep.subr.bf16.mxu0 0
      %3100 = vmatpush1.bf16.msra.mxu0 %v3081
      %3101 = vmatprep.subr.bf16.mxu0 0
      %3102 = vmatpush1.bf16.msra.mxu0 %v3082
      %3103 = vmatprep.subr.bf16.mxu0 0
      %3104 = vmatpush1.bf16.msra.mxu0 %v3083
      %3105 = vmatprep.subr.bf16.mxu0 0
      %3106 = vmatpush1.bf16.msra.mxu0 %v3084
      %3107 = vmatprep.subr.bf16.mxu0 0
      %3108 = vmatpush1.bf16.msra.mxu0 %v3085
      %3109 = vmatprep.subr.bf16.mxu0 0
      %3110 = vmatpush1.bf16.msra.mxu0 %v3086
      %3111 = vmatprep.subr.bf16.mxu0 0
      %3112 = vmatpush1.bf16.msra.mxu0 0
      %3113 = vmatprep.subr.bf16.mxu0 0
      %3114 = vmatpush1.bf16.msra.mxu0 0
      %3115 = vmatprep.subr.bf16.mxu0 0
      %3116 = vmatpush1.bf16.msra.mxu0 0
      %3117 = vmatprep.subr.bf16.mxu0 0
      %3118 = vmatpush1.bf16.msra.mxu0 0
      %3119 = vmatprep.subr.bf16.mxu0 0
      %3120 = vmatpush1.bf16.msra.mxu0 0
      %3121 = vmatprep.subr.bf16.mxu0 0
      %3122 = vmatpush1.bf16.msra.mxu0 0
      %3123 = vmatprep.subr.bf16.mxu0 0
      %3124 = vmatpush1.bf16.msra.mxu0 0
      %3125 = vmatprep.subr.bf16.mxu0 0
      %3126 = vmatpush1.bf16.msra.mxu0 0
      %3127 = vmatprep.mubr.bf16.mxu0 0
      %3128 = vmatmul.mubr.bf16.gmra.mrb[0].mxu0 %v2567
      %v3129 = vpop.f32.mrb[0].mxu0
      %v3130 = vadd.f32 0.0, %v3129
      %v3131 = vpop.f32.mrb[0].mxu0
      %v3132 = vpop.f32.mrb[0].mxu0
      %v3133 = vadd.f32 0.0, %v3132
      %v3134 = vpop.f32.mrb[0].mxu0
      %3135 = vmatprep.mubr.bf16.mxu0 0
      %3136 = vmatmul.mubr.bf16.gmra.mrb[0].mxu0 %v2568
      %v3137 = vpop.f32.mrb[0].mxu0
      %v3138 = vadd.f32 0.0, %v3137
      %v3139 = vpop.f32.mrb[0].mxu0
      %v3140 = vpop.f32.mrb[0].mxu0
      %v3141 = vadd.f32 0.0, %v3140
      %v3142 = vpop.f32.mrb[0].mxu0
      %3143 = vmatprep.mubr.bf16.mxu0 0
      %3144 = vmatmul.mubr.bf16.gmra.mrb[0].mxu0 %v2569
      %v3145 = vpop.f32.mrb[0].mxu0
      %v3146 = vadd.f32 0.0, %v3145
      %v3147 = vpop.f32.mrb[0].mxu0
      %v3148 = vpop.f32.mrb[0].mxu0
      %v3149 = vadd.f32 0.0, %v3148
      %v3150 = vpop.f32.mrb[0].mxu0
      %3151 = vmatprep.mubr.bf16.mxu0 0
      %3152 = vmatmul.mubr.bf16.gmra.mrb[0].mxu0 %v2570
      %v3153 = vpop.f32.mrb[0].mxu0
      %v3154 = vadd.f32 0.0, %v3153
      %v3155 = vpop.f32.mrb[0].mxu0
      %v3156 = vpop.f32.mrb[0].mxu0
      %v3157 = vadd.f32 0.0, %v3156
      %v3158 = vpop.f32.mrb[0].mxu0
      %3159 = vmatprep.mubr.bf16.mxu0 0
      %3160 = vmatmul.mubr.bf16.gmra.mrb[0].mxu0 %v2571
      %v3161 = vpop.f32.mrb[0].mxu0
      %v3162 = vadd.f32 0.0, %v3161
      %v3163 = vpop.f32.mrb[0].mxu0
      %v3164 = vpop.f32.mrb[0].mxu0
      %v3165 = vadd.f32 0.0, %v3164
      %v3166 = vpop.f32.mrb[0].mxu0
      %3167 = vmatprep.mubr.bf16.mxu0 0
      %3168 = vmatmul.mubr.bf16.gmra.mrb[0].mxu0 %v2572
      %v3169 = vpop.f32.mrb[0].mxu0
      %v3170 = vadd.f32 0.0, %v3169
      %v3171 = vpop.f32.mrb[0].mxu0
      %v3172 = vpop.f32.mrb[0].mxu0
      %v3173 = vadd.f32 0.0, %v3172
      %v3174 = vpop.f32.mrb[0].mxu0
      %3175 = vmatprep.mubr.bf16.mxu0 0
      %3176 = vmatmul.mubr.bf16.gmra.mrb[0].mxu0 %v2573
      %v3177 = vpop.f32.mrb[0].mxu0
      %v3178 = vadd.f32 0.0, %v3177
      %v3179 = vpop.f32.mrb[0].mxu0
      %v3180 = vpop.f32.mrb[0].mxu0
      %v3181 = vadd.f32 0.0, %v3180
      %v3182 = vpop.f32.mrb[0].mxu0
      %3183 = vmatprep.mubr.bf16.mxu0 0
      %3184 = vmatmul.mubr.bf16.gmra.mrb[0].mxu0 %v2574
      %v3185 = vpop.f32.mrb[0].mxu0
      %v3186 = vadd.f32 0.0, %v3185
      %v3187 = vpop.f32.mrb[0].mxu0
      %v3188 = vpop.f32.mrb[0].mxu0
      %v3189 = vadd.f32 0.0, %v3188
      %v3190 = vpop.f32.mrb[0].mxu0
      %3191 = vmatprep.mubr.bf16.mxu0 0
      %3192 = vmatmul.mubr.bf16.gmra.mrb[0].mxu0 %v2575
      %v3193 = vpop.f32.mrb[0].mxu0
      %v3194 = vadd.f32 0.0, %v3193
      %v3195 = vpop.f32.mrb[0].mxu0
      %v3196 = vpop.f32.mrb[0].mxu0
      %v3197 = vadd.f32 0.0, %v3196
      %v3198 = vpop.f32.mrb[0].mxu0
      %3199 = vmatprep.mubr.bf16.mxu0 0
      %3200 = vmatmul.mubr.bf16.gmra.mrb[0].mxu0 %v2576
      %v3201 = vpop.f32.mrb[0].mxu0
      %v3202 = vadd.f32 0.0, %v3201
      %v3203 = vpop.f32.mrb[0].mxu0
      %v3204 = vpop.f32.mrb[0].mxu0
      %v3205 = vadd.f32 0.0, %v3204
      %v3206 = vpop.f32.mrb[0].mxu0
      %3207 = vmatprep.mubr.bf16.mxu0 0
      %3208 = vmatmul.mubr.bf16.gmra.mrb[0].mxu0 %v2577
      %v3209 = vpop.f32.mrb[0].mxu0
      %v3210 = vadd.f32 0.0, %v3209
      %v3211 = vpop.f32.mrb[0].mxu0
      %v3212 = vpop.f32.mrb[0].mxu0
      %v3213 = vadd.f32 0.0, %v3212
      %v3214 = vpop.f32.mrb[0].mxu0
      %3215 = vmatprep.mubr.bf16.mxu0 0
      %3216 = vmatmul.mubr.bf16.gmra.mrb[0].mxu0 %v2578
      %v3217 = vpop.f32.mrb[0].mxu0
      %v3218 = vadd.f32 0.0, %v3217
      %v3219 = vpop.f32.mrb[0].mxu0
      %v3220 = vpop.f32.mrb[0].mxu0
      %v3221 = vadd.f32 0.0, %v3220
      %v3222 = vpop.f32.mrb[0].mxu0
      %3223 = vmatprep.mubr.bf16.mxu0 0
      %3224 = vmatmul.mubr.bf16.gmra.mrb[0].mxu0 %v2579
      %v3225 = vpop.f32.mrb[0].mxu0
      %v3226 = vadd.f32 0.0, %v3225
      %v3227 = vpop.f32.mrb[0].mxu0
      %v3228 = vpop.f32.mrb[0].mxu0
      %v3229 = vadd.f32 0.0, %v3228
      %v3230 = vpop.f32.mrb[0].mxu0
      %3231 = vmatprep.mubr.bf16.mxu0 0
      %3232 = vmatmul.mubr.bf16.gmra.mrb[0].mxu0 %v2580
      %v3233 = vpop.f32.mrb[0].mxu0
      %v3234 = vadd.f32 0.0, %v3233
      %v3235 = vpop.f32.mrb[0].mxu0
      %v3236 = vpop.f32.mrb[0].mxu0
      %v3237 = vadd.f32 0.0, %v3236
      %v3238 = vpop.f32.mrb[0].mxu0
      %3239 = vmatprep.mubr.bf16.mxu0 0
      %3240 = vmatmul.mubr.bf16.gmra.mrb[0].mxu0 %v2581
      %v3241 = vpop.f32.mrb[0].mxu0
      %v3242 = vadd.f32 0.0, %v3241
      %v3243 = vpop.f32.mrb[0].mxu0
      %v3244 = vpop.f32.mrb[0].mxu0
      %v3245 = vadd.f32 0.0, %v3244
      %v3246 = vpop.f32.mrb[0].mxu0
      %3247 = vmatprep.mubr.bf16.mxu0 0
      %3248 = vmatmul.mubr.bf16.gmra.mrb[0].mxu0 %v2582
      %v3249 = vpop.f32.mrb[0].mxu0
      %v3250 = vadd.f32 0.0, %v3249
      %v3251 = vpop.f32.mrb[0].mxu0
      %v3252 = vpop.f32.mrb[0].mxu0
      %v3253 = vadd.f32 0.0, %v3252
      %v3254 = vpop.f32.mrb[0].mxu0
      %3255 = vmatprep.mubr.bf16.mxu0 0
      %3256 = vmatmul.mubr.bf16.gmra.mrb[0].mxu0 %v2583
      %v3257 = vpop.f32.mrb[0].mxu0
      %v3258 = vadd.f32 0.0, %v3257
      %v3259 = vpop.f32.mrb[0].mxu0
      %v3260 = vpop.f32.mrb[0].mxu0
      %v3261 = vadd.f32 0.0, %v3260
      %v3262 = vpop.f32.mrb[0].mxu0
      %3263 = vmatprep.mubr.bf16.mxu0 0
      %3264 = vmatmul.mubr.bf16.gmra.mrb[0].mxu0 %v2584
      %v3265 = vpop.f32.mrb[0].mxu0
      %v3266 = vadd.f32 0.0, %v3265
      %v3267 = vpop.f32.mrb[0].mxu0
      %v3268 = vpop.f32.mrb[0].mxu0
      %v3269 = vadd.f32 0.0, %v3268
      %v3270 = vpop.f32.mrb[0].mxu0
      %3271 = vdwg.mxu0
      %v3272 = vadd.f32 %v2994, %v3130
      %v3273 = vadd.f32 %v2995, %v3133
      %v3274 = vadd.f32 %v2996, %v3138
      %v3275 = vadd.f32 %v2997, %v3141
      %v3276 = vadd.f32 %v2998, %v3146
      %v3277 = vadd.f32 %v2999, %v3149
      %v3278 = vadd.f32 %v3000, %v3154
      %v3279 = vadd.f32 %v3001, %v3157
      %v3280 = vadd.f32 %v3002, %v3162
      %v3281 = vadd.f32 %v3003, %v3165
      %v3282 = vadd.f32 %v3004, %v3170
      %v3283 = vadd.f32 %v3005, %v3173
      %v3284 = vadd.f32 %v3006, %v3178
      %v3285 = vadd.f32 %v3007, %v3181
      %v3286 = vadd.f32 %v3008, %v3186
      %v3287 = vadd.f32 %v3009, %v3189
      %v3288 = vadd.f32 %v3010, %v3194
      %v3289 = vadd.f32 %v3011, %v3197
      %v3290 = vadd.f32 %v3012, %v3202
      %v3291 = vadd.f32 %v3013, %v3205
      %v3292 = vadd.f32 %v3014, %v3210
      %v3293 = vadd.f32 %v3015, %v3213
      %v3294 = vadd.f32 %v3016, %v3218
      %v3295 = vadd.f32 %v3017, %v3221
      %v3296 = vadd.f32 %v3018, %v3226
      %v3297 = vadd.f32 %v3019, %v3229
      %v3298 = vadd.f32 %v3020, %v3234
      %v3299 = vadd.f32 %v3021, %v3237
      %v3300 = vadd.f32 %v3022, %v3242
      %v3301 = vadd.f32 %v3023, %v3245
      %v3302 = vadd.f32 %v3024, %v3250
      %v3303 = vadd.f32 %v3025, %v3253
      %v3304 = vadd.f32 %v3026, %v3258
      %v3305 = vadd.f32 %v3027, %v3261
      %v3306 = vadd.f32 %v3028, %v3266
      %v3307 = vadd.f32 %v3029, %v3269
      %s3308 = scalar_lea.vmem %s3, 320
      %v3309 = vld [vmem:[%s3308] sm:$0xf]
      %v3310 = vld [vmem:[%s3308 + $0x4] sm:$0xf]
      %v3311 = vld [vmem:[%s3308 + $0x8] sm:$0xf]
      %v3312 = vld [vmem:[%s3308 + $0xc] sm:$0xf]
      %v3313 = vld [vmem:[%s3308 + $0x10] sm:$0xf]
      %v3314 = vld [vmem:[%s3308 + $0x14] sm:$0xf]
      %v3315 = vld [vmem:[%s3308 + $0x18] sm:$0xf]
      %v3316 = vld [vmem:[%s3308 + $0x1c] sm:$0xf]
      %v3317 = vld [vmem:[%s3308 + $0x20] sm:$0xf]
      %v3318 = vld [vmem:[%s3308 + $0x24] sm:$0xf]
      %v3319 = vld [vmem:[%s3308 + $0x28] sm:$0xf]
      %v3320 = vld [vmem:[%s3308 + $0x2c] sm:$0xf]
      %v3321 = vld [vmem:[%s3308 + $0x30] sm:$0xf]
      %v3322 = vld [vmem:[%s3308 + $0x34] sm:$0xf]
      %v3323 = vld [vmem:[%s3308 + $0x38] sm:$0xf]
      %v3324 = vld [vmem:[%s3308 + $0x3c] sm:$0xf]
      %vm3325 = vsmask.f32 7424
      %v3326 = vrot.slane %v2611, 1
      %v3327 = vor.u32 %v2608, %v3326
      %v3328 = vrot.slane %v2619, 1
      %v3329 = vsel %vm3325, %v3327, %v3328
      %v3330 = vor.u32 %v2616, %v3328
      %v3331 = vrot.slane %v2627, 1
      %v3332 = vsel %vm3325, %v3330, %v3331
      %v3333 = vor.u32 %v2624, %v3331
      %v3334 = vrot.slane %v2635, 1
      %v3335 = vsel %vm3325, %v3333, %v3334
      %v3336 = vor.u32 %v2632, %v3334
      %v3337 = vrot.slane %v2643, 1
      %v3338 = vsel %vm3325, %v3336, %v3337
      %v3339 = vor.u32 %v2640, %v3337
      %v3340 = vrot.slane %v2651, 1
      %v3341 = vsel %vm3325, %v3339, %v3340
      %v3342 = vor.u32 %v2648, %v3340
      %v3343 = vrot.slane %v2659, 1
      %v3344 = vsel %vm3325, %v3342, %v3343
      %v3345 = vor.u32 %v2656, %v3343
      %v3346 = vrot.slane %v2667, 1
      %v3347 = vsel %vm3325, %v3345, %v3346
      %v3348 = vor.u32 %v2664, %v3346
      %v3349 = vrot.slane %v2675, 1
      %v3350 = vsel %vm3325, %v3348, %v3349
      %v3351 = vor.u32 %v2672, %v3349
      %v3352 = vrot.slane %v2683, 1
      %v3353 = vsel %vm3325, %v3351, %v3352
      %v3354 = vor.u32 %v2680, %v3352
      %v3355 = vrot.slane %v2691, 1
      %v3356 = vsel %vm3325, %v3354, %v3355
      %v3357 = vor.u32 %v2688, %v3355
      %v3358 = vrot.slane %v2699, 1
      %v3359 = vsel %vm3325, %v3357, %v3358
      %v3360 = vor.u32 %v2696, %v3358
      %v3361 = vrot.slane %v2707, 1
      %v3362 = vsel %vm3325, %v3360, %v3361
      %v3363 = vor.u32 %v2704, %v3361
      %v3364 = vrot.slane %v2715, 1
      %v3365 = vsel %vm3325, %v3363, %v3364
      %v3366 = vor.u32 %v2712, %v3364
      %v3367 = vrot.slane %v2723, 1
      %v3368 = vsel %vm3325, %v3366, %v3367
      %v3369 = vor.u32 %v2720, %v3367
      %v3370 = vrot.slane %v2731, 1
      %v3371 = vsel %vm3325, %v3369, %v3370
      %v3372 = vor.u32 %v2728, %v3370
      %v3373 = vrot.slane %v2739, 1
      %v3374 = vsel %vm3325, %v3372, %v3373
      %v3375 = vor.u32 %v2736, %v3373
      %v3376 = vrot.slane %v2747, 1
      %v3377 = vsel %vm3325, %v3375, %v3376
      %v3378 = vor.u32 %v2744, %v3376
      %v3380 = vshll.u32 %v2585, 16
      %v3382 = vrot.slane %v3380, 1
      %v3383 = vsel %vm3325, %v3378, %v3382
      %v3418 = vunpack.c.l.b16 %v3309
      %v3419 = vunpack.c.l.b16 %v3310
      %v3420 = vunpack.c.l.b16 %v3311
      %v3421 = vunpack.c.l.b16 %v3312
      %v3422 = vunpack.c.l.b16 %v3313
      %v3423 = vunpack.c.l.b16 %v3314
      %v3424 = vunpack.c.l.b16 %v3315
      %v3425 = vunpack.c.l.b16 %v3316
      %v3426 = vunpack.c.l.b16 %v3317
      %v3427 = vunpack.c.l.b16 %v3318
      %v3428 = vunpack.c.l.b16 %v3319
      %v3429 = vunpack.c.l.b16 %v3320
      %v3430 = vunpack.c.l.b16 %v3321
      %v3431 = vunpack.c.l.b16 %v3322
      %v3432 = vunpack.c.l.b16 %v3323
      %v3433 = vunpack.c.l.b16 %v3324
      %v3434 = vpack.c.b16 %v3419, %v3418
      %v3435 = vpack.c.b16 %v3421, %v3420
      %v3436 = vpack.c.b16 %v3423, %v3422
      %v3437 = vpack.c.b16 %v3425, %v3424
      %v3438 = vpack.c.b16 %v3427, %v3426
      %v3439 = vpack.c.b16 %v3429, %v3428
      %v3440 = vpack.c.b16 %v3431, %v3430
      %v3441 = vpack.c.b16 %v3433, %v3432
      %3450 = vmatprep.subr.bf16.mxu0 0
      %3451 = vmatpush1.bf16.msra.mxu0 %v3434
      %3452 = vmatprep.subr.bf16.mxu0 0
      %3453 = vmatpush1.bf16.msra.mxu0 %v3435
      %3454 = vmatprep.subr.bf16.mxu0 0
      %3455 = vmatpush1.bf16.msra.mxu0 %v3436
      %3456 = vmatprep.subr.bf16.mxu0 0
      %3457 = vmatpush1.bf16.msra.mxu0 %v3437
      %3458 = vmatprep.subr.bf16.mxu0 0
      %3459 = vmatpush1.bf16.msra.mxu0 %v3438
      %3460 = vmatprep.subr.bf16.mxu0 0
      %3461 = vmatpush1.bf16.msra.mxu0 %v3439
      %3462 = vmatprep.subr.bf16.mxu0 0
      %3463 = vmatpush1.bf16.msra.mxu0 %v3440
      %3464 = vmatprep.subr.bf16.mxu0 0
      %3465 = vmatpush1.bf16.msra.mxu0 %v3441
      %3466 = vmatprep.subr.bf16.mxu0 0
      %3467 = vmatpush1.bf16.msra.mxu0 0
      %3468 = vmatprep.subr.bf16.mxu0 0
      %3469 = vmatpush1.bf16.msra.mxu0 0
      %3470 = vmatprep.subr.bf16.mxu0 0
      %3471 = vmatpush1.bf16.msra.mxu0 0
      %3472 = vmatprep.subr.bf16.mxu0 0
      %3473 = vmatpush1.bf16.msra.mxu0 0
      %3474 = vmatprep.subr.bf16.mxu0 0
      %3475 = vmatpush1.bf16.msra.mxu0 0
      %3476 = vmatprep.subr.bf16.mxu0 0
      %3477 = vmatpush1.bf16.msra.mxu0 0
      %3478 = vmatprep.subr.bf16.mxu0 0
      %3479 = vmatpush1.bf16.msra.mxu0 0
      %3480 = vmatprep.subr.bf16.mxu0 0
      %3481 = vmatpush1.bf16.msra.mxu0 0
      %3482 = vmatprep.mubr.bf16.mxu0 0
      %3483 = vmatmul.mubr.bf16.gmra.mrb[0].mxu0 %v3329
      %v3484 = vpop.f32.mrb[0].mxu0
      %v3485 = vadd.f32 0.0, %v3484
      %v3486 = vpop.f32.mrb[0].mxu0
      %v3487 = vpop.f32.mrb[0].mxu0
      %v3488 = vadd.f32 0.0, %v3487
      %v3489 = vpop.f32.mrb[0].mxu0
      %3490 = vmatprep.mubr.bf16.mxu0 0
      %3491 = vmatmul.mubr.bf16.gmra.mrb[0].mxu0 %v3332
      %v3492 = vpop.f32.mrb[0].mxu0
      %v3493 = vadd.f32 0.0, %v3492
      %v3494 = vpop.f32.mrb[0].mxu0
      %v3495 = vpop.f32.mrb[0].mxu0
      %v3496 = vadd.f32 0.0, %v3495
      %v3497 = vpop.f32.mrb[0].mxu0
      %3498 = vmatprep.mubr.bf16.mxu0 0
      %3499 = vmatmul.mubr.bf16.gmra.mrb[0].mxu0 %v3335
      %v3500 = vpop.f32.mrb[0].mxu0
      %v3501 = vadd.f32 0.0, %v3500
      %v3502 = vpop.f32.mrb[0].mxu0
      %v3503 = vpop.f32.mrb[0].mxu0
      %v3504 = vadd.f32 0.0, %v3503
      %v3505 = vpop.f32.mrb[0].mxu0
      %3506 = vmatprep.mubr.bf16.mxu0 0
      %3507 = vmatmul.mubr.bf16.gmra.mrb[0].mxu0 %v3338
      %v3508 = vpop.f32.mrb[0].mxu0
      %v3509 = vadd.f32 0.0, %v3508
      %v3510 = vpop.f32.mrb[0].mxu0
      %v3511 = vpop.f32.mrb[0].mxu0
      %v3512 = vadd.f32 0.0, %v3511
      %v3513 = vpop.f32.mrb[0].mxu0
      %3514 = vmatprep.mubr.bf16.mxu0 0
      %3515 = vmatmul.mubr.bf16.gmra.mrb[0].mxu0 %v3341
      %v3516 = vpop.f32.mrb[0].mxu0
      %v3517 = vadd.f32 0.0, %v3516
      %v3518 = vpop.f32.mrb[0].mxu0
      %v3519 = vpop.f32.mrb[0].mxu0
      %v3520 = vadd.f32 0.0, %v3519
      %v3521 = vpop.f32.mrb[0].mxu0
      %3522 = vmatprep.mubr.bf16.mxu0 0
      %3523 = vmatmul.mubr.bf16.gmra.mrb[0].mxu0 %v3344
      %v3524 = vpop.f32.mrb[0].mxu0
      %v3525 = vadd.f32 0.0, %v3524
      %v3526 = vpop.f32.mrb[0].mxu0
      %v3527 = vpop.f32.mrb[0].mxu0
      %v3528 = vadd.f32 0.0, %v3527
      %v3529 = vpop.f32.mrb[0].mxu0
      %3530 = vmatprep.mubr.bf16.mxu0 0
      %3531 = vmatmul.mubr.bf16.gmra.mrb[0].mxu0 %v3347
      %v3532 = vpop.f32.mrb[0].mxu0
      %v3533 = vadd.f32 0.0, %v3532
      %v3534 = vpop.f32.mrb[0].mxu0
      %v3535 = vpop.f32.mrb[0].mxu0
      %v3536 = vadd.f32 0.0, %v3535
      %v3537 = vpop.f32.mrb[0].mxu0
      %3538 = vmatprep.mubr.bf16.mxu0 0
      %3539 = vmatmul.mubr.bf16.gmra.mrb[0].mxu0 %v3350
      %v3540 = vpop.f32.mrb[0].mxu0
      %v3541 = vadd.f32 0.0, %v3540
      %v3542 = vpop.f32.mrb[0].mxu0
      %v3543 = vpop.f32.mrb[0].mxu0
      %v3544 = vadd.f32 0.0, %v3543
      %v3545 = vpop.f32.mrb[0].mxu0
      %3546 = vmatprep.mubr.bf16.mxu0 0
      %3547 = vmatmul.mubr.bf16.gmra.mrb[0].mxu0 %v3353
      %v3548 = vpop.f32.mrb[0].mxu0
      %v3549 = vadd.f32 0.0, %v3548
      %v3550 = vpop.f32.mrb[0].mxu0
      %v3551 = vpop.f32.mrb[0].mxu0
      %v3552 = vadd.f32 0.0, %v3551
      %v3553 = vpop.f32.mrb[0].mxu0
      %3554 = vmatprep.mubr.bf16.mxu0 0
      %3555 = vmatmul.mubr.bf16.gmra.mrb[0].mxu0 %v3356
      %v3556 = vpop.f32.mrb[0].mxu0
      %v3557 = vadd.f32 0.0, %v3556
      %v3558 = vpop.f32.mrb[0].mxu0
      %v3559 = vpop.f32.mrb[0].mxu0
      %v3560 = vadd.f32 0.0, %v3559
      %v3561 = vpop.f32.mrb[0].mxu0
      %3562 = vmatprep.mubr.bf16.mxu0 0
      %3563 = vmatmul.mubr.bf16.gmra.mrb[0].mxu0 %v3359
      %v3564 = vpop.f32.mrb[0].mxu0
      %v3565 = vadd.f32 0.0, %v3564
      %v3566 = vpop.f32.mrb[0].mxu0
      %v3567 = vpop.f32.mrb[0].mxu0
      %v3568 = vadd.f32 0.0, %v3567
      %v3569 = vpop.f32.mrb[0].mxu0
      %3570 = vmatprep.mubr.bf16.mxu0 0
      %3571 = vmatmul.mubr.bf16.gmra.mrb[0].mxu0 %v3362
      %v3572 = vpop.f32.mrb[0].mxu0
      %v3573 = vadd.f32 0.0, %v3572
      %v3574 = vpop.f32.mrb[0].mxu0
      %v3575 = vpop.f32.mrb[0].mxu0
      %v3576 = vadd.f32 0.0, %v3575
      %v3577 = vpop.f32.mrb[0].mxu0
      %3578 = vmatprep.mubr.bf16.mxu0 0
      %3579 = vmatmul.mubr.bf16.gmra.mrb[0].mxu0 %v3365
      %v3580 = vpop.f32.mrb[0].mxu0
      %v3581 = vadd.f32 0.0, %v3580
      %v3582 = vpop.f32.mrb[0].mxu0
      %v3583 = vpop.f32.mrb[0].mxu0
      %v3584 = vadd.f32 0.0, %v3583
      %v3585 = vpop.f32.mrb[0].mxu0
      %3586 = vmatprep.mubr.bf16.mxu0 0
      %3587 = vmatmul.mubr.bf16.gmra.mrb[0].mxu0 %v3368
      %v3588 = vpop.f32.mrb[0].mxu0
      %v3589 = vadd.f32 0.0, %v3588
      %v3590 = vpop.f32.mrb[0].mxu0
      %v3591 = vpop.f32.mrb[0].mxu0
      %v3592 = vadd.f32 0.0, %v3591
      %v3593 = vpop.f32.mrb[0].mxu0
      %3594 = vmatprep.mubr.bf16.mxu0 0
      %3595 = vmatmul.mubr.bf16.gmra.mrb[0].mxu0 %v3371
      %v3596 = vpop.f32.mrb[0].mxu0
      %v3597 = vadd.f32 0.0, %v3596
      %v3598 = vpop.f32.mrb[0].mxu0
      %v3599 = vpop.f32.mrb[0].mxu0
      %v3600 = vadd.f32 0.0, %v3599
      %v3601 = vpop.f32.mrb[0].mxu0
      %3602 = vmatprep.mubr.bf16.mxu0 0
      %3603 = vmatmul.mubr.bf16.gmra.mrb[0].mxu0 %v3374
      %v3604 = vpop.f32.mrb[0].mxu0
      %v3605 = vadd.f32 0.0, %v3604
      %v3606 = vpop.f32.mrb[0].mxu0
      %v3607 = vpop.f32.mrb[0].mxu0
      %v3608 = vadd.f32 0.0, %v3607
      %v3609 = vpop.f32.mrb[0].mxu0
      %3610 = vmatprep.mubr.bf16.mxu0 0
      %3611 = vmatmul.mubr.bf16.gmra.mrb[0].mxu0 %v3377
      %v3612 = vpop.f32.mrb[0].mxu0
      %v3613 = vadd.f32 0.0, %v3612
      %v3614 = vpop.f32.mrb[0].mxu0
      %v3615 = vpop.f32.mrb[0].mxu0
      %v3616 = vadd.f32 0.0, %v3615
      %v3617 = vpop.f32.mrb[0].mxu0
      %3618 = vmatprep.mubr.bf16.mxu0 0
      %3619 = vmatmul.mubr.bf16.gmra.mrb[0].mxu0 %v3383
      %v3620 = vpop.f32.mrb[0].mxu0
      %v3621 = vadd.f32 0.0, %v3620
      %v3622 = vpop.f32.mrb[0].mxu0
      %v3623 = vpop.f32.mrb[0].mxu0
      %v3624 = vadd.f32 0.0, %v3623
      %v3625 = vpop.f32.mrb[0].mxu0
      %3626 = vdwg.mxu0
      %v3627 = vadd.f32 %v3272, %v3485
      %v3628 = vadd.f32 %v3273, %v3488
      %v3629 = vadd.f32 %v3274, %v3493
      %v3630 = vadd.f32 %v3275, %v3496
      %v3631 = vadd.f32 %v3276, %v3501
      %v3632 = vadd.f32 %v3277, %v3504
      %v3633 = vadd.f32 %v3278, %v3509
      %v3634 = vadd.f32 %v3279, %v3512
      %v3635 = vadd.f32 %v3280, %v3517
      %v3636 = vadd.f32 %v3281, %v3520
      %v3637 = vadd.f32 %v3282, %v3525
      %v3638 = vadd.f32 %v3283, %v3528
      %v3639 = vadd.f32 %v3284, %v3533
      %v3640 = vadd.f32 %v3285, %v3536
      %v3641 = vadd.f32 %v3286, %v3541
      %v3642 = vadd.f32 %v3287, %v3544
      %v3643 = vadd.f32 %v3288, %v3549
      %v3644 = vadd.f32 %v3289, %v3552
      %v3645 = vadd.f32 %v3290, %v3557
      %v3646 = vadd.f32 %v3291, %v3560
      %v3647 = vadd.f32 %v3292, %v3565
      %v3648 = vadd.f32 %v3293, %v3568
      %v3649 = vadd.f32 %v3294, %v3573
      %v3650 = vadd.f32 %v3295, %v3576
      %v3651 = vadd.f32 %v3296, %v3581
      %v3652 = vadd.f32 %v3297, %v3584
      %v3653 = vadd.f32 %v3298, %v3589
      %v3654 = vadd.f32 %v3299, %v3592
      %v3655 = vadd.f32 %v3300, %v3597
      %v3656 = vadd.f32 %v3301, %v3600
      %v3657 = vadd.f32 %v3302, %v3605
      %v3658 = vadd.f32 %v3303, %v3608
      %v3659 = vadd.f32 %v3304, %v3613
      %v3660 = vadd.f32 %v3305, %v3616
      %v3661 = vadd.f32 %v3306, %v3621
      %v3662 = vadd.f32 %v3307, %v3624
      %v3663 = vld [vmem:[#allocation2 + $0x18] sm:$0xff]
      %v3664 = vld [vmem:[#allocation2 + $0x20] sm:$0xff]
      %v3665 = vld [vmem:[#allocation2 + $0x28] sm:$0xff]
      %v3666 = vld [vmem:[#allocation2 + $0x30] sm:$0xff]
      %v3667 = vld [vmem:[#allocation2 + $0x38] sm:$0xff]
      %v3668 = vld [vmem:[#allocation2 + $0x40] sm:$0xff]
      %v3669 = vld [vmem:[#allocation2 + $0x48] sm:$0xff]
      %v3670 = vld [vmem:[#allocation2 + $0x50] sm:$0xff]
      %v3671 = vld [vmem:[#allocation2 + $0x58] sm:$0xff]
      %v3672 = vld [vmem:[#allocation2 + $0x60] sm:$0xff]
      %v3673 = vld [vmem:[#allocation2 + $0x68] sm:$0xff]
      %v3674 = vld [vmem:[#allocation2 + $0x70] sm:$0xff]
      %v3675 = vld [vmem:[#allocation2 + $0x78] sm:$0xff]
      %v3676 = vld [vmem:[#allocation2 + $0x80] sm:$0xff]
      %v3677 = vld [vmem:[#allocation2 + $0x88] sm:$0xff]
      %v3678 = vld [vmem:[#allocation2 + $0x90] sm:$0xff]
      %v3679 = vld [vmem:[#allocation2 + $0x98] sm:$0xff]
      %v3680 = vld [vmem:[#allocation2 + $0xa0] sm:$0xff]
      %v3681 = vld [vmem:[#allocation2 + $0xa8] sm:$0x3]
      %s3682 = scalar_lea.vmem %s3, 384
      %v3683 = vld [vmem:[%s3682] sm:$0xf]
      %v3684 = vld [vmem:[%s3682 + $0x4] sm:$0xf]
      %v3685 = vld [vmem:[%s3682 + $0x8] sm:$0xf]
      %v3686 = vld [vmem:[%s3682 + $0xc] sm:$0xf]
      %v3687 = vld [vmem:[%s3682 + $0x10] sm:$0xf]
      %v3688 = vld [vmem:[%s3682 + $0x14] sm:$0xf]
      %v3689 = vld [vmem:[%s3682 + $0x18] sm:$0xf]
      %v3690 = vld [vmem:[%s3682 + $0x1c] sm:$0xf]
      %v3691 = vld [vmem:[%s3682 + $0x20] sm:$0xf]
      %v3692 = vld [vmem:[%s3682 + $0x24] sm:$0xf]
      %v3693 = vld [vmem:[%s3682 + $0x28] sm:$0xf]
      %v3694 = vld [vmem:[%s3682 + $0x2c] sm:$0xf]
      %v3695 = vld [vmem:[%s3682 + $0x30] sm:$0xf]
      %v3696 = vld [vmem:[%s3682 + $0x34] sm:$0xf]
      %v3697 = vld [vmem:[%s3682 + $0x38] sm:$0xf]
      %v3698 = vld [vmem:[%s3682 + $0x3c] sm:$0xf]
      %v3700 = vshrl.u32 %v3663, 16
      %v3702 = vshll.u32 %v3663, 16
      %v3704 = vrot.slane %v3702, 1
      %v3705 = vor.u32 %v3700, %v3704
      %v3707 = vshll.u32 %v3664, 16
      %v3709 = vrot.slane %v3707, 1
      %v3710 = vsel %vm3325, %v3705, %v3709
      %v3711 = vshrl.u32 %v3664, 16
      %v3713 = vor.u32 %v3711, %v3709
      %v3715 = vshll.u32 %v3665, 16
      %v3717 = vrot.slane %v3715, 1
      %v3718 = vsel %vm3325, %v3713, %v3717
      %v3719 = vshrl.u32 %v3665, 16
      %v3721 = vor.u32 %v3719, %v3717
      %v3723 = vshll.u32 %v3666, 16
      %v3725 = vrot.slane %v3723, 1
      %v3726 = vsel %vm3325, %v3721, %v3725
      %v3727 = vshrl.u32 %v3666, 16
      %v3729 = vor.u32 %v3727, %v3725
      %v3731 = vshll.u32 %v3667, 16
      %v3733 = vrot.slane %v3731, 1
      %v3734 = vsel %vm3325, %v3729, %v3733
      %v3735 = vshrl.u32 %v3667, 16
      %v3737 = vor.u32 %v3735, %v3733
      %v3739 = vshll.u32 %v3668, 16
      %v3741 = vrot.slane %v3739, 1
      %v3742 = vsel %vm3325, %v3737, %v3741
      %v3743 = vshrl.u32 %v3668, 16
      %v3745 = vor.u32 %v3743, %v3741
      %v3747 = vshll.u32 %v3669, 16
      %v3749 = vrot.slane %v3747, 1
      %v3750 = vsel %vm3325, %v3745, %v3749
      %v3751 = vshrl.u32 %v3669, 16
      %v3753 = vor.u32 %v3751, %v3749
      %v3755 = vshll.u32 %v3670, 16
      %v3757 = vrot.slane %v3755, 1
      %v3758 = vsel %vm3325, %v3753, %v3757
      %v3759 = vshrl.u32 %v3670, 16
      %v3761 = vor.u32 %v3759, %v3757
      %v3763 = vshll.u32 %v3671, 16
      %v3765 = vrot.slane %v3763, 1
      %v3766 = vsel %vm3325, %v3761, %v3765
      %v3767 = vshrl.u32 %v3671, 16
      %v3769 = vor.u32 %v3767, %v3765
      %v3771 = vshll.u32 %v3672, 16
      %v3773 = vrot.slane %v3771, 1
      %v3774 = vsel %vm3325, %v3769, %v3773
      %v3775 = vshrl.u32 %v3672, 16
      %v3777 = vor.u32 %v3775, %v3773
      %v3779 = vshll.u32 %v3673, 16
      %v3781 = vrot.slane %v3779, 1
      %v3782 = vsel %vm3325, %v3777, %v3781
      %v3783 = vshrl.u32 %v3673, 16
      %v3785 = vor.u32 %v3783, %v3781
      %v3787 = vshll.u32 %v3674, 16
      %v3789 = vrot.slane %v3787, 1
      %v3790 = vsel %vm3325, %v3785, %v3789
      %v3791 = vshrl.u32 %v3674, 16
      %v3793 = vor.u32 %v3791, %v3789
      %v3795 = vshll.u32 %v3675, 16
      %v3797 = vrot.slane %v3795, 1
      %v3798 = vsel %vm3325, %v3793, %v3797
      %v3799 = vshrl.u32 %v3675, 16
      %v3801 = vor.u32 %v3799, %v3797
      %v3803 = vshll.u32 %v3676, 16
      %v3805 = vrot.slane %v3803, 1
      %v3806 = vsel %vm3325, %v3801, %v3805
      %v3807 = vshrl.u32 %v3676, 16
      %v3809 = vor.u32 %v3807, %v3805
      %v3811 = vshll.u32 %v3677, 16
      %v3813 = vrot.slane %v3811, 1
      %v3814 = vsel %vm3325, %v3809, %v3813
      %v3815 = vshrl.u32 %v3677, 16
      %v3817 = vor.u32 %v3815, %v3813
      %v3819 = vshll.u32 %v3678, 16
      %v3821 = vrot.slane %v3819, 1
      %v3822 = vsel %vm3325, %v3817, %v3821
      %v3823 = vshrl.u32 %v3678, 16
      %v3825 = vor.u32 %v3823, %v3821
      %v3827 = vshll.u32 %v3679, 16
      %v3829 = vrot.slane %v3827, 1
      %v3830 = vsel %vm3325, %v3825, %v3829
      %v3831 = vshrl.u32 %v3679, 16
      %v3833 = vor.u32 %v3831, %v3829
      %v3835 = vshll.u32 %v3680, 16
      %v3837 = vrot.slane %v3835, 1
      %v3838 = vsel %vm3325, %v3833, %v3837
      %v3839 = vshrl.u32 %v3680, 16
      %v3841 = vor.u32 %v3839, %v3837
      %v3843 = vshll.u32 %v3681, 16
      %v3845 = vrot.slane %v3843, 1
      %v3846 = vsel %vm3325, %v3841, %v3845
      %v3881 = vunpack.c.l.b16 %v3683
      %v3882 = vunpack.c.l.b16 %v3684
      %v3883 = vunpack.c.l.b16 %v3685
      %v3884 = vunpack.c.l.b16 %v3686
      %v3885 = vunpack.c.l.b16 %v3687
      %v3886 = vunpack.c.l.b16 %v3688
      %v3887 = vunpack.c.l.b16 %v3689
      %v3888 = vunpack.c.l.b16 %v3690
      %v3889 = vunpack.c.l.b16 %v3691
      %v3890 = vunpack.c.l.b16 %v3692
      %v3891 = vunpack.c.l.b16 %v3693
      %v3892 = vunpack.c.l.b16 %v3694
      %v3893 = vunpack.c.l.b16 %v3695
      %v3894 = vunpack.c.l.b16 %v3696
      %v3895 = vunpack.c.l.b16 %v3697
      %v3896 = vunpack.c.l.b16 %v3698
      %v3897 = vpack.c.b16 %v3882, %v3881
      %v3898 = vpack.c.b16 %v3884, %v3883
      %v3899 = vpack.c.b16 %v3886, %v3885
      %v3900 = vpack.c.b16 %v3888, %v3887
      %v3901 = vpack.c.b16 %v3890, %v3889
      %v3902 = vpack.c.b16 %v3892, %v3891
      %v3903 = vpack.c.b16 %v3894, %v3893
      %v3904 = vpack.c.b16 %v3896, %v3895
      %3913 = vmatprep.subr.bf16.mxu0 0
      %3914 = vmatpush1.bf16.msra.mxu0 %v3897
      %3915 = vmatprep.subr.bf16.mxu0 0
      %3916 = vmatpush1.bf16.msra.mxu0 %v3898
      %3917 = vmatprep.subr.bf16.mxu0 0
      %3918 = vmatpush1.bf16.msra.mxu0 %v3899
      %3919 = vmatprep.subr.bf16.mxu0 0
      %3920 = vmatpush1.bf16.msra.mxu0 %v3900
      %3921 = vmatprep.subr.bf16.mxu0 0
      %3922 = vmatpush1.bf16.msra.mxu0 %v3901
      %3923 = vmatprep.subr.bf16.mxu0 0
      %3924 = vmatpush1.bf16.msra.mxu0 %v3902
      %3925 = vmatprep.subr.bf16.mxu0 0
      %3926 = vmatpush1.bf16.msra.mxu0 %v3903
      %3927 = vmatprep.subr.bf16.mxu0 0
      %3928 = vmatpush1.bf16.msra.mxu0 %v3904
      %3929 = vmatprep.subr.bf16.mxu0 0
      %3930 = vmatpush1.bf16.msra.mxu0 0
      %3931 = vmatprep.subr.bf16.mxu0 0
      %3932 = vmatpush1.bf16.msra.mxu0 0
      %3933 = vmatprep.subr.bf16.mxu0 0
      %3934 = vmatpush1.bf16.msra.mxu0 0
      %3935 = vmatprep.subr.bf16.mxu0 0
      %3936 = vmatpush1.bf16.msra.mxu0 0
      %3937 = vmatprep.subr.bf16.mxu0 0
      %3938 = vmatpush1.bf16.msra.mxu0 0
      %3939 = vmatprep.subr.bf16.mxu0 0
      %3940 = vmatpush1.bf16.msra.mxu0 0
      %3941 = vmatprep.subr.bf16.mxu0 0
      %3942 = vmatpush1.bf16.msra.mxu0 0
      %3943 = vmatprep.subr.bf16.mxu0 0
      %3944 = vmatpush1.bf16.msra.mxu0 0
      %3945 = vmatprep.mubr.bf16.mxu0 0
      %3946 = vmatmul.mubr.bf16.gmra.mrb[0].mxu0 %v3710
      %v3947 = vpop.f32.mrb[0].mxu0
      %v3948 = vadd.f32 0.0, %v3947
      %v3949 = vpop.f32.mrb[0].mxu0
      %v3950 = vpop.f32.mrb[0].mxu0
      %v3951 = vadd.f32 0.0, %v3950
      %v3952 = vpop.f32.mrb[0].mxu0
      %3953 = vmatprep.mubr.bf16.mxu0 0
      %3954 = vmatmul.mubr.bf16.gmra.mrb[0].mxu0 %v3718
      %v3955 = vpop.f32.mrb[0].mxu0
      %v3956 = vadd.f32 0.0, %v3955
      %v3957 = vpop.f32.mrb[0].mxu0
      %v3958 = vpop.f32.mrb[0].mxu0
      %v3959 = vadd.f32 0.0, %v3958
      %v3960 = vpop.f32.mrb[0].mxu0
      %3961 = vmatprep.mubr.bf16.mxu0 0
      %3962 = vmatmul.mubr.bf16.gmra.mrb[0].mxu0 %v3726
      %v3963 = vpop.f32.mrb[0].mxu0
      %v3964 = vadd.f32 0.0, %v3963
      %v3965 = vpop.f32.mrb[0].mxu0
      %v3966 = vpop.f32.mrb[0].mxu0
      %v3967 = vadd.f32 0.0, %v3966
      %v3968 = vpop.f32.mrb[0].mxu0
      %3969 = vmatprep.mubr.bf16.mxu0 0
      %3970 = vmatmul.mubr.bf16.gmra.mrb[0].mxu0 %v3734
      %v3971 = vpop.f32.mrb[0].mxu0
      %v3972 = vadd.f32 0.0, %v3971
      %v3973 = vpop.f32.mrb[0].mxu0
      %v3974 = vpop.f32.mrb[0].mxu0
      %v3975 = vadd.f32 0.0, %v3974
      %v3976 = vpop.f32.mrb[0].mxu0
      %3977 = vmatprep.mubr.bf16.mxu0 0
      %3978 = vmatmul.mubr.bf16.gmra.mrb[0].mxu0 %v3742
      %v3979 = vpop.f32.mrb[0].mxu0
      %v3980 = vadd.f32 0.0, %v3979
      %v3981 = vpop.f32.mrb[0].mxu0
      %v3982 = vpop.f32.mrb[0].mxu0
      %v3983 = vadd.f32 0.0, %v3982
      %v3984 = vpop.f32.mrb[0].mxu0
      %3985 = vmatprep.mubr.bf16.mxu0 0
      %3986 = vmatmul.mubr.bf16.gmra.mrb[0].mxu0 %v3750
      %v3987 = vpop.f32.mrb[0].mxu0
      %v3988 = vadd.f32 0.0, %v3987
      %v3989 = vpop.f32.mrb[0].mxu0
      %v3990 = vpop.f32.mrb[0].mxu0
      %v3991 = vadd.f32 0.0, %v3990
      %v3992 = vpop.f32.mrb[0].mxu0
      %3993 = vmatprep.mubr.bf16.mxu0 0
      %3994 = vmatmul.mubr.bf16.gmra.mrb[0].mxu0 %v3758
      %v3995 = vpop.f32.mrb[0].mxu0
      %v3996 = vadd.f32 0.0, %v3995
      %v3997 = vpop.f32.mrb[0].mxu0
      %v3998 = vpop.f32.mrb[0].mxu0
      %v3999 = vadd.f32 0.0, %v3998
      %v4000 = vpop.f32.mrb[0].mxu0
      %4001 = vmatprep.mubr.bf16.mxu0 0
      %4002 = vmatmul.mubr.bf16.gmra.mrb[0].mxu0 %v3766
      %v4003 = vpop.f32.mrb[0].mxu0
      %v4004 = vadd.f32 0.0, %v4003
      %v4005 = vpop.f32.mrb[0].mxu0
      %v4006 = vpop.f32.mrb[0].mxu0
      %v4007 = vadd.f32 0.0, %v4006
      %v4008 = vpop.f32.mrb[0].mxu0
      %4009 = vmatprep.mubr.bf16.mxu0 0
      %4010 = vmatmul.mubr.bf16.gmra.mrb[0].mxu0 %v3774
      %v4011 = vpop.f32.mrb[0].mxu0
      %v4012 = vadd.f32 0.0, %v4011
      %v4013 = vpop.f32.mrb[0].mxu0
      %v4014 = vpop.f32.mrb[0].mxu0
      %v4015 = vadd.f32 0.0, %v4014
      %v4016 = vpop.f32.mrb[0].mxu0
      %4017 = vmatprep.mubr.bf16.mxu0 0
      %4018 = vmatmul.mubr.bf16.gmra.mrb[0].mxu0 %v3782
      %v4019 = vpop.f32.mrb[0].mxu0
      %v4020 = vadd.f32 0.0, %v4019
      %v4021 = vpop.f32.mrb[0].mxu0
      %v4022 = vpop.f32.mrb[0].mxu0
      %v4023 = vadd.f32 0.0, %v4022
      %v4024 = vpop.f32.mrb[0].mxu0
      %4025 = vmatprep.mubr.bf16.mxu0 0
      %4026 = vmatmul.mubr.bf16.gmra.mrb[0].mxu0 %v3790
      %v4027 = vpop.f32.mrb[0].mxu0
      %v4028 = vadd.f32 0.0, %v4027
      %v4029 = vpop.f32.mrb[0].mxu0
      %v4030 = vpop.f32.mrb[0].mxu0
      %v4031 = vadd.f32 0.0, %v4030
      %v4032 = vpop.f32.mrb[0].mxu0
      %4033 = vmatprep.mubr.bf16.mxu0 0
      %4034 = vmatmul.mubr.bf16.gmra.mrb[0].mxu0 %v3798
      %v4035 = vpop.f32.mrb[0].mxu0
      %v4036 = vadd.f32 0.0, %v4035
      %v4037 = vpop.f32.mrb[0].mxu0
      %v4038 = vpop.f32.mrb[0].mxu0
      %v4039 = vadd.f32 0.0, %v4038
      %v4040 = vpop.f32.mrb[0].mxu0
      %4041 = vmatprep.mubr.bf16.mxu0 0
      %4042 = vmatmul.mubr.bf16.gmra.mrb[0].mxu0 %v3806
      %v4043 = vpop.f32.mrb[0].mxu0
      %v4044 = vadd.f32 0.0, %v4043
      %v4045 = vpop.f32.mrb[0].mxu0
      %v4046 = vpop.f32.mrb[0].mxu0
      %v4047 = vadd.f32 0.0, %v4046
      %v4048 = vpop.f32.mrb[0].mxu0
      %4049 = vmatprep.mubr.bf16.mxu0 0
      %4050 = vmatmul.mubr.bf16.gmra.mrb[0].mxu0 %v3814
      %v4051 = vpop.f32.mrb[0].mxu0
      %v4052 = vadd.f32 0.0, %v4051
      %v4053 = vpop.f32.mrb[0].mxu0
      %v4054 = vpop.f32.mrb[0].mxu0
      %v4055 = vadd.f32 0.0, %v4054
      %v4056 = vpop.f32.mrb[0].mxu0
      %4057 = vmatprep.mubr.bf16.mxu0 0
      %4058 = vmatmul.mubr.bf16.gmra.mrb[0].mxu0 %v3822
      %v4059 = vpop.f32.mrb[0].mxu0
      %v4060 = vadd.f32 0.0, %v4059
      %v4061 = vpop.f32.mrb[0].mxu0
      %v4062 = vpop.f32.mrb[0].mxu0
      %v4063 = vadd.f32 0.0, %v4062
      %v4064 = vpop.f32.mrb[0].mxu0
      %4065 = vmatprep.mubr.bf16.mxu0 0
      %4066 = vmatmul.mubr.bf16.gmra.mrb[0].mxu0 %v3830
      %v4067 = vpop.f32.mrb[0].mxu0
      %v4068 = vadd.f32 0.0, %v4067
      %v4069 = vpop.f32.mrb[0].mxu0
      %v4070 = vpop.f32.mrb[0].mxu0
      %v4071 = vadd.f32 0.0, %v4070
      %v4072 = vpop.f32.mrb[0].mxu0
      %4073 = vmatprep.mubr.bf16.mxu0 0
      %4074 = vmatmul.mubr.bf16.gmra.mrb[0].mxu0 %v3838
      %v4075 = vpop.f32.mrb[0].mxu0
      %v4076 = vadd.f32 0.0, %v4075
      %v4077 = vpop.f32.mrb[0].mxu0
      %v4078 = vpop.f32.mrb[0].mxu0
      %v4079 = vadd.f32 0.0, %v4078
      %v4080 = vpop.f32.mrb[0].mxu0
      %4081 = vmatprep.mubr.bf16.mxu0 0
      %4082 = vmatmul.mubr.bf16.gmra.mrb[0].mxu0 %v3846
      %v4083 = vpop.f32.mrb[0].mxu0
      %v4084 = vadd.f32 0.0, %v4083
      %v4085 = vpop.f32.mrb[0].mxu0
      %v4086 = vpop.f32.mrb[0].mxu0
      %v4087 = vadd.f32 0.0, %v4086
      %v4088 = vpop.f32.mrb[0].mxu0
      %4089 = vdwg.mxu0
      %v4090 = vadd.f32 %v3627, %v3948
      %v4091 = vadd.f32 %v3628, %v3951
      %v4092 = vadd.f32 %v3629, %v3956
      %v4093 = vadd.f32 %v3630, %v3959
      %v4094 = vadd.f32 %v3631, %v3964
      %v4095 = vadd.f32 %v3632, %v3967
      %v4096 = vadd.f32 %v3633, %v3972
      %v4097 = vadd.f32 %v3634, %v3975
      %v4098 = vadd.f32 %v3635, %v3980
      %v4099 = vadd.f32 %v3636, %v3983
      %v4100 = vadd.f32 %v3637, %v3988
      %v4101 = vadd.f32 %v3638, %v3991
      %v4102 = vadd.f32 %v3639, %v3996
      %v4103 = vadd.f32 %v3640, %v3999
      %v4104 = vadd.f32 %v3641, %v4004
      %v4105 = vadd.f32 %v3642, %v4007
      %v4106 = vadd.f32 %v3643, %v4012
      %v4107 = vadd.f32 %v3644, %v4015
      %v4108 = vadd.f32 %v3645, %v4020
      %v4109 = vadd.f32 %v3646, %v4023
      %v4110 = vadd.f32 %v3647, %v4028
      %v4111 = vadd.f32 %v3648, %v4031
      %v4112 = vadd.f32 %v3649, %v4036
      %v4113 = vadd.f32 %v3650, %v4039
      %v4114 = vadd.f32 %v3651, %v4044
      %v4115 = vadd.f32 %v3652, %v4047
      %v4116 = vadd.f32 %v3653, %v4052
      %v4117 = vadd.f32 %v3654, %v4055
      %v4118 = vadd.f32 %v3655, %v4060
      %v4119 = vadd.f32 %v3656, %v4063
      %v4120 = vadd.f32 %v3657, %v4068
      %v4121 = vadd.f32 %v3658, %v4071
      %v4122 = vadd.f32 %v3659, %v4076
      %v4123 = vadd.f32 %v3660, %v4079
      %v4124 = vadd.f32 %v3661, %v4084
      %v4125 = vadd.f32 %v3662, %v4087
      %s4126 = scalar_lea.vmem %s3, 448
      %v4127 = vld [vmem:[%s4126] sm:$0xf]
      %v4128 = vld [vmem:[%s4126 + $0x4] sm:$0xf]
      %v4129 = vld [vmem:[%s4126 + $0x8] sm:$0xf]
      %v4130 = vld [vmem:[%s4126 + $0xc] sm:$0xf]
      %v4131 = vld [vmem:[%s4126 + $0x10] sm:$0xf]
      %v4132 = vld [vmem:[%s4126 + $0x14] sm:$0xf]
      %v4133 = vld [vmem:[%s4126 + $0x18] sm:$0xf]
      %v4134 = vld [vmem:[%s4126 + $0x1c] sm:$0xf]
      %v4135 = vld [vmem:[%s4126 + $0x20] sm:$0xf]
      %v4136 = vld [vmem:[%s4126 + $0x24] sm:$0xf]
      %v4137 = vld [vmem:[%s4126 + $0x28] sm:$0xf]
      %v4138 = vld [vmem:[%s4126 + $0x2c] sm:$0xf]
      %v4139 = vld [vmem:[%s4126 + $0x30] sm:$0xf]
      %v4140 = vld [vmem:[%s4126 + $0x34] sm:$0xf]
      %v4141 = vld [vmem:[%s4126 + $0x38] sm:$0xf]
      %v4142 = vld [vmem:[%s4126 + $0x3c] sm:$0xf]
      %vm4162 = vcmask 1046528
      %v4163 = vrot.slane %v3663, 1
      %v4164 = vrot.slane %v3664, 1
      %v4165 = vsel %vm4162, %v4163, %v4164
      %v4166 = vrot.slane %v3665, 1
      %v4167 = vsel %vm4162, %v4164, %v4166
      %v4168 = vrot.slane %v3666, 1
      %v4169 = vsel %vm4162, %v4166, %v4168
      %v4170 = vrot.slane %v3667, 1
      %v4171 = vsel %vm4162, %v4168, %v4170
      %v4172 = vrot.slane %v3668, 1
      %v4173 = vsel %vm4162, %v4170, %v4172
      %v4174 = vrot.slane %v3669, 1
      %v4175 = vsel %vm4162, %v4172, %v4174
      %v4176 = vrot.slane %v3670, 1
      %v4177 = vsel %vm4162, %v4174, %v4176
      %v4178 = vrot.slane %v3671, 1
      %v4179 = vsel %vm4162, %v4176, %v4178
      %v4180 = vrot.slane %v3672, 1
      %v4181 = vsel %vm4162, %v4178, %v4180
      %v4182 = vrot.slane %v3673, 1
      %v4183 = vsel %vm4162, %v4180, %v4182
      %v4184 = vrot.slane %v3674, 1
      %v4185 = vsel %vm4162, %v4182, %v4184
      %v4186 = vrot.slane %v3675, 1
      %v4187 = vsel %vm4162, %v4184, %v4186
      %v4188 = vrot.slane %v3676, 1
      %v4189 = vsel %vm4162, %v4186, %v4188
      %v4190 = vrot.slane %v3677, 1
      %v4191 = vsel %vm4162, %v4188, %v4190
      %v4192 = vrot.slane %v3678, 1
      %v4193 = vsel %vm4162, %v4190, %v4192
      %v4194 = vrot.slane %v3679, 1
      %v4195 = vsel %vm4162, %v4192, %v4194
      %v4196 = vrot.slane %v3680, 1
      %v4197 = vsel %vm4162, %v4194, %v4196
      %v4198 = vrot.slane %v3681, 1
      %v4199 = vsel %vm4162, %v4196, %v4198
      %v4234 = vunpack.c.l.b16 %v4127
      %v4235 = vunpack.c.l.b16 %v4128
      %v4236 = vunpack.c.l.b16 %v4129
      %v4237 = vunpack.c.l.b16 %v4130
      %v4238 = vunpack.c.l.b16 %v4131
      %v4239 = vunpack.c.l.b16 %v4132
      %v4240 = vunpack.c.l.b16 %v4133
      %v4241 = vunpack.c.l.b16 %v4134
      %v4242 = vunpack.c.l.b16 %v4135
      %v4243 = vunpack.c.l.b16 %v4136
      %v4244 = vunpack.c.l.b16 %v4137
      %v4245 = vunpack.c.l.b16 %v4138
      %v4246 = vunpack.c.l.b16 %v4139
      %v4247 = vunpack.c.l.b16 %v4140
      %v4248 = vunpack.c.l.b16 %v4141
      %v4249 = vunpack.c.l.b16 %v4142
      %v4250 = vpack.c.b16 %v4235, %v4234
      %v4251 = vpack.c.b16 %v4237, %v4236
      %v4252 = vpack.c.b16 %v4239, %v4238
      %v4253 = vpack.c.b16 %v4241, %v4240
      %v4254 = vpack.c.b16 %v4243, %v4242
      %v4255 = vpack.c.b16 %v4245, %v4244
      %v4256 = vpack.c.b16 %v4247, %v4246
      %v4257 = vpack.c.b16 %v4249, %v4248
      %4266 = vmatprep.subr.bf16.mxu0 0
      %4267 = vmatpush1.bf16.msra.mxu0 %v4250
      %4268 = vmatprep.subr.bf16.mxu0 0
      %4269 = vmatpush1.bf16.msra.mxu0 %v4251
      %4270 = vmatprep.subr.bf16.mxu0 0
      %4271 = vmatpush1.bf16.msra.mxu0 %v4252
      %4272 = vmatprep.subr.bf16.mxu0 0
      %4273 = vmatpush1.bf16.msra.mxu0 %v4253
      %4274 = vmatprep.subr.bf16.mxu0 0
      %4275 = vmatpush1.bf16.msra.mxu0 %v4254
      %4276 = vmatprep.subr.bf16.mxu0 0
      %4277 = vmatpush1.bf16.msra.mxu0 %v4255
      %4278 = vmatprep.subr.bf16.mxu0 0
      %4279 = vmatpush1.bf16.msra.mxu0 %v4256
      %4280 = vmatprep.subr.bf16.mxu0 0
      %4281 = vmatpush1.bf16.msra.mxu0 %v4257
      %4282 = vmatprep.subr.bf16.mxu0 0
      %4283 = vmatpush1.bf16.msra.mxu0 0
      %4284 = vmatprep.subr.bf16.mxu0 0
      %4285 = vmatpush1.bf16.msra.mxu0 0
      %4286 = vmatprep.subr.bf16.mxu0 0
      %4287 = vmatpush1.bf16.msra.mxu0 0
      %4288 = vmatprep.subr.bf16.mxu0 0
      %4289 = vmatpush1.bf16.msra.mxu0 0
      %4290 = vmatprep.subr.bf16.mxu0 0
      %4291 = vmatpush1.bf16.msra.mxu0 0
      %4292 = vmatprep.subr.bf16.mxu0 0
      %4293 = vmatpush1.bf16.msra.mxu0 0
      %4294 = vmatprep.subr.bf16.mxu0 0
      %4295 = vmatpush1.bf16.msra.mxu0 0
      %4296 = vmatprep.subr.bf16.mxu0 0
      %4297 = vmatpush1.bf16.msra.mxu0 0
      %4298 = vmatprep.mubr.bf16.mxu0 0
      %4299 = vmatmul.mubr.bf16.gmra.mrb[0].mxu0 %v4165
      %v4300 = vpop.f32.mrb[0].mxu0
      %v4301 = vadd.f32 0.0, %v4300
      %v4302 = vpop.f32.mrb[0].mxu0
      %v4303 = vpop.f32.mrb[0].mxu0
      %v4304 = vadd.f32 0.0, %v4303
      %v4305 = vpop.f32.mrb[0].mxu0
      %4306 = vmatprep.mubr.bf16.mxu0 0
      %4307 = vmatmul.mubr.bf16.gmra.mrb[0].mxu0 %v4167
      %v4308 = vpop.f32.mrb[0].mxu0
      %v4309 = vadd.f32 0.0, %v4308
      %v4310 = vpop.f32.mrb[0].mxu0
      %v4311 = vpop.f32.mrb[0].mxu0
      %v4312 = vadd.f32 0.0, %v4311
      %v4313 = vpop.f32.mrb[0].mxu0
      %4314 = vmatprep.mubr.bf16.mxu0 0
      %4315 = vmatmul.mubr.bf16.gmra.mrb[0].mxu0 %v4169
      %v4316 = vpop.f32.mrb[0].mxu0
      %v4317 = vadd.f32 0.0, %v4316
      %v4318 = vpop.f32.mrb[0].mxu0
      %v4319 = vpop.f32.mrb[0].mxu0
      %v4320 = vadd.f32 0.0, %v4319
      %v4321 = vpop.f32.mrb[0].mxu0
      %4322 = vmatprep.mubr.bf16.mxu0 0
      %4323 = vmatmul.mubr.bf16.gmra.mrb[0].mxu0 %v4171
      %v4324 = vpop.f32.mrb[0].mxu0
      %v4325 = vadd.f32 0.0, %v4324
      %v4326 = vpop.f32.mrb[0].mxu0
      %v4327 = vpop.f32.mrb[0].mxu0
      %v4328 = vadd.f32 0.0, %v4327
      %v4329 = vpop.f32.mrb[0].mxu0
      %4330 = vmatprep.mubr.bf16.mxu0 0
      %4331 = vmatmul.mubr.bf16.gmra.mrb[0].mxu0 %v4173
      %v4332 = vpop.f32.mrb[0].mxu0
      %v4333 = vadd.f32 0.0, %v4332
      %v4334 = vpop.f32.mrb[0].mxu0
      %v4335 = vpop.f32.mrb[0].mxu0
      %v4336 = vadd.f32 0.0, %v4335
      %v4337 = vpop.f32.mrb[0].mxu0
      %4338 = vmatprep.mubr.bf16.mxu0 0
      %4339 = vmatmul.mubr.bf16.gmra.mrb[0].mxu0 %v4175
      %v4340 = vpop.f32.mrb[0].mxu0
      %v4341 = vadd.f32 0.0, %v4340
      %v4342 = vpop.f32.mrb[0].mxu0
      %v4343 = vpop.f32.mrb[0].mxu0
      %v4344 = vadd.f32 0.0, %v4343
      %v4345 = vpop.f32.mrb[0].mxu0
      %4346 = vmatprep.mubr.bf16.mxu0 0
      %4347 = vmatmul.mubr.bf16.gmra.mrb[0].mxu0 %v4177
      %v4348 = vpop.f32.mrb[0].mxu0
      %v4349 = vadd.f32 0.0, %v4348
      %v4350 = vpop.f32.mrb[0].mxu0
      %v4351 = vpop.f32.mrb[0].mxu0
      %v4352 = vadd.f32 0.0, %v4351
      %v4353 = vpop.f32.mrb[0].mxu0
      %4354 = vmatprep.mubr.bf16.mxu0 0
      %4355 = vmatmul.mubr.bf16.gmra.mrb[0].mxu0 %v4179
      %v4356 = vpop.f32.mrb[0].mxu0
      %v4357 = vadd.f32 0.0, %v4356
      %v4358 = vpop.f32.mrb[0].mxu0
      %v4359 = vpop.f32.mrb[0].mxu0
      %v4360 = vadd.f32 0.0, %v4359
      %v4361 = vpop.f32.mrb[0].mxu0
      %4362 = vmatprep.mubr.bf16.mxu0 0
      %4363 = vmatmul.mubr.bf16.gmra.mrb[0].mxu0 %v4181
      %v4364 = vpop.f32.mrb[0].mxu0
      %v4365 = vadd.f32 0.0, %v4364
      %v4366 = vpop.f32.mrb[0].mxu0
      %v4367 = vpop.f32.mrb[0].mxu0
      %v4368 = vadd.f32 0.0, %v4367
      %v4369 = vpop.f32.mrb[0].mxu0
      %4370 = vmatprep.mubr.bf16.mxu0 0
      %4371 = vmatmul.mubr.bf16.gmra.mrb[0].mxu0 %v4183
      %v4372 = vpop.f32.mrb[0].mxu0
      %v4373 = vadd.f32 0.0, %v4372
      %v4374 = vpop.f32.mrb[0].mxu0
      %v4375 = vpop.f32.mrb[0].mxu0
      %v4376 = vadd.f32 0.0, %v4375
      %v4377 = vpop.f32.mrb[0].mxu0
      %4378 = vmatprep.mubr.bf16.mxu0 0
      %4379 = vmatmul.mubr.bf16.gmra.mrb[0].mxu0 %v4185
      %v4380 = vpop.f32.mrb[0].mxu0
      %v4381 = vadd.f32 0.0, %v4380
      %v4382 = vpop.f32.mrb[0].mxu0
      %v4383 = vpop.f32.mrb[0].mxu0
      %v4384 = vadd.f32 0.0, %v4383
      %v4385 = vpop.f32.mrb[0].mxu0
      %4386 = vmatprep.mubr.bf16.mxu0 0
      %4387 = vmatmul.mubr.bf16.gmra.mrb[0].mxu0 %v4187
      %v4388 = vpop.f32.mrb[0].mxu0
      %v4389 = vadd.f32 0.0, %v4388
      %v4390 = vpop.f32.mrb[0].mxu0
      %v4391 = vpop.f32.mrb[0].mxu0
      %v4392 = vadd.f32 0.0, %v4391
      %v4393 = vpop.f32.mrb[0].mxu0
      %4394 = vmatprep.mubr.bf16.mxu0 0
      %4395 = vmatmul.mubr.bf16.gmra.mrb[0].mxu0 %v4189
      %v4396 = vpop.f32.mrb[0].mxu0
      %v4397 = vadd.f32 0.0, %v4396
      %v4398 = vpop.f32.mrb[0].mxu0
      %v4399 = vpop.f32.mrb[0].mxu0
      %v4400 = vadd.f32 0.0, %v4399
      %v4401 = vpop.f32.mrb[0].mxu0
      %4402 = vmatprep.mubr.bf16.mxu0 0
      %4403 = vmatmul.mubr.bf16.gmra.mrb[0].mxu0 %v4191
      %v4404 = vpop.f32.mrb[0].mxu0
      %v4405 = vadd.f32 0.0, %v4404
      %v4406 = vpop.f32.mrb[0].mxu0
      %v4407 = vpop.f32.mrb[0].mxu0
      %v4408 = vadd.f32 0.0, %v4407
      %v4409 = vpop.f32.mrb[0].mxu0
      %4410 = vmatprep.mubr.bf16.mxu0 0
      %4411 = vmatmul.mubr.bf16.gmra.mrb[0].mxu0 %v4193
      %v4412 = vpop.f32.mrb[0].mxu0
      %v4413 = vadd.f32 0.0, %v4412
      %v4414 = vpop.f32.mrb[0].mxu0
      %v4415 = vpop.f32.mrb[0].mxu0
      %v4416 = vadd.f32 0.0, %v4415
      %v4417 = vpop.f32.mrb[0].mxu0
      %4418 = vmatprep.mubr.bf16.mxu0 0
      %4419 = vmatmul.mubr.bf16.gmra.mrb[0].mxu0 %v4195
      %v4420 = vpop.f32.mrb[0].mxu0
      %v4421 = vadd.f32 0.0, %v4420
      %v4422 = vpop.f32.mrb[0].mxu0
      %v4423 = vpop.f32.mrb[0].mxu0
      %v4424 = vadd.f32 0.0, %v4423
      %v4425 = vpop.f32.mrb[0].mxu0
      %4426 = vmatprep.mubr.bf16.mxu0 0
      %4427 = vmatmul.mubr.bf16.gmra.mrb[0].mxu0 %v4197
      %v4428 = vpop.f32.mrb[0].mxu0
      %v4429 = vadd.f32 0.0, %v4428
      %v4430 = vpop.f32.mrb[0].mxu0
      %v4431 = vpop.f32.mrb[0].mxu0
      %v4432 = vadd.f32 0.0, %v4431
      %v4433 = vpop.f32.mrb[0].mxu0
      %4434 = vmatprep.mubr.bf16.mxu0 0
      %4435 = vmatmul.mubr.bf16.gmra.mrb[0].mxu0 %v4199
      %v4436 = vpop.f32.mrb[0].mxu0
      %v4437 = vadd.f32 0.0, %v4436
      %v4438 = vpop.f32.mrb[0].mxu0
      %v4439 = vpop.f32.mrb[0].mxu0
      %v4440 = vadd.f32 0.0, %v4439
      %v4441 = vpop.f32.mrb[0].mxu0
      %4442 = vdwg.mxu0
      %v4443 = vadd.f32 %v4090, %v4301
      %v4444 = vadd.f32 %v4091, %v4304
      %v4445 = vadd.f32 %v4092, %v4309
      %v4446 = vadd.f32 %v4093, %v4312
      %v4447 = vadd.f32 %v4094, %v4317
      %v4448 = vadd.f32 %v4095, %v4320
      %v4449 = vadd.f32 %v4096, %v4325
      %v4450 = vadd.f32 %v4097, %v4328
      %v4451 = vadd.f32 %v4098, %v4333
      %v4452 = vadd.f32 %v4099, %v4336
      %v4453 = vadd.f32 %v4100, %v4341
      %v4454 = vadd.f32 %v4101, %v4344
      %v4455 = vadd.f32 %v4102, %v4349
      %v4456 = vadd.f32 %v4103, %v4352
      %v4457 = vadd.f32 %v4104, %v4357
      %v4458 = vadd.f32 %v4105, %v4360
      %v4459 = vadd.f32 %v4106, %v4365
      %v4460 = vadd.f32 %v4107, %v4368
      %v4461 = vadd.f32 %v4108, %v4373
      %v4462 = vadd.f32 %v4109, %v4376
      %v4463 = vadd.f32 %v4110, %v4381
      %v4464 = vadd.f32 %v4111, %v4384
      %v4465 = vadd.f32 %v4112, %v4389
      %v4466 = vadd.f32 %v4113, %v4392
      %v4467 = vadd.f32 %v4114, %v4397
      %v4468 = vadd.f32 %v4115, %v4400
      %v4469 = vadd.f32 %v4116, %v4405
      %v4470 = vadd.f32 %v4117, %v4408
      %v4471 = vadd.f32 %v4118, %v4413
      %v4472 = vadd.f32 %v4119, %v4416
      %v4473 = vadd.f32 %v4120, %v4421
      %v4474 = vadd.f32 %v4121, %v4424
      %v4475 = vadd.f32 %v4122, %v4429
      %v4476 = vadd.f32 %v4123, %v4432
      %v4477 = vadd.f32 %v4124, %v4437
      %v4478 = vadd.f32 %v4125, %v4440
      %s4479 = scalar_lea.vmem %s3, 512
      %v4480 = vld [vmem:[%s4479] sm:$0xf]
      %v4481 = vld [vmem:[%s4479 + $0x4] sm:$0xf]
      %v4482 = vld [vmem:[%s4479 + $0x8] sm:$0xf]
      %v4483 = vld [vmem:[%s4479 + $0xc] sm:$0xf]
      %v4484 = vld [vmem:[%s4479 + $0x10] sm:$0xf]
      %v4485 = vld [vmem:[%s4479 + $0x14] sm:$0xf]
      %v4486 = vld [vmem:[%s4479 + $0x18] sm:$0xf]
      %v4487 = vld [vmem:[%s4479 + $0x1c] sm:$0xf]
      %v4488 = vld [vmem:[%s4479 + $0x20] sm:$0xf]
      %v4489 = vld [vmem:[%s4479 + $0x24] sm:$0xf]
      %v4490 = vld [vmem:[%s4479 + $0x28] sm:$0xf]
      %v4491 = vld [vmem:[%s4479 + $0x2c] sm:$0xf]
      %v4492 = vld [vmem:[%s4479 + $0x30] sm:$0xf]
      %v4493 = vld [vmem:[%s4479 + $0x34] sm:$0xf]
      %v4494 = vld [vmem:[%s4479 + $0x38] sm:$0xf]
      %v4495 = vld [vmem:[%s4479 + $0x3c] sm:$0xf]
      %vm4496 = vsmask.f32 6400
      %v4497 = vrot.slane %v3700, 1
      %v4498 = vrot.slane %v3702, 2
      %v4499 = vor.u32 %v4497, %v4498
      %v4500 = vrot.slane %v3711, 1
      %v4501 = vrot.slane %v3707, 2
      %v4502 = vor.u32 %v4500, %v4501
      %v4503 = vsel %vm4496, %v4499, %v4502
      %v4504 = vrot.slane %v3719, 1
      %v4505 = vrot.slane %v3715, 2
      %v4506 = vor.u32 %v4504, %v4505
      %v4507 = vsel %vm4496, %v4502, %v4506
      %v4508 = vrot.slane %v3727, 1
      %v4509 = vrot.slane %v3723, 2
      %v4510 = vor.u32 %v4508, %v4509
      %v4511 = vsel %vm4496, %v4506, %v4510
      %v4512 = vrot.slane %v3735, 1
      %v4513 = vrot.slane %v3731, 2
      %v4514 = vor.u32 %v4512, %v4513
      %v4515 = vsel %vm4496, %v4510, %v4514
      %v4516 = vrot.slane %v3743, 1
      %v4517 = vrot.slane %v3739, 2
      %v4518 = vor.u32 %v4516, %v4517
      %v4519 = vsel %vm4496, %v4514, %v4518
      %v4520 = vrot.slane %v3751, 1
      %v4521 = vrot.slane %v3747, 2
      %v4522 = vor.u32 %v4520, %v4521
      %v4523 = vsel %vm4496, %v4518, %v4522
      %v4524 = vrot.slane %v3759, 1
      %v4525 = vrot.slane %v3755, 2
      %v4526 = vor.u32 %v4524, %v4525
      %v4527 = vsel %vm4496, %v4522, %v4526
      %v4528 = vrot.slane %v3767, 1
      %v4529 = vrot.slane %v3763, 2
      %v4530 = vor.u32 %v4528, %v4529
      %v4531 = vsel %vm4496, %v4526, %v4530
      %v4532 = vrot.slane %v3775, 1
      %v4533 = vrot.slane %v3771, 2
      %v4534 = vor.u32 %v4532, %v4533
      %v4535 = vsel %vm4496, %v4530, %v4534
      %v4536 = vrot.slane %v3783, 1
      %v4537 = vrot.slane %v3779, 2
      %v4538 = vor.u32 %v4536, %v4537
      %v4539 = vsel %vm4496, %v4534, %v4538
      %v4540 = vrot.slane %v3791, 1
      %v4541 = vrot.slane %v3787, 2
      %v4542 = vor.u32 %v4540, %v4541
      %v4543 = vsel %vm4496, %v4538, %v4542
      %v4544 = vrot.slane %v3799, 1
      %v4545 = vrot.slane %v3795, 2
      %v4546 = vor.u32 %v4544, %v4545
      %v4547 = vsel %vm4496, %v4542, %v4546
      %v4548 = vrot.slane %v3807, 1
      %v4549 = vrot.slane %v3803, 2
      %v4550 = vor.u32 %v4548, %v4549
      %v4551 = vsel %vm4496, %v4546, %v4550
      %v4552 = vrot.slane %v3815, 1
      %v4553 = vrot.slane %v3811, 2
      %v4554 = vor.u32 %v4552, %v4553
      %v4555 = vsel %vm4496, %v4550, %v4554
      %v4556 = vrot.slane %v3823, 1
      %v4557 = vrot.slane %v3819, 2
      %v4558 = vor.u32 %v4556, %v4557
      %v4559 = vsel %vm4496, %v4554, %v4558
      %v4560 = vrot.slane %v3831, 1
      %v4561 = vrot.slane %v3827, 2
      %v4562 = vor.u32 %v4560, %v4561
      %v4563 = vsel %vm4496, %v4558, %v4562
      %v4564 = vrot.slane %v3839, 1
      %v4565 = vrot.slane %v3835, 2
      %v4566 = vor.u32 %v4564, %v4565
      %v4567 = vsel %vm4496, %v4562, %v4566
      %v4568 = vshrl.u32 %v3681, 16
      %v4570 = vrot.slane %v4568, 1
      %v4571 = vrot.slane %v3843, 2
      %v4572 = vor.u32 %v4570, %v4571
      %v4573 = vsel %vm4496, %v4566, %v4572
      %v4608 = vunpack.c.l.b16 %v4480
      %v4609 = vunpack.c.l.b16 %v4481
      %v4610 = vunpack.c.l.b16 %v4482
      %v4611 = vunpack.c.l.b16 %v4483
      %v4612 = vunpack.c.l.b16 %v4484
      %v4613 = vunpack.c.l.b16 %v4485
      %v4614 = vunpack.c.l.b16 %v4486
      %v4615 = vunpack.c.l.b16 %v4487
      %v4616 = vunpack.c.l.b16 %v4488
      %v4617 = vunpack.c.l.b16 %v4489
      %v4618 = vunpack.c.l.b16 %v4490
      %v4619 = vunpack.c.l.b16 %v4491
      %v4620 = vunpack.c.l.b16 %v4492
      %v4621 = vunpack.c.l.b16 %v4493
      %v4622 = vunpack.c.l.b16 %v4494
      %v4623 = vunpack.c.l.b16 %v4495
      %v4624 = vpack.c.b16 %v4609, %v4608
      %v4625 = vpack.c.b16 %v4611, %v4610
      %v4626 = vpack.c.b16 %v4613, %v4612
      %v4627 = vpack.c.b16 %v4615, %v4614
      %v4628 = vpack.c.b16 %v4617, %v4616
      %v4629 = vpack.c.b16 %v4619, %v4618
      %v4630 = vpack.c.b16 %v4621, %v4620
      %v4631 = vpack.c.b16 %v4623, %v4622
      %4640 = vmatprep.subr.bf16.mxu0 0
      %4641 = vmatpush1.bf16.msra.mxu0 %v4624
      %4642 = vmatprep.subr.bf16.mxu0 0
      %4643 = vmatpush1.bf16.msra.mxu0 %v4625
      %4644 = vmatprep.subr.bf16.mxu0 0
      %4645 = vmatpush1.bf16.msra.mxu0 %v4626
      %4646 = vmatprep.subr.bf16.mxu0 0
      %4647 = vmatpush1.bf16.msra.mxu0 %v4627
      %4648 = vmatprep.subr.bf16.mxu0 0
      %4649 = vmatpush1.bf16.msra.mxu0 %v4628
      %4650 = vmatprep.subr.bf16.mxu0 0
      %4651 = vmatpush1.bf16.msra.mxu0 %v4629
      %4652 = vmatprep.subr.bf16.mxu0 0
      %4653 = vmatpush1.bf16.msra.mxu0 %v4630
      %4654 = vmatprep.subr.bf16.mxu0 0
      %4655 = vmatpush1.bf16.msra.mxu0 %v4631
      %4656 = vmatprep.subr.bf16.mxu0 0
      %4657 = vmatpush1.bf16.msra.mxu0 0
      %4658 = vmatprep.subr.bf16.mxu0 0
      %4659 = vmatpush1.bf16.msra.mxu0 0
      %4660 = vmatprep.subr.bf16.mxu0 0
      %4661 = vmatpush1.bf16.msra.mxu0 0
      %4662 = vmatprep.subr.bf16.mxu0 0
      %4663 = vmatpush1.bf16.msra.mxu0 0
      %4664 = vmatprep.subr.bf16.mxu0 0
      %4665 = vmatpush1.bf16.msra.mxu0 0
      %4666 = vmatprep.subr.bf16.mxu0 0
      %4667 = vmatpush1.bf16.msra.mxu0 0
      %4668 = vmatprep.subr.bf16.mxu0 0
      %4669 = vmatpush1.bf16.msra.mxu0 0
      %4670 = vmatprep.subr.bf16.mxu0 0
      %4671 = vmatpush1.bf16.msra.mxu0 0
      %4672 = vmatprep.mubr.bf16.mxu0 0
      %4673 = vmatmul.mubr.bf16.gmra.mrb[0].mxu0 %v4503
      %v4674 = vpop.f32.mrb[0].mxu0
      %v4675 = vadd.f32 0.0, %v4674
      %v4676 = vpop.f32.mrb[0].mxu0
      %v4677 = vpop.f32.mrb[0].mxu0
      %v4678 = vadd.f32 0.0, %v4677
      %v4679 = vpop.f32.mrb[0].mxu0
      %4680 = vmatprep.mubr.bf16.mxu0 0
      %4681 = vmatmul.mubr.bf16.gmra.mrb[0].mxu0 %v4507
      %v4682 = vpop.f32.mrb[0].mxu0
      %v4683 = vadd.f32 0.0, %v4682
      %v4684 = vpop.f32.mrb[0].mxu0
      %v4685 = vpop.f32.mrb[0].mxu0
      %v4686 = vadd.f32 0.0, %v4685
      %v4687 = vpop.f32.mrb[0].mxu0
      %4688 = vmatprep.mubr.bf16.mxu0 0
      %4689 = vmatmul.mubr.bf16.gmra.mrb[0].mxu0 %v4511
      %v4690 = vpop.f32.mrb[0].mxu0
      %v4691 = vadd.f32 0.0, %v4690
      %v4692 = vpop.f32.mrb[0].mxu0
      %v4693 = vpop.f32.mrb[0].mxu0
      %v4694 = vadd.f32 0.0, %v4693
      %v4695 = vpop.f32.mrb[0].mxu0
      %4696 = vmatprep.mubr.bf16.mxu0 0
      %4697 = vmatmul.mubr.bf16.gmra.mrb[0].mxu0 %v4515
      %v4698 = vpop.f32.mrb[0].mxu0
      %v4699 = vadd.f32 0.0, %v4698
      %v4700 = vpop.f32.mrb[0].mxu0
      %v4701 = vpop.f32.mrb[0].mxu0
      %v4702 = vadd.f32 0.0, %v4701
      %v4703 = vpop.f32.mrb[0].mxu0
      %4704 = vmatprep.mubr.bf16.mxu0 0
      %4705 = vmatmul.mubr.bf16.gmra.mrb[0].mxu0 %v4519
      %v4706 = vpop.f32.mrb[0].mxu0
      %v4707 = vadd.f32 0.0, %v4706
      %v4708 = vpop.f32.mrb[0].mxu0
      %v4709 = vpop.f32.mrb[0].mxu0
      %v4710 = vadd.f32 0.0, %v4709
      %v4711 = vpop.f32.mrb[0].mxu0
      %4712 = vmatprep.mubr.bf16.mxu0 0
      %4713 = vmatmul.mubr.bf16.gmra.mrb[0].mxu0 %v4523
      %v4714 = vpop.f32.mrb[0].mxu0
      %v4715 = vadd.f32 0.0, %v4714
      %v4716 = vpop.f32.mrb[0].mxu0
      %v4717 = vpop.f32.mrb[0].mxu0
      %v4718 = vadd.f32 0.0, %v4717
      %v4719 = vpop.f32.mrb[0].mxu0
      %4720 = vmatprep.mubr.bf16.mxu0 0
      %4721 = vmatmul.mubr.bf16.gmra.mrb[0].mxu0 %v4527
      %v4722 = vpop.f32.mrb[0].mxu0
      %v4723 = vadd.f32 0.0, %v4722
      %v4724 = vpop.f32.mrb[0].mxu0
      %v4725 = vpop.f32.mrb[0].mxu0
      %v4726 = vadd.f32 0.0, %v4725
      %v4727 = vpop.f32.mrb[0].mxu0
      %4728 = vmatprep.mubr.bf16.mxu0 0
      %4729 = vmatmul.mubr.bf16.gmra.mrb[0].mxu0 %v4531
      %v4730 = vpop.f32.mrb[0].mxu0
      %v4731 = vadd.f32 0.0, %v4730
      %v4732 = vpop.f32.mrb[0].mxu0
      %v4733 = vpop.f32.mrb[0].mxu0
      %v4734 = vadd.f32 0.0, %v4733
      %v4735 = vpop.f32.mrb[0].mxu0
      %4736 = vmatprep.mubr.bf16.mxu0 0
      %4737 = vmatmul.mubr.bf16.gmra.mrb[0].mxu0 %v4535
      %v4738 = vpop.f32.mrb[0].mxu0
      %v4739 = vadd.f32 0.0, %v4738
      %v4740 = vpop.f32.mrb[0].mxu0
      %v4741 = vpop.f32.mrb[0].mxu0
      %v4742 = vadd.f32 0.0, %v4741
      %v4743 = vpop.f32.mrb[0].mxu0
      %4744 = vmatprep.mubr.bf16.mxu0 0
      %4745 = vmatmul.mubr.bf16.gmra.mrb[0].mxu0 %v4539
      %v4746 = vpop.f32.mrb[0].mxu0
      %v4747 = vadd.f32 0.0, %v4746
      %v4748 = vpop.f32.mrb[0].mxu0
      %v4749 = vpop.f32.mrb[0].mxu0
      %v4750 = vadd.f32 0.0, %v4749
      %v4751 = vpop.f32.mrb[0].mxu0
      %4752 = vmatprep.mubr.bf16.mxu0 0
      %4753 = vmatmul.mubr.bf16.gmra.mrb[0].mxu0 %v4543
      %v4754 = vpop.f32.mrb[0].mxu0
      %v4755 = vadd.f32 0.0, %v4754
      %v4756 = vpop.f32.mrb[0].mxu0
      %v4757 = vpop.f32.mrb[0].mxu0
      %v4758 = vadd.f32 0.0, %v4757
      %v4759 = vpop.f32.mrb[0].mxu0
      %4760 = vmatprep.mubr.bf16.mxu0 0
      %4761 = vmatmul.mubr.bf16.gmra.mrb[0].mxu0 %v4547
      %v4762 = vpop.f32.mrb[0].mxu0
      %v4763 = vadd.f32 0.0, %v4762
      %v4764 = vpop.f32.mrb[0].mxu0
      %v4765 = vpop.f32.mrb[0].mxu0
      %v4766 = vadd.f32 0.0, %v4765
      %v4767 = vpop.f32.mrb[0].mxu0
      %4768 = vmatprep.mubr.bf16.mxu0 0
      %4769 = vmatmul.mubr.bf16.gmra.mrb[0].mxu0 %v4551
      %v4770 = vpop.f32.mrb[0].mxu0
      %v4771 = vadd.f32 0.0, %v4770
      %v4772 = vpop.f32.mrb[0].mxu0
      %v4773 = vpop.f32.mrb[0].mxu0
      %v4774 = vadd.f32 0.0, %v4773
      %v4775 = vpop.f32.mrb[0].mxu0
      %4776 = vmatprep.mubr.bf16.mxu0 0
      %4777 = vmatmul.mubr.bf16.gmra.mrb[0].mxu0 %v4555
      %v4778 = vpop.f32.mrb[0].mxu0
      %v4779 = vadd.f32 0.0, %v4778
      %v4780 = vpop.f32.mrb[0].mxu0
      %v4781 = vpop.f32.mrb[0].mxu0
      %v4782 = vadd.f32 0.0, %v4781
      %v4783 = vpop.f32.mrb[0].mxu0
      %4784 = vmatprep.mubr.bf16.mxu0 0
      %4785 = vmatmul.mubr.bf16.gmra.mrb[0].mxu0 %v4559
      %v4786 = vpop.f32.mrb[0].mxu0
      %v4787 = vadd.f32 0.0, %v4786
      %v4788 = vpop.f32.mrb[0].mxu0
      %v4789 = vpop.f32.mrb[0].mxu0
      %v4790 = vadd.f32 0.0, %v4789
      %v4791 = vpop.f32.mrb[0].mxu0
      %4792 = vmatprep.mubr.bf16.mxu0 0
      %4793 = vmatmul.mubr.bf16.gmra.mrb[0].mxu0 %v4563
      %v4794 = vpop.f32.mrb[0].mxu0
      %v4795 = vadd.f32 0.0, %v4794
      %v4796 = vpop.f32.mrb[0].mxu0
      %v4797 = vpop.f32.mrb[0].mxu0
      %v4798 = vadd.f32 0.0, %v4797
      %v4799 = vpop.f32.mrb[0].mxu0
      %4800 = vmatprep.mubr.bf16.mxu0 0
      %4801 = vmatmul.mubr.bf16.gmra.mrb[0].mxu0 %v4567
      %v4802 = vpop.f32.mrb[0].mxu0
      %v4803 = vadd.f32 0.0, %v4802
      %v4804 = vpop.f32.mrb[0].mxu0
      %v4805 = vpop.f32.mrb[0].mxu0
      %v4806 = vadd.f32 0.0, %v4805
      %v4807 = vpop.f32.mrb[0].mxu0
      %4808 = vmatprep.mubr.bf16.mxu0 0
      %4809 = vmatmul.mubr.bf16.gmra.mrb[0].mxu0 %v4573
      %v4810 = vpop.f32.mrb[0].mxu0
      %v4811 = vadd.f32 0.0, %v4810
      %v4812 = vpop.f32.mrb[0].mxu0
      %v4813 = vpop.f32.mrb[0].mxu0
      %v4814 = vadd.f32 0.0, %v4813
      %v4815 = vpop.f32.mrb[0].mxu0
      %4816 = vdwg.mxu0
      %v4817 = vadd.f32 %v4443, %v4675
      %v4818 = vadd.f32 %v4444, %v4678
      %v4819 = vadd.f32 %v4445, %v4683
      %v4820 = vadd.f32 %v4446, %v4686
      %v4821 = vadd.f32 %v4447, %v4691
      %v4822 = vadd.f32 %v4448, %v4694
      %v4823 = vadd.f32 %v4449, %v4699
      %v4824 = vadd.f32 %v4450, %v4702
      %v4825 = vadd.f32 %v4451, %v4707
      %v4826 = vadd.f32 %v4452, %v4710
      %v4827 = vadd.f32 %v4453, %v4715
      %v4828 = vadd.f32 %v4454, %v4718
      %v4829 = vadd.f32 %v4455, %v4723
      %v4830 = vadd.f32 %v4456, %v4726
      %v4831 = vadd.f32 %v4457, %v4731
      %v4832 = vadd.f32 %v4458, %v4734
      %v4833 = vadd.f32 %v4459, %v4739
      %v4834 = vadd.f32 %v4460, %v4742
      %v4835 = vadd.f32 %v4461, %v4747
      %v4836 = vadd.f32 %v4462, %v4750
      %v4837 = vadd.f32 %v4463, %v4755
      %v4838 = vadd.f32 %v4464, %v4758
      %v4839 = vadd.f32 %v4465, %v4763
      %v4840 = vadd.f32 %v4466, %v4766
      %v4841 = vadd.f32 %v4467, %v4771
      %v4842 = vadd.f32 %v4468, %v4774
      %v4843 = vadd.f32 %v4469, %v4779
      %v4844 = vadd.f32 %v4470, %v4782
      %v4845 = vadd.f32 %v4471, %v4787
      %v4846 = vadd.f32 %v4472, %v4790
      %v4847 = vadd.f32 %v4473, %v4795
      %v4848 = vadd.f32 %v4474, %v4798
      %v4849 = vadd.f32 %v4475, %v4803
      %v4850 = vadd.f32 %v4476, %v4806
      %v4851 = vadd.f32 %v4477, %v4811
      %v4852 = vadd.f32 %v4478, %v4814
      %v4853 = vld [vmem:[%s4] sm:$0x1]
      %v4855 = vlaneseq
      %v4856 = vshrl.u32 %v4855, 7
      %v4857 = vsub.s32 0, %v4856
      %v4858 = vrot.slane %v4853, %v4857
      %v4860 = vadd.f32 %v4817, %v4858
      %v4861 = vadd.f32 %v4818, %v4858
      %v4862 = vadd.f32 %v4819, %v4858
      %v4863 = vadd.f32 %v4820, %v4858
      %v4864 = vadd.f32 %v4821, %v4858
      %v4865 = vadd.f32 %v4822, %v4858
      %v4866 = vadd.f32 %v4823, %v4858
      %v4867 = vadd.f32 %v4824, %v4858
      %v4868 = vadd.f32 %v4825, %v4858
      %v4869 = vadd.f32 %v4826, %v4858
      %v4870 = vadd.f32 %v4827, %v4858
      %v4871 = vadd.f32 %v4828, %v4858
      %v4872 = vadd.f32 %v4829, %v4858
      %v4873 = vadd.f32 %v4830, %v4858
      %v4874 = vadd.f32 %v4831, %v4858
      %v4875 = vadd.f32 %v4832, %v4858
      %v4876 = vadd.f32 %v4833, %v4858
      %v4877 = vadd.f32 %v4834, %v4858
      %v4878 = vadd.f32 %v4835, %v4858
      %v4879 = vadd.f32 %v4836, %v4858
      %v4880 = vadd.f32 %v4837, %v4858
      %v4881 = vadd.f32 %v4838, %v4858
      %v4882 = vadd.f32 %v4839, %v4858
      %v4883 = vadd.f32 %v4840, %v4858
      %v4884 = vadd.f32 %v4841, %v4858
      %v4885 = vadd.f32 %v4842, %v4858
      %v4886 = vadd.f32 %v4843, %v4858
      %v4887 = vadd.f32 %v4844, %v4858
      %v4888 = vadd.f32 %v4845, %v4858
      %v4889 = vadd.f32 %v4846, %v4858
      %v4890 = vadd.f32 %v4847, %v4858
      %v4891 = vadd.f32 %v4848, %v4858
      %v4892 = vadd.f32 %v4849, %v4858
      %v4893 = vadd.f32 %v4850, %v4858
      %v4894 = vadd.f32 %v4851, %v4858
      %v4895 = vadd.f32 %v4852, %v4858
      %v4896 = vmax.f32 %v4860, 0.0
      %v4897 = vmax.f32 %v4861, 0.0
      %v4898 = vmax.f32 %v4862, 0.0
      %v4899 = vmax.f32 %v4863, 0.0
      %v4900 = vmax.f32 %v4864, 0.0
      %v4901 = vmax.f32 %v4865, 0.0
      %v4902 = vmax.f32 %v4866, 0.0
      %v4903 = vmax.f32 %v4867, 0.0
      %v4904 = vmax.f32 %v4868, 0.0
      %v4905 = vmax.f32 %v4869, 0.0
      %v4906 = vmax.f32 %v4870, 0.0
      %v4907 = vmax.f32 %v4871, 0.0
      %v4908 = vmax.f32 %v4872, 0.0
      %v4909 = vmax.f32 %v4873, 0.0
      %v4910 = vmax.f32 %v4874, 0.0
      %v4911 = vmax.f32 %v4875, 0.0
      %v4912 = vmax.f32 %v4876, 0.0
      %v4913 = vmax.f32 %v4877, 0.0
      %v4914 = vmax.f32 %v4878, 0.0
      %v4915 = vmax.f32 %v4879, 0.0
      %v4916 = vmax.f32 %v4880, 0.0
      %v4917 = vmax.f32 %v4881, 0.0
      %v4918 = vmax.f32 %v4882, 0.0
      %v4919 = vmax.f32 %v4883, 0.0
      %v4920 = vmax.f32 %v4884, 0.0
      %v4921 = vmax.f32 %v4885, 0.0
      %v4922 = vmax.f32 %v4886, 0.0
      %v4923 = vmax.f32 %v4887, 0.0
      %v4924 = vmax.f32 %v4888, 0.0
      %v4925 = vmax.f32 %v4889, 0.0
      %v4926 = vmax.f32 %v4890, 0.0
      %v4927 = vmax.f32 %v4891, 0.0
      %v4928 = vmax.f32 %v4892, 0.0
      %v4929 = vmax.f32 %v4893, 0.0
      %v4930 = vmax.f32 %v4894, 0.0
      %v4931 = vmax.f32 %v4895, 0.0
      %v4932 = vpack.c.bf16 %v4897, %v4896
      %v4933 = vpack.c.bf16 %v4899, %v4898
      %v4934 = vpack.c.bf16 %v4901, %v4900
      %v4935 = vpack.c.bf16 %v4903, %v4902
      %v4936 = vpack.c.bf16 %v4905, %v4904
      %v4937 = vpack.c.bf16 %v4907, %v4906
      %v4938 = vpack.c.bf16 %v4909, %v4908
      %v4939 = vpack.c.bf16 %v4911, %v4910
      %v4940 = vpack.c.bf16 %v4913, %v4912
      %v4941 = vpack.c.bf16 %v4915, %v4914
      %v4942 = vpack.c.bf16 %v4917, %v4916
      %v4943 = vpack.c.bf16 %v4919, %v4918
      %v4944 = vpack.c.bf16 %v4921, %v4920
      %v4945 = vpack.c.bf16 %v4923, %v4922
      %v4946 = vpack.c.bf16 %v4925, %v4924
      %v4947 = vpack.c.bf16 %v4927, %v4926
      %v4948 = vpack.c.bf16 %v4929, %v4928
      %v4949 = vpack.c.bf16 %v4931, %v4930
      %v4968 = vunpack.c.l.b16 %v4932
      %v4969 = vunpack.c.h.b16 %v4932
      %v4970 = vunpack.c.l.b16 %v4933
      %v4971 = vunpack.c.h.b16 %v4933
      %v4972 = vunpack.c.l.b16 %v4934
      %v4973 = vunpack.c.h.b16 %v4934
      %v4974 = vunpack.c.l.b16 %v4935
      %v4975 = vunpack.c.h.b16 %v4935
      %v4976 = vunpack.c.l.b16 %v4936
      %v4977 = vunpack.c.h.b16 %v4936
      %v4978 = vunpack.c.l.b16 %v4937
      %v4979 = vunpack.c.h.b16 %v4937
      %v4980 = vunpack.c.l.b16 %v4938
      %v4981 = vunpack.c.h.b16 %v4938
      %v4982 = vunpack.c.l.b16 %v4939
      %v4983 = vunpack.c.h.b16 %v4939
      %v4984 = vunpack.c.l.b16 %v4940
      %v4985 = vunpack.c.h.b16 %v4940
      %v4986 = vunpack.c.l.b16 %v4941
      %v4987 = vunpack.c.h.b16 %v4941
      %v4988 = vunpack.c.l.b16 %v4942
      %v4989 = vunpack.c.h.b16 %v4942
      %v4990 = vunpack.c.l.b16 %v4943
      %v4991 = vunpack.c.h.b16 %v4943
      %v4992 = vunpack.c.l.b16 %v4944
      %v4993 = vunpack.c.h.b16 %v4944
      %v4994 = vunpack.c.l.b16 %v4945
      %v4995 = vunpack.c.h.b16 %v4945
      %v4996 = vunpack.c.l.b16 %v4946
      %v4997 = vunpack.c.h.b16 %v4946
      %v4998 = vunpack.c.l.b16 %v4947
      %v4999 = vunpack.c.h.b16 %v4947
      %v5000 = vunpack.c.l.b16 %v4948
      %v5001 = vunpack.c.h.b16 %v4948
      %v5002 = vunpack.c.l.b16 %v4949
      %v5003 = vunpack.c.h.b16 %v4949
      %v5004 = vpack.c.b16 %v4968, %v4968
      %v5005 = vpack.c.b16 %v4969, %v4969
      %v5006 = vpack.c.b16 %v4970, %v4970
      %v5007 = vpack.c.b16 %v4971, %v4971
      %v5008 = vpack.c.b16 %v4972, %v4972
      %v5009 = vpack.c.b16 %v4973, %v4973
      %v5010 = vpack.c.b16 %v4974, %v4974
      %v5011 = vpack.c.b16 %v4975, %v4975
      %v5012 = vpack.c.b16 %v4976, %v4976
      %v5013 = vpack.c.b16 %v4977, %v4977
      %v5014 = vpack.c.b16 %v4978, %v4978
      %v5015 = vpack.c.b16 %v4979, %v4979
      %v5016 = vpack.c.b16 %v4980, %v4980
      %v5017 = vpack.c.b16 %v4981, %v4981
      %v5018 = vpack.c.b16 %v4982, %v4982
      %v5019 = vpack.c.b16 %v4983, %v4983
      %v5020 = vpack.c.b16 %v4984, %v4984
      %v5021 = vpack.c.b16 %v4985, %v4985
      %v5022 = vpack.c.b16 %v4986, %v4986
      %v5023 = vpack.c.b16 %v4987, %v4987
      %v5024 = vpack.c.b16 %v4988, %v4988
      %v5025 = vpack.c.b16 %v4989, %v4989
      %v5026 = vpack.c.b16 %v4990, %v4990
      %v5027 = vpack.c.b16 %v4991, %v4991
      %v5028 = vpack.c.b16 %v4992, %v4992
      %v5029 = vpack.c.b16 %v4993, %v4993
      %v5030 = vpack.c.b16 %v4994, %v4994
      %v5031 = vpack.c.b16 %v4995, %v4995
      %v5032 = vpack.c.b16 %v4996, %v4996
      %v5033 = vpack.c.b16 %v4997, %v4997
      %v5034 = vpack.c.b16 %v4998, %v4998
      %v5035 = vpack.c.b16 %v4999, %v4999
      %v5036 = vpack.c.b16 %v5000, %v5000
      %v5037 = vpack.c.b16 %v5001, %v5001
      %v5038 = vpack.c.b16 %v5002, %v5002
      %v5039 = vpack.c.b16 %v5003, %v5003
      %5076 = vst [vmem:[%s224] sm:$0xf] %v5004
      %5077 = vst [vmem:[%s224 + $0x4] sm:$0xf] %v5005
      %5078 = vst [vmem:[%s224 + $0x8] sm:$0xf] %v5006
      %5079 = vst [vmem:[%s224 + $0xc] sm:$0xf] %v5007
      %5080 = vst [vmem:[%s224 + $0x10] sm:$0xf] %v5008
      %5081 = vst [vmem:[%s224 + $0x14] sm:$0xf] %v5009
      %5082 = vst [vmem:[%s224 + $0x18] sm:$0xf] %v5010
      %5083 = vst [vmem:[%s224 + $0x1c] sm:$0xf] %v5011
      %5084 = vst [vmem:[%s224 + $0x20] sm:$0xf] %v5012
      %5085 = vst [vmem:[%s224 + $0x24] sm:$0xf] %v5013
      %5086 = vst [vmem:[%s224 + $0x28] sm:$0xf] %v5014
      %5087 = vst [vmem:[%s224 + $0x2c] sm:$0xf] %v5015
      %5088 = vst [vmem:[%s224 + $0x30] sm:$0xf] %v5016
      %5089 = vst [vmem:[%s224 + $0x34] sm:$0xf] %v5017
      %5090 = vst [vmem:[%s224 + $0x38] sm:$0xf] %v5018
      %5091 = vst [vmem:[%s224 + $0x3c] sm:$0xf] %v5019
      %5092 = vst [vmem:[%s224 + $0x40] sm:$0xf] %v5020
      %5093 = vst [vmem:[%s224 + $0x44] sm:$0xf] %v5021
      %5094 = vst [vmem:[%s224 + $0x48] sm:$0xf] %v5022
      %5095 = vst [vmem:[%s224 + $0x4c] sm:$0xf] %v5023
      %5096 = vst [vmem:[%s224 + $0x50] sm:$0xf] %v5024
      %5097 = vst [vmem:[%s224 + $0x54] sm:$0xf] %v5025
      %5098 = vst [vmem:[%s224 + $0x58] sm:$0xf] %v5026
      %5099 = vst [vmem:[%s224 + $0x5c] sm:$0xf] %v5027
      %5100 = vst [vmem:[%s224 + $0x60] sm:$0xf] %v5028
      %5101 = vst [vmem:[%s224 + $0x64] sm:$0xf] %v5029
      %5102 = vst [vmem:[%s224 + $0x68] sm:$0xf] %v5030
      %5103 = vst [vmem:[%s224 + $0x6c] sm:$0xf] %v5031
      %5104 = vst [vmem:[%s224 + $0x70] sm:$0xf] %v5032
      %5105 = vst [vmem:[%s224 + $0x74] sm:$0xf] %v5033
      %5106 = vst [vmem:[%s224 + $0x78] sm:$0xf] %v5034
      %5107 = vst [vmem:[%s224 + $0x7c] sm:$0xf] %v5035
      %5108 = vst [vmem:[%s224 + $0x80] sm:$0xf] %v5036
      %5109 = vst [vmem:[%s224 + $0x84] sm:$0xf] %v5037
      %5110 = vst [vmem:[%s224 + $0x88] sm:$0xf] %v5038
      %5111 = vst [vmem:[%s224 + $0x8c] sm:$0xf] %v5039
      %p5112 = scmp.lt.s32.totalorder %s16, 1
      %s5113 = scalar_select %p5112, %s16, 1
      %s5114 = smul.addr %s5113, 36
      %s5115 = smul.addr %s5114, 4
      %s5116 = scalar_lea.vmem %s5, %s5115
      // Predicated region
      $region41: #{conv_module_forward.1} parent=39 // pred_check
        %p5117 = pneg %p144
      $region42: #{conv_module_forward.1} parent=39 // pred_check_branch
        %5119 = sbr.rel (%p5117) target = $region44
      $region43: #{conv_module_forward.1} parent=39 // pred_region
        _
      $region44: #{conv_module_forward.1} parent=39 // pred_fallthru
        _
    $region40: #{conv_module_forward.1} parent=5 // pred_fallthru
      _
    %p5120 = scmp.le.s32.totalorder 2, %s11
    // Predicated region
    $region45: #{conv_module_forward.1} parent=5 // pred_check
      %p5121 = pneg %p5120
    $region46: #{conv_module_forward.1} parent=5 // pred_check_branch
      %5123 = sbr.rel (%p5121) target = $region48
    $region47: #{conv_module_forward.1} parent=5 // pred_region
      %s5124 = ssub.s32 %s11, 2
      // Predicated region
      $region49: #{conv_module_forward.1} parent=47 // pred_check
        %p5125 = pneg %p150
      $region50: #{conv_module_forward.1} parent=47 // pred_check_branch
        %5127 = sbr.rel (%p5125) target = $region52
      $region51: #{conv_module_forward.1} parent=47 // pred_region
        %p5128 = scmp.lt.s32.totalorder %s17, 1
        %s5129 = scalar_select %p5128, %s17, 1
        %s5130 = smul.addr %s5129, 36
        %s5131 = smul.addr %s5130, 4
        %s5132 = scalar_lea.vmem %s5, %s5131
      $region52: #{conv_module_forward.1} parent=47 // pred_fallthru
        _
    $region48: #{conv_module_forward.1} parent=5 // pred_fallthru
      _
  $region6: #{conv_module_forward.1} parent=0 // loop_footer
    %s15 = sadd.s32 1, %s11
  $region7: #{conv_module_forward.1} parent=0 // loop_footer_branch
    %10 = sbr.rel target = $region3
  $region8: #{conv_module_forward.1} parent=0 // loop_exit
    _

</llo_original>
